<compile_context>
chip_gen: v7x
topology: tpu7x:2x2x1
jax: 0.10.0
libtpu: 0.0.40
codegen_flags: <defaults>
</compile_context>

<pallas_src>
import math

import jax
import jax.numpy as jnp
from jax import lax
from jax.experimental import pallas as pl
from jax.experimental.pallas import tpu as pltpu

# ----------------------------- model sizes (small) ---------------------------
S = 8            # sequence length
D = 32           # model dim (reference default 512, scaled down)
H = 4            # heads (reference default 8)
DH = D // H      # per-head dim
FF_HIDDEN = 64   # feed-forward hidden dim
N_LAYERS = 2     # number of encoder / decoder layers (reference default 6)
EPS = 1e-5       # nn.LayerNorm default eps

# ------------------------ packed parameter layout ----------------------------
# P1: (D+1, 384).  Rows 0:D = weights with D input rows, row D = biases.
#   cols   0: 96  encoder fused Wq|Wk|Wv      (lane tile 0)
#   cols 128:224  decoder fused Wq|Wk|Wv      (lane tile 1)
#   cols 256:320  encoder FF W1               (lane tile 2)
#   cols 320:384  decoder FF W1               (lane tile 2)
# P2: (FF_HIDDEN+1, 64). Rows 0:FF = weights with FF input rows, last row = biases.
#   cols  0:32 encoder FF W2, cols 32:64 decoder FF W2
P1_COLS = 384
OFF_E_QKV = 0
OFF_D_QKV = 128
OFF_E_W1 = 256
OFF_D_W1 = 320
P1_ROWS = D + 1

P2_COLS = 2 * D
OFF_E_W2 = 0
OFF_D_W2 = D
P2_ROWS = FF_HIDDEN + 1


# -------------------------- fused forward-pass kernel -------------------------
def _transformer_kernel(x_ref, p1_ref, p2_ref, out_ref, attn_ref):
    """Whole encoder+decoder forward on VMEM-resident tiles (single program)."""
    scale = 1.0 / math.sqrt(DH)

    def softmax_rows(s):
        m = jnp.max(s, axis=-1, keepdims=True)
        p = jnp.exp(s - m)
        return p * pl.reciprocal(jnp.sum(p, axis=-1, keepdims=True), approx=True)

    def head_probs(q, k):
        # Per-head scaled-dot-product softmax probabilities (unrolled, H small).
        probs = []
        for h in range(H):
            lo = h * DH
            s = lax.dot_general(q[:, lo:lo + DH], k[:, lo:lo + DH],
                                (((1,), (1,)), ((), ())),
                                preferred_element_type=jnp.float32) * scale
            probs.append(softmax_rows(s))
        return probs

    def apply_probs(probs, v):
        # Head "concat" = write each head's context into its column slice of
        # the VMEM scratch; no lane-shuffle concatenate.
        for h in range(H):
            lo = h * DH
            attn_ref[:, lo:lo + DH] = jnp.dot(
                probs[h], v[:, lo:lo + DH], preferred_element_type=jnp.float32)
        return attn_ref[...]

    def add_ln(x, res):
        # Residual add + LayerNorm (gamma=1, beta=0), two-moment variance so
        # the two cross-lane reductions are independent.
        y = x + res
        mu = jnp.mean(y, axis=-1, keepdims=True)
        var = jnp.mean(y * y, axis=-1, keepdims=True) - mu * mu
        return (y - mu) * lax.rsqrt(var + EPS)

    def ffn(x, off1, off2):
        w1 = p1_ref[0:D, off1:off1 + FF_HIDDEN]
        b1 = p1_ref[D:D + 1, off1:off1 + FF_HIDDEN]
        h = jnp.maximum(jnp.dot(x, w1, preferred_element_type=jnp.float32) + b1, 0.0)
        w2 = p2_ref[0:FF_HIDDEN, off2:off2 + D]
        b2 = p2_ref[FF_HIDDEN:FF_HIDDEN + 1, off2:off2 + D]
        return jnp.dot(h, w2, preferred_element_type=jnp.float32) + b2

    x0 = x_ref[...]  # positional encoding already folded in on the XLA side

    # ------------------------------ encoder stack -----------------------------
    inter = x0
    for _ in range(N_LAYERS):
        wqkv = p1_ref[0:D, OFF_E_QKV:OFF_E_QKV + 3 * D]
        bqkv = p1_ref[D:D + 1, OFF_E_QKV:OFF_E_QKV + 3 * D]
        qkv = jnp.dot(inter, wqkv, preferred_element_type=jnp.float32) + bqkv
        q, k, v = qkv[:, 0:D], qkv[:, D:2 * D], qkv[:, 2 * D:3 * D]
        ctx = apply_probs(head_probs(q, k), v)
        inter = add_ln(ctx, inter)
        inter = add_ln(ffn(inter, OFF_E_W1, OFF_E_W2), inter)
    enc_out = inter

    # ------------------------------ decoder stack -----------------------------
    # Cross-attention Q/K projections and softmax probabilities depend only on
    # enc_out and the decoder MHA weights -> layer-invariant, hoisted out of
    # the loop.  Only V = inter changes per layer.
    wqk = p1_ref[0:D, OFF_D_QKV:OFF_D_QKV + 2 * D]
    bqk = p1_ref[D:D + 1, OFF_D_QKV:OFF_D_QKV + 2 * D]
    qk = jnp.dot(enc_out, wqk, preferred_element_type=jnp.float32) + bqk
    dec_probs = head_probs(qk[:, 0:D], qk[:, D:2 * D])

    inter = x0
    for _ in range(N_LAYERS):
        # TODO(synk): reference's masked decoder self-attention output is never
        # used (overwritten before its LayerNorm is applied); omitted as dead code.
        wv = p1_ref[0:D, OFF_D_QKV + 2 * D:OFF_D_QKV + 3 * D]
        bv = p1_ref[D:D + 1, OFF_D_QKV + 2 * D:OFF_D_QKV + 3 * D]
        v = jnp.dot(inter, wv, preferred_element_type=jnp.float32) + bv
        ctx = apply_probs(dec_probs, v)
        inter = add_ln(ctx, inter)
        inter = add_ln(ffn(inter, OFF_D_W1, OFF_D_W2), inter)

    out_ref[...] = inter


# --------------------------------- glue (JAX) ---------------------------------
def positional_encoding(seq, dim):
    pos = jnp.arange(seq, dtype=jnp.float32)[:, None]
    i = jnp.arange(dim, dtype=jnp.float32)[None, :]
    angle = pos / jnp.power(10000.0, (2.0 * jnp.floor(i / 2.0)) / dim)
    return jnp.where((jnp.arange(dim) % 2)[None, :] == 0,
                     jnp.sin(angle), jnp.cos(angle)).astype(jnp.float32)


@jax.jit
def transformer_forward(inp, p1, p2):
    # Fold positional-encoding add into the input (constant-folded under jit).
    x0 = inp.astype(jnp.float32) + positional_encoding(S, D)
    vmem = pl.BlockSpec(memory_space=pltpu.MemorySpace.VMEM)
    return pl.pallas_call(
        _transformer_kernel,
        out_shape=jax.ShapeDtypeStruct((S, D), jnp.float32),
        in_specs=[vmem, vmem, vmem],
        out_specs=vmem,
        scratch_shapes=[pltpu.VMEM((S, D), jnp.float32)],
    )(x0, p1, p2)


# --------------------------- deterministic parameters --------------------------
def init_params(key):
    def dense(k, d_in, d_out):
        kw, _ = jax.random.split(k)
        w = jax.random.normal(kw, (d_in, d_out), jnp.float32) / math.sqrt(d_in)
        b = jnp.zeros((1, d_out), jnp.float32)
        return w, b

    keys = jax.random.split(key, 4)

    def mha_params(k):
        k1, k2, k3 = jax.random.split(k, 3)
        wq, bq = dense(k1, D, D)
        wk, bk = dense(k2, D, D)
        wv, bv = dense(k3, D, D)
        return {"wq": wq, "bq": bq, "wk": wk, "bk": bk, "wv": wv, "bv": bv}

    def ff_params(k):
        k1, k2 = jax.random.split(k)
        w1, b1 = dense(k1, D, FF_HIDDEN)
        w2, b2 = dense(k2, FF_HIDDEN, D)
        return {"w1": w1, "b1": b1, "w2": w2, "b2": b2}

    return {
        "enc_mha": mha_params(keys[0]),
        "enc_ff": ff_params(keys[1]),
        "dec_mha": mha_params(keys[2]),
        "dec_ff": ff_params(keys[3]),
    }


def pack_params(params):
    """Pack all weights/biases into two contiguous f32 buffers (P1, P2)."""
    em, ef = params["enc_mha"], params["enc_ff"]
    dm, df = params["dec_mha"], params["dec_ff"]

    e_wqkv = jnp.concatenate([em["wq"], em["wk"], em["wv"]], axis=1)   # (D, 3D)
    e_bqkv = jnp.concatenate([em["bq"], em["bk"], em["bv"]], axis=1)   # (1, 3D)
    d_wqkv = jnp.concatenate([dm["wq"], dm["wk"], dm["wv"]], axis=1)
    d_bqkv = jnp.concatenate([dm["bq"], dm["bk"], dm["bv"]], axis=1)

    p1 = jnp.zeros((P1_ROWS, P1_COLS), jnp.float32)
    p1 = p1.at[0:D, OFF_E_QKV:OFF_E_QKV + 3 * D].set(e_wqkv)
    p1 = p1.at[D, OFF_E_QKV:OFF_E_QKV + 3 * D].set(e_bqkv[0])
    p1 = p1.at[0:D, OFF_D_QKV:OFF_D_QKV + 3 * D].set(d_wqkv)
    p1 = p1.at[D, OFF_D_QKV:OFF_D_QKV + 3 * D].set(d_bqkv[0])
    p1 = p1.at[0:D, OFF_E_W1:OFF_E_W1 + FF_HIDDEN].set(ef["w1"])
    p1 = p1.at[D, OFF_E_W1:OFF_E_W1 + FF_HIDDEN].set(ef["b1"][0])
    p1 = p1.at[0:D, OFF_D_W1:OFF_D_W1 + FF_HIDDEN].set(df["w1"])
    p1 = p1.at[D, OFF_D_W1:OFF_D_W1 + FF_HIDDEN].set(df["b1"][0])

    p2 = jnp.zeros((P2_ROWS, P2_COLS), jnp.float32)
    p2 = p2.at[0:FF_HIDDEN, OFF_E_W2:OFF_E_W2 + D].set(ef["w2"])
    p2 = p2.at[FF_HIDDEN, OFF_E_W2:OFF_E_W2 + D].set(ef["b2"][0])
    p2 = p2.at[0:FF_HIDDEN, OFF_D_W2:OFF_D_W2 + D].set(df["w2"])
    p2 = p2.at[FF_HIDDEN, OFF_D_W2:OFF_D_W2 + D].set(df["b2"][0])
    return p1, p2


# ------------------------------------ main ------------------------------------
if __name__ == "__main__":
    key = jax.random.PRNGKey(0)
    k_inp, k_par = jax.random.split(key)
    inp = jax.random.normal(k_inp, (S, D), jnp.float32)
    params = init_params(k_par)
    p1, p2 = pack_params(params)

    out = transformer_forward(inp, p1, p2)
    out = jax.block_until_ready(out)
    assert out.shape == (S, D), out.shape
    assert bool(jnp.all(jnp.isfinite(out)))
    print("KERNEL_OK")
</pallas_src>

<mosaic_0001>
module attributes {stable_mosaic.version = 11 : i64} {
  func.func @_transformer_kernel(%arg0: memref<8x32xf32, #tpu.memory_space<vmem>>, %arg1: memref<33x384xf32, #tpu.memory_space<vmem>>, %arg2: memref<65x64xf32, #tpu.memory_space<vmem>>, %arg3: memref<8x32xf32, #tpu.memory_space<vmem>>, %arg4: memref<8x32xf32, #tpu.memory_space<vmem>>) attributes {dimension_semantics = [], scalar_prefetch = 0 : i64, scratch_operands = 1 : i64, tpu.core_type = #tpu.core_type<tc>} {
    %c0 = arith.constant 0 : index
    %c0_0 = arith.constant 0 : index
    %0 = vector.load %arg0[%c0, %c0_0] : memref<8x32xf32, #tpu.memory_space<vmem>>, vector<8x32xf32>
    %c0_1 = arith.constant 0 : index
    %c0_2 = arith.constant 0 : index
    %1 = vector.load %arg1[%c0_1, %c0_2] : memref<33x384xf32, #tpu.memory_space<vmem>>, vector<32x96xf32>
    %c32 = arith.constant 32 : index
    %c0_3 = arith.constant 0 : index
    %2 = vector.load %arg1[%c32, %c0_3] : memref<33x384xf32, #tpu.memory_space<vmem>>, vector<1x96xf32>
    %cst = arith.constant dense<0.000000e+00> : vector<8x96xf32>
    %3 = tpu.matmul %0, %1, %cst {dimension_numbers = #tpu.dot_dimension_numbers<[1], [0], [0], [1], [0, 0, 1, 1], [], []>} : vector<8x32xf32>, vector<32x96xf32>, vector<8x96xf32> -> vector<8x96xf32>
    %4 = vector.broadcast %2 : vector<1x96xf32> to vector<8x96xf32>
    %5 = arith.addf %3, %4 : vector<8x96xf32>
    %6 = vector.extract_strided_slice %5 {offsets = [0, 0], sizes = [8, 32], strides = [1, 1]} : vector<8x96xf32> to vector<8x32xf32>
    %7 = vector.extract_strided_slice %5 {offsets = [0, 32], sizes = [8, 32], strides = [1, 1]} : vector<8x96xf32> to vector<8x32xf32>
    %8 = vector.extract_strided_slice %5 {offsets = [0, 64], sizes = [8, 32], strides = [1, 1]} : vector<8x96xf32> to vector<8x32xf32>
    %9 = vector.extract_strided_slice %6 {offsets = [0, 0], sizes = [8, 8], strides = [1, 1]} : vector<8x32xf32> to vector<8x8xf32>
    %10 = vector.extract_strided_slice %7 {offsets = [0, 0], sizes = [8, 8], strides = [1, 1]} : vector<8x32xf32> to vector<8x8xf32>
    %cst_4 = arith.constant dense<0.000000e+00> : vector<8x8xf32>
    %11 = tpu.matmul %9, %10, %cst_4 {dimension_numbers = #tpu.dot_dimension_numbers<[1], [1], [0], [0], [0, 0, 1, 0], [], []>} : vector<8x8xf32>, vector<8x8xf32>, vector<8x8xf32> -> vector<8x8xf32>
    %cst_5 = arith.constant 0.353553385 : f32
    %12 = vector.broadcast %cst_5 : f32 to vector<8x8xf32>
    %13 = arith.mulf %11, %12 : vector<8x8xf32>
    %cst_6 = arith.constant dense<0xFF800000> : vector<8xf32>
    %14 = vector.multi_reduction <maximumf>, %13, %cst_6 [1] : vector<8x8xf32> to vector<8xf32>
    %15 = vector.shape_cast %14 : vector<8xf32> to vector<8x1xf32>
    %16 = vector.broadcast %15 : vector<8x1xf32> to vector<8x8xf32>
    %17 = arith.subf %13, %16 : vector<8x8xf32>
    %18 = math.exp %17 : vector<8x8xf32>
    %cst_7 = arith.constant dense<0.000000e+00> : vector<8xf32>
    %19 = vector.multi_reduction <add>, %18, %cst_7 [1] : vector<8x8xf32> to vector<8xf32>
    %20 = vector.shape_cast %19 : vector<8xf32> to vector<8x1xf32>
    %21 = tpu.reciprocal %20 {approx = true} : vector<8x1xf32> -> vector<8x1xf32>
    %22 = vector.broadcast %21 : vector<8x1xf32> to vector<8x8xf32>
    %23 = arith.mulf %18, %22 : vector<8x8xf32>
    %24 = vector.extract_strided_slice %6 {offsets = [0, 8], sizes = [8, 8], strides = [1, 1]} : vector<8x32xf32> to vector<8x8xf32>
    %25 = vector.extract_strided_slice %7 {offsets = [0, 8], sizes = [8, 8], strides = [1, 1]} : vector<8x32xf32> to vector<8x8xf32>
    %cst_8 = arith.constant dense<0.000000e+00> : vector<8x8xf32>
    %26 = tpu.matmul %24, %25, %cst_8 {dimension_numbers = #tpu.dot_dimension_numbers<[1], [1], [0], [0], [0, 0, 1, 0], [], []>} : vector<8x8xf32>, vector<8x8xf32>, vector<8x8xf32> -> vector<8x8xf32>
    %cst_9 = arith.constant 0.353553385 : f32
    %27 = vector.broadcast %cst_9 : f32 to vector<8x8xf32>
    %28 = arith.mulf %26, %27 : vector<8x8xf32>
    %cst_10 = arith.constant dense<0xFF800000> : vector<8xf32>
    %29 = vector.multi_reduction <maximumf>, %28, %cst_10 [1] : vector<8x8xf32> to vector<8xf32>
    %30 = vector.shape_cast %29 : vector<8xf32> to vector<8x1xf32>
    %31 = vector.broadcast %30 : vector<8x1xf32> to vector<8x8xf32>
    %32 = arith.subf %28, %31 : vector<8x8xf32>
    %33 = math.exp %32 : vector<8x8xf32>
    %cst_11 = arith.constant dense<0.000000e+00> : vector<8xf32>
    %34 = vector.multi_reduction <add>, %33, %cst_11 [1] : vector<8x8xf32> to vector<8xf32>
    %35 = vector.shape_cast %34 : vector<8xf32> to vector<8x1xf32>
    %36 = tpu.reciprocal %35 {approx = true} : vector<8x1xf32> -> vector<8x1xf32>
    %37 = vector.broadcast %36 : vector<8x1xf32> to vector<8x8xf32>
    %38 = arith.mulf %33, %37 : vector<8x8xf32>
    %39 = vector.extract_strided_slice %6 {offsets = [0, 16], sizes = [8, 8], strides = [1, 1]} : vector<8x32xf32> to vector<8x8xf32>
    %40 = vector.extract_strided_slice %7 {offsets = [0, 16], sizes = [8, 8], strides = [1, 1]} : vector<8x32xf32> to vector<8x8xf32>
    %cst_12 = arith.constant dense<0.000000e+00> : vector<8x8xf32>
    %41 = tpu.matmul %39, %40, %cst_12 {dimension_numbers = #tpu.dot_dimension_numbers<[1], [1], [0], [0], [0, 0, 1, 0], [], []>} : vector<8x8xf32>, vector<8x8xf32>, vector<8x8xf32> -> vector<8x8xf32>
    %cst_13 = arith.constant 0.353553385 : f32
    %42 = vector.broadcast %cst_13 : f32 to vector<8x8xf32>
    %43 = arith.mulf %41, %42 : vector<8x8xf32>
    %cst_14 = arith.constant dense<0xFF800000> : vector<8xf32>
    %44 = vector.multi_reduction <maximumf>, %43, %cst_14 [1] : vector<8x8xf32> to vector<8xf32>
    %45 = vector.shape_cast %44 : vector<8xf32> to vector<8x1xf32>
    %46 = vector.broadcast %45 : vector<8x1xf32> to vector<8x8xf32>
    %47 = arith.subf %43, %46 : vector<8x8xf32>
    %48 = math.exp %47 : vector<8x8xf32>
    %cst_15 = arith.constant dense<0.000000e+00> : vector<8xf32>
    %49 = vector.multi_reduction <add>, %48, %cst_15 [1] : vector<8x8xf32> to vector<8xf32>
    %50 = vector.shape_cast %49 : vector<8xf32> to vector<8x1xf32>
    %51 = tpu.reciprocal %50 {approx = true} : vector<8x1xf32> -> vector<8x1xf32>
    %52 = vector.broadcast %51 : vector<8x1xf32> to vector<8x8xf32>
    %53 = arith.mulf %48, %52 : vector<8x8xf32>
    %54 = vector.extract_strided_slice %6 {offsets = [0, 24], sizes = [8, 8], strides = [1, 1]} : vector<8x32xf32> to vector<8x8xf32>
    %55 = vector.extract_strided_slice %7 {offsets = [0, 24], sizes = [8, 8], strides = [1, 1]} : vector<8x32xf32> to vector<8x8xf32>
    %cst_16 = arith.constant dense<0.000000e+00> : vector<8x8xf32>
    %56 = tpu.matmul %54, %55, %cst_16 {dimension_numbers = #tpu.dot_dimension_numbers<[1], [1], [0], [0], [0, 0, 1, 0], [], []>} : vector<8x8xf32>, vector<8x8xf32>, vector<8x8xf32> -> vector<8x8xf32>
    %cst_17 = arith.constant 0.353553385 : f32
    %57 = vector.broadcast %cst_17 : f32 to vector<8x8xf32>
    %58 = arith.mulf %56, %57 : vector<8x8xf32>
    %cst_18 = arith.constant dense<0xFF800000> : vector<8xf32>
    %59 = vector.multi_reduction <maximumf>, %58, %cst_18 [1] : vector<8x8xf32> to vector<8xf32>
    %60 = vector.shape_cast %59 : vector<8xf32> to vector<8x1xf32>
    %61 = vector.broadcast %60 : vector<8x1xf32> to vector<8x8xf32>
    %62 = arith.subf %58, %61 : vector<8x8xf32>
    %63 = math.exp %62 : vector<8x8xf32>
    %cst_19 = arith.constant dense<0.000000e+00> : vector<8xf32>
    %64 = vector.multi_reduction <add>, %63, %cst_19 [1] : vector<8x8xf32> to vector<8xf32>
    %65 = vector.shape_cast %64 : vector<8xf32> to vector<8x1xf32>
    %66 = tpu.reciprocal %65 {approx = true} : vector<8x1xf32> -> vector<8x1xf32>
    %67 = vector.broadcast %66 : vector<8x1xf32> to vector<8x8xf32>
    %68 = arith.mulf %63, %67 : vector<8x8xf32>
    %69 = vector.extract_strided_slice %8 {offsets = [0, 0], sizes = [8, 8], strides = [1, 1]} : vector<8x32xf32> to vector<8x8xf32>
    %cst_20 = arith.constant dense<0.000000e+00> : vector<8x8xf32>
    %70 = tpu.matmul %23, %69, %cst_20 {dimension_numbers = #tpu.dot_dimension_numbers<[1], [0], [0], [1], [0, 0, 1, 1], [], []>} : vector<8x8xf32>, vector<8x8xf32>, vector<8x8xf32> -> vector<8x8xf32>
    %c0_21 = arith.constant 0 : index
    %c0_22 = arith.constant 0 : index
    %71 = vector.load %arg4[%c0_21, %c0_22] : memref<8x32xf32, #tpu.memory_space<vmem>>, vector<8x8xf32>
    tpu.vector_store %arg4[%c0_21, %c0_22], %70 {strides = array<i32>} : memref<8x32xf32, #tpu.memory_space<vmem>>, vector<8x8xf32>,
    %72 = vector.extract_strided_slice %8 {offsets = [0, 8], sizes = [8, 8], strides = [1, 1]} : vector<8x32xf32> to vector<8x8xf32>
    %cst_23 = arith.constant dense<0.000000e+00> : vector<8x8xf32>
    %73 = tpu.matmul %38, %72, %cst_23 {dimension_numbers = #tpu.dot_dimension_numbers<[1], [0], [0], [1], [0, 0, 1, 1], [], []>} : vector<8x8xf32>, vector<8x8xf32>, vector<8x8xf32> -> vector<8x8xf32>
    %c0_24 = arith.constant 0 : index
    %c8 = arith.constant 8 : index
    %74 = vector.load %arg4[%c0_24, %c8] : memref<8x32xf32, #tpu.memory_space<vmem>>, vector<8x8xf32>
    tpu.vector_store %arg4[%c0_24, %c8], %73 {strides = array<i32>} : memref<8x32xf32, #tpu.memory_space<vmem>>, vector<8x8xf32>,
    %75 = vector.extract_strided_slice %8 {offsets = [0, 16], sizes = [8, 8], strides = [1, 1]} : vector<8x32xf32> to vector<8x8xf32>
    %cst_25 = arith.constant dense<0.000000e+00> : vector<8x8xf32>
    %76 = tpu.matmul %53, %75, %cst_25 {dimension_numbers = #tpu.dot_dimension_numbers<[1], [0], [0], [1], [0, 0, 1, 1], [], []>} : vector<8x8xf32>, vector<8x8xf32>, vector<8x8xf32> -> vector<8x8xf32>
    %c0_26 = arith.constant 0 : index
    %c16 = arith.constant 16 : index
    %77 = vector.load %arg4[%c0_26, %c16] : memref<8x32xf32, #tpu.memory_space<vmem>>, vector<8x8xf32>
    tpu.vector_store %arg4[%c0_26, %c16], %76 {strides = array<i32>} : memref<8x32xf32, #tpu.memory_space<vmem>>, vector<8x8xf32>,
    %78 = vector.extract_strided_slice %8 {offsets = [0, 24], sizes = [8, 8], strides = [1, 1]} : vector<8x32xf32> to vector<8x8xf32>
    %cst_27 = arith.constant dense<0.000000e+00> : vector<8x8xf32>
    %79 = tpu.matmul %68, %78, %cst_27 {dimension_numbers = #tpu.dot_dimension_numbers<[1], [0], [0], [1], [0, 0, 1, 1], [], []>} : vector<8x8xf32>, vector<8x8xf32>, vector<8x8xf32> -> vector<8x8xf32>
    %c0_28 = arith.constant 0 : index
    %c24 = arith.constant 24 : index
    %80 = vector.load %arg4[%c0_28, %c24] : memref<8x32xf32, #tpu.memory_space<vmem>>, vector<8x8xf32>
    tpu.vector_store %arg4[%c0_28, %c24], %79 {strides = array<i32>} : memref<8x32xf32, #tpu.memory_space<vmem>>, vector<8x8xf32>,
    %c0_29 = arith.constant 0 : index
    %c0_30 = arith.constant 0 : index
    %81 = vector.load %arg4[%c0_29, %c0_30] : memref<8x32xf32, #tpu.memory_space<vmem>>, vector<8x32xf32>
    %82 = arith.addf %81, %0 : vector<8x32xf32>
    %cst_31 = arith.constant dense<0.000000e+00> : vector<8xf32>
    %83 = vector.multi_reduction <add>, %82, %cst_31 [1] : vector<8x32xf32> to vector<8xf32>
    %84 = vector.shape_cast %83 : vector<8xf32> to vector<8x1xf32>
    %cst_32 = arith.constant 3.200000e+01 : f32
    %85 = vector.broadcast %cst_32 : f32 to vector<8x1xf32>
    %86 = arith.divf %84, %85 : vector<8x1xf32>
    %87 = arith.mulf %82, %82 : vector<8x32xf32>
    %cst_33 = arith.constant dense<0.000000e+00> : vector<8xf32>
    %88 = vector.multi_reduction <add>, %87, %cst_33 [1] : vector<8x32xf32> to vector<8xf32>
    %89 = vector.shape_cast %88 : vector<8xf32> to vector<8x1xf32>
    %cst_34 = arith.constant 3.200000e+01 : f32
    %90 = vector.broadcast %cst_34 : f32 to vector<8x1xf32>
    %91 = arith.divf %89, %90 : vector<8x1xf32>
    %92 = arith.mulf %86, %86 : vector<8x1xf32>
    %93 = arith.subf %91, %92 : vector<8x1xf32>
    %94 = vector.broadcast %86 : vector<8x1xf32> to vector<8x32xf32>
    %95 = arith.subf %82, %94 : vector<8x32xf32>
    %cst_35 = arith.constant 9.99999974E-6 : f32
    %96 = vector.broadcast %cst_35 : f32 to vector<8x1xf32>
    %97 = arith.addf %93, %96 : vector<8x1xf32>
    %98 = math.rsqrt %97 : vector<8x1xf32>
    %99 = vector.broadcast %98 : vector<8x1xf32> to vector<8x32xf32>
    %100 = arith.mulf %95, %99 : vector<8x32xf32>
    %c0_36 = arith.constant 0 : index
    %c256 = arith.constant 256 : index
    %101 = vector.load %arg1[%c0_36, %c256] : memref<33x384xf32, #tpu.memory_space<vmem>>, vector<32x64xf32>
    %c32_37 = arith.constant 32 : index
    %c256_38 = arith.constant 256 : index
    %102 = vector.load %arg1[%c32_37, %c256_38] : memref<33x384xf32, #tpu.memory_space<vmem>>, vector<1x64xf32>
    %cst_39 = arith.constant dense<0.000000e+00> : vector<8x64xf32>
    %103 = tpu.matmul %100, %101, %cst_39 {dimension_numbers = #tpu.dot_dimension_numbers<[1], [0], [0], [1], [0, 0, 1, 1], [], []>} : vector<8x32xf32>, vector<32x64xf32>, vector<8x64xf32> -> vector<8x64xf32>
    %104 = vector.broadcast %102 : vector<1x64xf32> to vector<8x64xf32>
    %105 = arith.addf %103, %104 : vector<8x64xf32>
    %cst_40 = arith.constant 0.000000e+00 : f32
    %106 = vector.broadcast %cst_40 : f32 to vector<8x64xf32>
    %107 = arith.maximumf %105, %106 : vector<8x64xf32>
    %c0_41 = arith.constant 0 : index
    %c0_42 = arith.constant 0 : index
    %108 = vector.load %arg2[%c0_41, %c0_42] : memref<65x64xf32, #tpu.memory_space<vmem>>, vector<64x32xf32>
    %c64 = arith.constant 64 : index
    %c0_43 = arith.constant 0 : index
    %109 = vector.load %arg2[%c64, %c0_43] : memref<65x64xf32, #tpu.memory_space<vmem>>, vector<1x32xf32>
    %cst_44 = arith.constant dense<0.000000e+00> : vector<8x32xf32>
    %110 = tpu.matmul %107, %108, %cst_44 {dimension_numbers = #tpu.dot_dimension_numbers<[1], [0], [0], [1], [0, 0, 1, 1], [], []>} : vector<8x64xf32>, vector<64x32xf32>, vector<8x32xf32> -> vector<8x32xf32>
    %111 = vector.broadcast %109 : vector<1x32xf32> to vector<8x32xf32>
    %112 = arith.addf %110, %111 : vector<8x32xf32>
    %113 = arith.addf %112, %100 : vector<8x32xf32>
    %cst_45 = arith.constant dense<0.000000e+00> : vector<8xf32>
    %114 = vector.multi_reduction <add>, %113, %cst_45 [1] : vector<8x32xf32> to vector<8xf32>
    %115 = vector.shape_cast %114 : vector<8xf32> to vector<8x1xf32>
    %cst_46 = arith.constant 3.200000e+01 : f32
    %116 = vector.broadcast %cst_46 : f32 to vector<8x1xf32>
    %117 = arith.divf %115, %116 : vector<8x1xf32>
    %118 = arith.mulf %113, %113 : vector<8x32xf32>
    %cst_47 = arith.constant dense<0.000000e+00> : vector<8xf32>
    %119 = vector.multi_reduction <add>, %118, %cst_47 [1] : vector<8x32xf32> to vector<8xf32>
    %120 = vector.shape_cast %119 : vector<8xf32> to vector<8x1xf32>
    %cst_48 = arith.constant 3.200000e+01 : f32
    %121 = vector.broadcast %cst_48 : f32 to vector<8x1xf32>
    %122 = arith.divf %120, %121 : vector<8x1xf32>
    %123 = arith.mulf %117, %117 : vector<8x1xf32>
    %124 = arith.subf %122, %123 : vector<8x1xf32>
    %125 = vector.broadcast %117 : vector<8x1xf32> to vector<8x32xf32>
    %126 = arith.subf %113, %125 : vector<8x32xf32>
    %cst_49 = arith.constant 9.99999974E-6 : f32
    %127 = vector.broadcast %cst_49 : f32 to vector<8x1xf32>
    %128 = arith.addf %124, %127 : vector<8x1xf32>
    %129 = math.rsqrt %128 : vector<8x1xf32>
    %130 = vector.broadcast %129 : vector<8x1xf32> to vector<8x32xf32>
    %131 = arith.mulf %126, %130 : vector<8x32xf32>
    %c0_50 = arith.constant 0 : index
    %c0_51 = arith.constant 0 : index
    %132 = vector.load %arg1[%c0_50, %c0_51] : memref<33x384xf32, #tpu.memory_space<vmem>>, vector<32x96xf32>
    %c32_52 = arith.constant 32 : index
    %c0_53 = arith.constant 0 : index
    %133 = vector.load %arg1[%c32_52, %c0_53] : memref<33x384xf32, #tpu.memory_space<vmem>>, vector<1x96xf32>
    %cst_54 = arith.constant dense<0.000000e+00> : vector<8x96xf32>
    %134 = tpu.matmul %131, %132, %cst_54 {dimension_numbers = #tpu.dot_dimension_numbers<[1], [0], [0], [1], [0, 0, 1, 1], [], []>} : vector<8x32xf32>, vector<32x96xf32>, vector<8x96xf32> -> vector<8x96xf32>
    %135 = vector.broadcast %133 : vector<1x96xf32> to vector<8x96xf32>
    %136 = arith.addf %134, %135 : vector<8x96xf32>
    %137 = vector.extract_strided_slice %136 {offsets = [0, 0], sizes = [8, 32], strides = [1, 1]} : vector<8x96xf32> to vector<8x32xf32>
    %138 = vector.extract_strided_slice %136 {offsets = [0, 32], sizes = [8, 32], strides = [1, 1]} : vector<8x96xf32> to vector<8x32xf32>
    %139 = vector.extract_strided_slice %136 {offsets = [0, 64], sizes = [8, 32], strides = [1, 1]} : vector<8x96xf32> to vector<8x32xf32>
    %140 = vector.extract_strided_slice %137 {offsets = [0, 0], sizes = [8, 8], strides = [1, 1]} : vector<8x32xf32> to vector<8x8xf32>
    %141 = vector.extract_strided_slice %138 {offsets = [0, 0], sizes = [8, 8], strides = [1, 1]} : vector<8x32xf32> to vector<8x8xf32>
    %cst_55 = arith.constant dense<0.000000e+00> : vector<8x8xf32>
    %142 = tpu.matmul %140, %141, %cst_55 {dimension_numbers = #tpu.dot_dimension_numbers<[1], [1], [0], [0], [0, 0, 1, 0], [], []>} : vector<8x8xf32>, vector<8x8xf32>, vector<8x8xf32> -> vector<8x8xf32>
    %cst_56 = arith.constant 0.353553385 : f32
    %143 = vector.broadcast %cst_56 : f32 to vector<8x8xf32>
    %144 = arith.mulf %142, %143 : vector<8x8xf32>
    %cst_57 = arith.constant dense<0xFF800000> : vector<8xf32>
    %145 = vector.multi_reduction <maximumf>, %144, %cst_57 [1] : vector<8x8xf32> to vector<8xf32>
    %146 = vector.shape_cast %145 : vector<8xf32> to vector<8x1xf32>
    %147 = vector.broadcast %146 : vector<8x1xf32> to vector<8x8xf32>
    %148 = arith.subf %144, %147 : vector<8x8xf32>
    %149 = math.exp %148 : vector<8x8xf32>
    %cst_58 = arith.constant dense<0.000000e+00> : vector<8xf32>
    %150 = vector.multi_reduction <add>, %149, %cst_58 [1] : vector<8x8xf32> to vector<8xf32>
    %151 = vector.shape_cast %150 : vector<8xf32> to vector<8x1xf32>
    %152 = tpu.reciprocal %151 {approx = true} : vector<8x1xf32> -> vector<8x1xf32>
    %153 = vector.broadcast %152 : vector<8x1xf32> to vector<8x8xf32>
    %154 = arith.mulf %149, %153 : vector<8x8xf32>
    %155 = vector.extract_strided_slice %137 {offsets = [0, 8], sizes = [8, 8], strides = [1, 1]} : vector<8x32xf32> to vector<8x8xf32>
    %156 = vector.extract_strided_slice %138 {offsets = [0, 8], sizes = [8, 8], strides = [1, 1]} : vector<8x32xf32> to vector<8x8xf32>
    %cst_59 = arith.constant dense<0.000000e+00> : vector<8x8xf32>
    %157 = tpu.matmul %155, %156, %cst_59 {dimension_numbers = #tpu.dot_dimension_numbers<[1], [1], [0], [0], [0, 0, 1, 0], [], []>} : vector<8x8xf32>, vector<8x8xf32>, vector<8x8xf32> -> vector<8x8xf32>
    %cst_60 = arith.constant 0.353553385 : f32
    %158 = vector.broadcast %cst_60 : f32 to vector<8x8xf32>
    %159 = arith.mulf %157, %158 : vector<8x8xf32>
    %cst_61 = arith.constant dense<0xFF800000> : vector<8xf32>
    %160 = vector.multi_reduction <maximumf>, %159, %cst_61 [1] : vector<8x8xf32> to vector<8xf32>
    %161 = vector.shape_cast %160 : vector<8xf32> to vector<8x1xf32>
    %162 = vector.broadcast %161 : vector<8x1xf32> to vector<8x8xf32>
    %163 = arith.subf %159, %162 : vector<8x8xf32>
    %164 = math.exp %163 : vector<8x8xf32>
    %cst_62 = arith.constant dense<0.000000e+00> : vector<8xf32>
    %165 = vector.multi_reduction <add>, %164, %cst_62 [1] : vector<8x8xf32> to vector<8xf32>
    %166 = vector.shape_cast %165 : vector<8xf32> to vector<8x1xf32>
    %167 = tpu.reciprocal %166 {approx = true} : vector<8x1xf32> -> vector<8x1xf32>
    %168 = vector.broadcast %167 : vector<8x1xf32> to vector<8x8xf32>
    %169 = arith.mulf %164, %168 : vector<8x8xf32>
    %170 = vector.extract_strided_slice %137 {offsets = [0, 16], sizes = [8, 8], strides = [1, 1]} : vector<8x32xf32> to vector<8x8xf32>
    %171 = vector.extract_strided_slice %138 {offsets = [0, 16], sizes = [8, 8], strides = [1, 1]} : vector<8x32xf32> to vector<8x8xf32>
    %cst_63 = arith.constant dense<0.000000e+00> : vector<8x8xf32>
    %172 = tpu.matmul %170, %171, %cst_63 {dimension_numbers = #tpu.dot_dimension_numbers<[1], [1], [0], [0], [0, 0, 1, 0], [], []>} : vector<8x8xf32>, vector<8x8xf32>, vector<8x8xf32> -> vector<8x8xf32>
    %cst_64 = arith.constant 0.353553385 : f32
    %173 = vector.broadcast %cst_64 : f32 to vector<8x8xf32>
    %174 = arith.mulf %172, %173 : vector<8x8xf32>
    %cst_65 = arith.constant dense<0xFF800000> : vector<8xf32>
    %175 = vector.multi_reduction <maximumf>, %174, %cst_65 [1] : vector<8x8xf32> to vector<8xf32>
    %176 = vector.shape_cast %175 : vector<8xf32> to vector<8x1xf32>
    %177 = vector.broadcast %176 : vector<8x1xf32> to vector<8x8xf32>
    %178 = arith.subf %174, %177 : vector<8x8xf32>
    %179 = math.exp %178 : vector<8x8xf32>
    %cst_66 = arith.constant dense<0.000000e+00> : vector<8xf32>
    %180 = vector.multi_reduction <add>, %179, %cst_66 [1] : vector<8x8xf32> to vector<8xf32>
    %181 = vector.shape_cast %180 : vector<8xf32> to vector<8x1xf32>
    %182 = tpu.reciprocal %181 {approx = true} : vector<8x1xf32> -> vector<8x1xf32>
    %183 = vector.broadcast %182 : vector<8x1xf32> to vector<8x8xf32>
    %184 = arith.mulf %179, %183 : vector<8x8xf32>
    %185 = vector.extract_strided_slice %137 {offsets = [0, 24], sizes = [8, 8], strides = [1, 1]} : vector<8x32xf32> to vector<8x8xf32>
    %186 = vector.extract_strided_slice %138 {offsets = [0, 24], sizes = [8, 8], strides = [1, 1]} : vector<8x32xf32> to vector<8x8xf32>
    %cst_67 = arith.constant dense<0.000000e+00> : vector<8x8xf32>
    %187 = tpu.matmul %185, %186, %cst_67 {dimension_numbers = #tpu.dot_dimension_numbers<[1], [1], [0], [0], [0, 0, 1, 0], [], []>} : vector<8x8xf32>, vector<8x8xf32>, vector<8x8xf32> -> vector<8x8xf32>
    %cst_68 = arith.constant 0.353553385 : f32
    %188 = vector.broadcast %cst_68 : f32 to vector<8x8xf32>
    %189 = arith.mulf %187, %188 : vector<8x8xf32>
    %cst_69 = arith.constant dense<0xFF800000> : vector<8xf32>
    %190 = vector.multi_reduction <maximumf>, %189, %cst_69 [1] : vector<8x8xf32> to vector<8xf32>
    %191 = vector.shape_cast %190 : vector<8xf32> to vector<8x1xf32>
    %192 = vector.broadcast %191 : vector<8x1xf32> to vector<8x8xf32>
    %193 = arith.subf %189, %192 : vector<8x8xf32>
    %194 = math.exp %193 : vector<8x8xf32>
    %cst_70 = arith.constant dense<0.000000e+00> : vector<8xf32>
    %195 = vector.multi_reduction <add>, %194, %cst_70 [1] : vector<8x8xf32> to vector<8xf32>
    %196 = vector.shape_cast %195 : vector<8xf32> to vector<8x1xf32>
    %197 = tpu.reciprocal %196 {approx = true} : vector<8x1xf32> -> vector<8x1xf32>
    %198 = vector.broadcast %197 : vector<8x1xf32> to vector<8x8xf32>
    %199 = arith.mulf %194, %198 : vector<8x8xf32>
    %200 = vector.extract_strided_slice %139 {offsets = [0, 0], sizes = [8, 8], strides = [1, 1]} : vector<8x32xf32> to vector<8x8xf32>
    %cst_71 = arith.constant dense<0.000000e+00> : vector<8x8xf32>
    %201 = tpu.matmul %154, %200, %cst_71 {dimension_numbers = #tpu.dot_dimension_numbers<[1], [0], [0], [1], [0, 0, 1, 1], [], []>} : vector<8x8xf32>, vector<8x8xf32>, vector<8x8xf32> -> vector<8x8xf32>
    %c0_72 = arith.constant 0 : index
    %c0_73 = arith.constant 0 : index
    %202 = vector.load %arg4[%c0_72, %c0_73] : memref<8x32xf32, #tpu.memory_space<vmem>>, vector<8x8xf32>
    tpu.vector_store %arg4[%c0_72, %c0_73], %201 {strides = array<i32>} : memref<8x32xf32, #tpu.memory_space<vmem>>, vector<8x8xf32>,
    %203 = vector.extract_strided_slice %139 {offsets = [0, 8], sizes = [8, 8], strides = [1, 1]} : vector<8x32xf32> to vector<8x8xf32>
    %cst_74 = arith.constant dense<0.000000e+00> : vector<8x8xf32>
    %204 = tpu.matmul %169, %203, %cst_74 {dimension_numbers = #tpu.dot_dimension_numbers<[1], [0], [0], [1], [0, 0, 1, 1], [], []>} : vector<8x8xf32>, vector<8x8xf32>, vector<8x8xf32> -> vector<8x8xf32>
    %c0_75 = arith.constant 0 : index
    %c8_76 = arith.constant 8 : index
    %205 = vector.load %arg4[%c0_75, %c8_76] : memref<8x32xf32, #tpu.memory_space<vmem>>, vector<8x8xf32>
    tpu.vector_store %arg4[%c0_75, %c8_76], %204 {strides = array<i32>} : memref<8x32xf32, #tpu.memory_space<vmem>>, vector<8x8xf32>,
    %206 = vector.extract_strided_slice %139 {offsets = [0, 16], sizes = [8, 8], strides = [1, 1]} : vector<8x32xf32> to vector<8x8xf32>
    %cst_77 = arith.constant dense<0.000000e+00> : vector<8x8xf32>
    %207 = tpu.matmul %184, %206, %cst_77 {dimension_numbers = #tpu.dot_dimension_numbers<[1], [0], [0], [1], [0, 0, 1, 1], [], []>} : vector<8x8xf32>, vector<8x8xf32>, vector<8x8xf32> -> vector<8x8xf32>
    %c0_78 = arith.constant 0 : index
    %c16_79 = arith.constant 16 : index
    %208 = vector.load %arg4[%c0_78, %c16_79] : memref<8x32xf32, #tpu.memory_space<vmem>>, vector<8x8xf32>
    tpu.vector_store %arg4[%c0_78, %c16_79], %207 {strides = array<i32>} : memref<8x32xf32, #tpu.memory_space<vmem>>, vector<8x8xf32>,
    %209 = vector.extract_strided_slice %139 {offsets = [0, 24], sizes = [8, 8], strides = [1, 1]} : vector<8x32xf32> to vector<8x8xf32>
    %cst_80 = arith.constant dense<0.000000e+00> : vector<8x8xf32>
    %210 = tpu.matmul %199, %209, %cst_80 {dimension_numbers = #tpu.dot_dimension_numbers<[1], [0], [0], [1], [0, 0, 1, 1], [], []>} : vector<8x8xf32>, vector<8x8xf32>, vector<8x8xf32> -> vector<8x8xf32>
    %c0_81 = arith.constant 0 : index
    %c24_82 = arith.constant 24 : index
    %211 = vector.load %arg4[%c0_81, %c24_82] : memref<8x32xf32, #tpu.memory_space<vmem>>, vector<8x8xf32>
    tpu.vector_store %arg4[%c0_81, %c24_82], %210 {strides = array<i32>} : memref<8x32xf32, #tpu.memory_space<vmem>>, vector<8x8xf32>,
    %c0_83 = arith.constant 0 : index
    %c0_84 = arith.constant 0 : index
    %212 = vector.load %arg4[%c0_83, %c0_84] : memref<8x32xf32, #tpu.memory_space<vmem>>, vector<8x32xf32>
    %213 = arith.addf %212, %131 : vector<8x32xf32>
    %cst_85 = arith.constant dense<0.000000e+00> : vector<8xf32>
    %214 = vector.multi_reduction <add>, %213, %cst_85 [1] : vector<8x32xf32> to vector<8xf32>
    %215 = vector.shape_cast %214 : vector<8xf32> to vector<8x1xf32>
    %cst_86 = arith.constant 3.200000e+01 : f32
    %216 = vector.broadcast %cst_86 : f32 to vector<8x1xf32>
    %217 = arith.divf %215, %216 : vector<8x1xf32>
    %218 = arith.mulf %213, %213 : vector<8x32xf32>
    %cst_87 = arith.constant dense<0.000000e+00> : vector<8xf32>
    %219 = vector.multi_reduction <add>, %218, %cst_87 [1] : vector<8x32xf32> to vector<8xf32>
    %220 = vector.shape_cast %219 : vector<8xf32> to vector<8x1xf32>
    %cst_88 = arith.constant 3.200000e+01 : f32
    %221 = vector.broadcast %cst_88 : f32 to vector<8x1xf32>
    %222 = arith.divf %220, %221 : vector<8x1xf32>
    %223 = arith.mulf %217, %217 : vector<8x1xf32>
    %224 = arith.subf %222, %223 : vector<8x1xf32>
    %225 = vector.broadcast %217 : vector<8x1xf32> to vector<8x32xf32>
    %226 = arith.subf %213, %225 : vector<8x32xf32>
    %cst_89 = arith.constant 9.99999974E-6 : f32
    %227 = vector.broadcast %cst_89 : f32 to vector<8x1xf32>
    %228 = arith.addf %224, %227 : vector<8x1xf32>
    %229 = math.rsqrt %228 : vector<8x1xf32>
    %230 = vector.broadcast %229 : vector<8x1xf32> to vector<8x32xf32>
    %231 = arith.mulf %226, %230 : vector<8x32xf32>
    %c0_90 = arith.constant 0 : index
    %c256_91 = arith.constant 256 : index
    %232 = vector.load %arg1[%c0_90, %c256_91] : memref<33x384xf32, #tpu.memory_space<vmem>>, vector<32x64xf32>
    %c32_92 = arith.constant 32 : index
    %c256_93 = arith.constant 256 : index
    %233 = vector.load %arg1[%c32_92, %c256_93] : memref<33x384xf32, #tpu.memory_space<vmem>>, vector<1x64xf32>
    %cst_94 = arith.constant dense<0.000000e+00> : vector<8x64xf32>
    %234 = tpu.matmul %231, %232, %cst_94 {dimension_numbers = #tpu.dot_dimension_numbers<[1], [0], [0], [1], [0, 0, 1, 1], [], []>} : vector<8x32xf32>, vector<32x64xf32>, vector<8x64xf32> -> vector<8x64xf32>
    %235 = vector.broadcast %233 : vector<1x64xf32> to vector<8x64xf32>
    %236 = arith.addf %234, %235 : vector<8x64xf32>
    %cst_95 = arith.constant 0.000000e+00 : f32
    %237 = vector.broadcast %cst_95 : f32 to vector<8x64xf32>
    %238 = arith.maximumf %236, %237 : vector<8x64xf32>
    %c0_96 = arith.constant 0 : index
    %c0_97 = arith.constant 0 : index
    %239 = vector.load %arg2[%c0_96, %c0_97] : memref<65x64xf32, #tpu.memory_space<vmem>>, vector<64x32xf32>
    %c64_98 = arith.constant 64 : index
    %c0_99 = arith.constant 0 : index
    %240 = vector.load %arg2[%c64_98, %c0_99] : memref<65x64xf32, #tpu.memory_space<vmem>>, vector<1x32xf32>
    %cst_100 = arith.constant dense<0.000000e+00> : vector<8x32xf32>
    %241 = tpu.matmul %238, %239, %cst_100 {dimension_numbers = #tpu.dot_dimension_numbers<[1], [0], [0], [1], [0, 0, 1, 1], [], []>} : vector<8x64xf32>, vector<64x32xf32>, vector<8x32xf32> -> vector<8x32xf32>
    %242 = vector.broadcast %240 : vector<1x32xf32> to vector<8x32xf32>
    %243 = arith.addf %241, %242 : vector<8x32xf32>
    %244 = arith.addf %243, %231 : vector<8x32xf32>
    %cst_101 = arith.constant dense<0.000000e+00> : vector<8xf32>
    %245 = vector.multi_reduction <add>, %244, %cst_101 [1] : vector<8x32xf32> to vector<8xf32>
    %246 = vector.shape_cast %245 : vector<8xf32> to vector<8x1xf32>
    %cst_102 = arith.constant 3.200000e+01 : f32
    %247 = vector.broadcast %cst_102 : f32 to vector<8x1xf32>
    %248 = arith.divf %246, %247 : vector<8x1xf32>
    %249 = arith.mulf %244, %244 : vector<8x32xf32>
    %cst_103 = arith.constant dense<0.000000e+00> : vector<8xf32>
    %250 = vector.multi_reduction <add>, %249, %cst_103 [1] : vector<8x32xf32> to vector<8xf32>
    %251 = vector.shape_cast %250 : vector<8xf32> to vector<8x1xf32>
    %cst_104 = arith.constant 3.200000e+01 : f32
    %252 = vector.broadcast %cst_104 : f32 to vector<8x1xf32>
    %253 = arith.divf %251, %252 : vector<8x1xf32>
    %254 = arith.mulf %248, %248 : vector<8x1xf32>
    %255 = arith.subf %253, %254 : vector<8x1xf32>
    %256 = vector.broadcast %248 : vector<8x1xf32> to vector<8x32xf32>
    %257 = arith.subf %244, %256 : vector<8x32xf32>
    %cst_105 = arith.constant 9.99999974E-6 : f32
    %258 = vector.broadcast %cst_105 : f32 to vector<8x1xf32>
    %259 = arith.addf %255, %258 : vector<8x1xf32>
    %260 = math.rsqrt %259 : vector<8x1xf32>
    %261 = vector.broadcast %260 : vector<8x1xf32> to vector<8x32xf32>
    %262 = arith.mulf %257, %261 : vector<8x32xf32>
    %c0_106 = arith.constant 0 : index
    %c128 = arith.constant 128 : index
    %263 = vector.load %arg1[%c0_106, %c128] : memref<33x384xf32, #tpu.memory_space<vmem>>, vector<32x64xf32>
    %c32_107 = arith.constant 32 : index
    %c128_108 = arith.constant 128 : index
    %264 = vector.load %arg1[%c32_107, %c128_108] : memref<33x384xf32, #tpu.memory_space<vmem>>, vector<1x64xf32>
    %cst_109 = arith.constant dense<0.000000e+00> : vector<8x64xf32>
    %265 = tpu.matmul %262, %263, %cst_109 {dimension_numbers = #tpu.dot_dimension_numbers<[1], [0], [0], [1], [0, 0, 1, 1], [], []>} : vector<8x32xf32>, vector<32x64xf32>, vector<8x64xf32> -> vector<8x64xf32>
    %266 = vector.broadcast %264 : vector<1x64xf32> to vector<8x64xf32>
    %267 = arith.addf %265, %266 : vector<8x64xf32>
    %268 = vector.extract_strided_slice %267 {offsets = [0, 0], sizes = [8, 32], strides = [1, 1]} : vector<8x64xf32> to vector<8x32xf32>
    %269 = vector.extract_strided_slice %267 {offsets = [0, 32], sizes = [8, 32], strides = [1, 1]} : vector<8x64xf32> to vector<8x32xf32>
    %270 = vector.extract_strided_slice %268 {offsets = [0, 0], sizes = [8, 8], strides = [1, 1]} : vector<8x32xf32> to vector<8x8xf32>
    %271 = vector.extract_strided_slice %269 {offsets = [0, 0], sizes = [8, 8], strides = [1, 1]} : vector<8x32xf32> to vector<8x8xf32>
    %cst_110 = arith.constant dense<0.000000e+00> : vector<8x8xf32>
    %272 = tpu.matmul %270, %271, %cst_110 {dimension_numbers = #tpu.dot_dimension_numbers<[1], [1], [0], [0], [0, 0, 1, 0], [], []>} : vector<8x8xf32>, vector<8x8xf32>, vector<8x8xf32> -> vector<8x8xf32>
    %cst_111 = arith.constant 0.353553385 : f32
    %273 = vector.broadcast %cst_111 : f32 to vector<8x8xf32>
    %274 = arith.mulf %272, %273 : vector<8x8xf32>
    %cst_112 = arith.constant dense<0xFF800000> : vector<8xf32>
    %275 = vector.multi_reduction <maximumf>, %274, %cst_112 [1] : vector<8x8xf32> to vector<8xf32>
    %276 = vector.shape_cast %275 : vector<8xf32> to vector<8x1xf32>
    %277 = vector.broadcast %276 : vector<8x1xf32> to vector<8x8xf32>
    %278 = arith.subf %274, %277 : vector<8x8xf32>
    %279 = math.exp %278 : vector<8x8xf32>
    %cst_113 = arith.constant dense<0.000000e+00> : vector<8xf32>
    %280 = vector.multi_reduction <add>, %279, %cst_113 [1] : vector<8x8xf32> to vector<8xf32>
    %281 = vector.shape_cast %280 : vector<8xf32> to vector<8x1xf32>
    %282 = tpu.reciprocal %281 {approx = true} : vector<8x1xf32> -> vector<8x1xf32>
    %283 = vector.broadcast %282 : vector<8x1xf32> to vector<8x8xf32>
    %284 = arith.mulf %279, %283 : vector<8x8xf32>
    %285 = vector.extract_strided_slice %268 {offsets = [0, 8], sizes = [8, 8], strides = [1, 1]} : vector<8x32xf32> to vector<8x8xf32>
    %286 = vector.extract_strided_slice %269 {offsets = [0, 8], sizes = [8, 8], strides = [1, 1]} : vector<8x32xf32> to vector<8x8xf32>
    %cst_114 = arith.constant dense<0.000000e+00> : vector<8x8xf32>
    %287 = tpu.matmul %285, %286, %cst_114 {dimension_numbers = #tpu.dot_dimension_numbers<[1], [1], [0], [0], [0, 0, 1, 0], [], []>} : vector<8x8xf32>, vector<8x8xf32>, vector<8x8xf32> -> vector<8x8xf32>
    %cst_115 = arith.constant 0.353553385 : f32
    %288 = vector.broadcast %cst_115 : f32 to vector<8x8xf32>
    %289 = arith.mulf %287, %288 : vector<8x8xf32>
    %cst_116 = arith.constant dense<0xFF800000> : vector<8xf32>
    %290 = vector.multi_reduction <maximumf>, %289, %cst_116 [1] : vector<8x8xf32> to vector<8xf32>
    %291 = vector.shape_cast %290 : vector<8xf32> to vector<8x1xf32>
    %292 = vector.broadcast %291 : vector<8x1xf32> to vector<8x8xf32>
    %293 = arith.subf %289, %292 : vector<8x8xf32>
    %294 = math.exp %293 : vector<8x8xf32>
    %cst_117 = arith.constant dense<0.000000e+00> : vector<8xf32>
    %295 = vector.multi_reduction <add>, %294, %cst_117 [1] : vector<8x8xf32> to vector<8xf32>
    %296 = vector.shape_cast %295 : vector<8xf32> to vector<8x1xf32>
    %297 = tpu.reciprocal %296 {approx = true} : vector<8x1xf32> -> vector<8x1xf32>
    %298 = vector.broadcast %297 : vector<8x1xf32> to vector<8x8xf32>
    %299 = arith.mulf %294, %298 : vector<8x8xf32>
    %300 = vector.extract_strided_slice %268 {offsets = [0, 16], sizes = [8, 8], strides = [1, 1]} : vector<8x32xf32> to vector<8x8xf32>
    %301 = vector.extract_strided_slice %269 {offsets = [0, 16], sizes = [8, 8], strides = [1, 1]} : vector<8x32xf32> to vector<8x8xf32>
    %cst_118 = arith.constant dense<0.000000e+00> : vector<8x8xf32>
    %302 = tpu.matmul %300, %301, %cst_118 {dimension_numbers = #tpu.dot_dimension_numbers<[1], [1], [0], [0], [0, 0, 1, 0], [], []>} : vector<8x8xf32>, vector<8x8xf32>, vector<8x8xf32> -> vector<8x8xf32>
    %cst_119 = arith.constant 0.353553385 : f32
    %303 = vector.broadcast %cst_119 : f32 to vector<8x8xf32>
    %304 = arith.mulf %302, %303 : vector<8x8xf32>
    %cst_120 = arith.constant dense<0xFF800000> : vector<8xf32>
    %305 = vector.multi_reduction <maximumf>, %304, %cst_120 [1] : vector<8x8xf32> to vector<8xf32>
    %306 = vector.shape_cast %305 : vector<8xf32> to vector<8x1xf32>
    %307 = vector.broadcast %306 : vector<8x1xf32> to vector<8x8xf32>
    %308 = arith.subf %304, %307 : vector<8x8xf32>
    %309 = math.exp %308 : vector<8x8xf32>
    %cst_121 = arith.constant dense<0.000000e+00> : vector<8xf32>
    %310 = vector.multi_reduction <add>, %309, %cst_121 [1] : vector<8x8xf32> to vector<8xf32>
    %311 = vector.shape_cast %310 : vector<8xf32> to vector<8x1xf32>
    %312 = tpu.reciprocal %311 {approx = true} : vector<8x1xf32> -> vector<8x1xf32>
    %313 = vector.broadcast %312 : vector<8x1xf32> to vector<8x8xf32>
    %314 = arith.mulf %309, %313 : vector<8x8xf32>
    %315 = vector.extract_strided_slice %268 {offsets = [0, 24], sizes = [8, 8], strides = [1, 1]} : vector<8x32xf32> to vector<8x8xf32>
    %316 = vector.extract_strided_slice %269 {offsets = [0, 24], sizes = [8, 8], strides = [1, 1]} : vector<8x32xf32> to vector<8x8xf32>
    %cst_122 = arith.constant dense<0.000000e+00> : vector<8x8xf32>
    %317 = tpu.matmul %315, %316, %cst_122 {dimension_numbers = #tpu.dot_dimension_numbers<[1], [1], [0], [0], [0, 0, 1, 0], [], []>} : vector<8x8xf32>, vector<8x8xf32>, vector<8x8xf32> -> vector<8x8xf32>
    %cst_123 = arith.constant 0.353553385 : f32
    %318 = vector.broadcast %cst_123 : f32 to vector<8x8xf32>
    %319 = arith.mulf %317, %318 : vector<8x8xf32>
    %cst_124 = arith.constant dense<0xFF800000> : vector<8xf32>
    %320 = vector.multi_reduction <maximumf>, %319, %cst_124 [1] : vector<8x8xf32> to vector<8xf32>
    %321 = vector.shape_cast %320 : vector<8xf32> to vector<8x1xf32>
    %322 = vector.broadcast %321 : vector<8x1xf32> to vector<8x8xf32>
    %323 = arith.subf %319, %322 : vector<8x8xf32>
    %324 = math.exp %323 : vector<8x8xf32>
    %cst_125 = arith.constant dense<0.000000e+00> : vector<8xf32>
    %325 = vector.multi_reduction <add>, %324, %cst_125 [1] : vector<8x8xf32> to vector<8xf32>
    %326 = vector.shape_cast %325 : vector<8xf32> to vector<8x1xf32>
    %327 = tpu.reciprocal %326 {approx = true} : vector<8x1xf32> -> vector<8x1xf32>
    %328 = vector.broadcast %327 : vector<8x1xf32> to vector<8x8xf32>
    %329 = arith.mulf %324, %328 : vector<8x8xf32>
    %c0_126 = arith.constant 0 : index
    %c192 = arith.constant 192 : index
    %330 = vector.load %arg1[%c0_126, %c192] : memref<33x384xf32, #tpu.memory_space<vmem>>, vector<32x32xf32>
    %c32_127 = arith.constant 32 : index
    %c192_128 = arith.constant 192 : index
    %331 = vector.load %arg1[%c32_127, %c192_128] : memref<33x384xf32, #tpu.memory_space<vmem>>, vector<1x32xf32>
    %cst_129 = arith.constant dense<0.000000e+00> : vector<8x32xf32>
    %332 = tpu.matmul %0, %330, %cst_129 {dimension_numbers = #tpu.dot_dimension_numbers<[1], [0], [0], [1], [0, 0, 1, 1], [], []>} : vector<8x32xf32>, vector<32x32xf32>, vector<8x32xf32> -> vector<8x32xf32>
    %333 = vector.broadcast %331 : vector<1x32xf32> to vector<8x32xf32>
    %334 = arith.addf %332, %333 : vector<8x32xf32>
    %335 = vector.extract_strided_slice %334 {offsets = [0, 0], sizes = [8, 8], strides = [1, 1]} : vector<8x32xf32> to vector<8x8xf32>
    %cst_130 = arith.constant dense<0.000000e+00> : vector<8x8xf32>
    %336 = tpu.matmul %284, %335, %cst_130 {dimension_numbers = #tpu.dot_dimension_numbers<[1], [0], [0], [1], [0, 0, 1, 1], [], []>} : vector<8x8xf32>, vector<8x8xf32>, vector<8x8xf32> -> vector<8x8xf32>
    %c0_131 = arith.constant 0 : index
    %c0_132 = arith.constant 0 : index
    %337 = vector.load %arg4[%c0_131, %c0_132] : memref<8x32xf32, #tpu.memory_space<vmem>>, vector<8x8xf32>
    tpu.vector_store %arg4[%c0_131, %c0_132], %336 {strides = array<i32>} : memref<8x32xf32, #tpu.memory_space<vmem>>, vector<8x8xf32>,
    %338 = vector.extract_strided_slice %334 {offsets = [0, 8], sizes = [8, 8], strides = [1, 1]} : vector<8x32xf32> to vector<8x8xf32>
    %cst_133 = arith.constant dense<0.000000e+00> : vector<8x8xf32>
    %339 = tpu.matmul %299, %338, %cst_133 {dimension_numbers = #tpu.dot_dimension_numbers<[1], [0], [0], [1], [0, 0, 1, 1], [], []>} : vector<8x8xf32>, vector<8x8xf32>, vector<8x8xf32> -> vector<8x8xf32>
    %c0_134 = arith.constant 0 : index
    %c8_135 = arith.constant 8 : index
    %340 = vector.load %arg4[%c0_134, %c8_135] : memref<8x32xf32, #tpu.memory_space<vmem>>, vector<8x8xf32>
    tpu.vector_store %arg4[%c0_134, %c8_135], %339 {strides = array<i32>} : memref<8x32xf32, #tpu.memory_space<vmem>>, vector<8x8xf32>,
    %341 = vector.extract_strided_slice %334 {offsets = [0, 16], sizes = [8, 8], strides = [1, 1]} : vector<8x32xf32> to vector<8x8xf32>
    %cst_136 = arith.constant dense<0.000000e+00> : vector<8x8xf32>
    %342 = tpu.matmul %314, %341, %cst_136 {dimension_numbers = #tpu.dot_dimension_numbers<[1], [0], [0], [1], [0, 0, 1, 1], [], []>} : vector<8x8xf32>, vector<8x8xf32>, vector<8x8xf32> -> vector<8x8xf32>
    %c0_137 = arith.constant 0 : index
    %c16_138 = arith.constant 16 : index
    %343 = vector.load %arg4[%c0_137, %c16_138] : memref<8x32xf32, #tpu.memory_space<vmem>>, vector<8x8xf32>
    tpu.vector_store %arg4[%c0_137, %c16_138], %342 {strides = array<i32>} : memref<8x32xf32, #tpu.memory_space<vmem>>, vector<8x8xf32>,
    %344 = vector.extract_strided_slice %334 {offsets = [0, 24], sizes = [8, 8], strides = [1, 1]} : vector<8x32xf32> to vector<8x8xf32>
    %cst_139 = arith.constant dense<0.000000e+00> : vector<8x8xf32>
    %345 = tpu.matmul %329, %344, %cst_139 {dimension_numbers = #tpu.dot_dimension_numbers<[1], [0], [0], [1], [0, 0, 1, 1], [], []>} : vector<8x8xf32>, vector<8x8xf32>, vector<8x8xf32> -> vector<8x8xf32>
    %c0_140 = arith.constant 0 : index
    %c24_141 = arith.constant 24 : index
    %346 = vector.load %arg4[%c0_140, %c24_141] : memref<8x32xf32, #tpu.memory_space<vmem>>, vector<8x8xf32>
    tpu.vector_store %arg4[%c0_140, %c24_141], %345 {strides = array<i32>} : memref<8x32xf32, #tpu.memory_space<vmem>>, vector<8x8xf32>,
    %c0_142 = arith.constant 0 : index
    %c0_143 = arith.constant 0 : index
    %347 = vector.load %arg4[%c0_142, %c0_143] : memref<8x32xf32, #tpu.memory_space<vmem>>, vector<8x32xf32>
    %348 = arith.addf %347, %0 : vector<8x32xf32>
    %cst_144 = arith.constant dense<0.000000e+00> : vector<8xf32>
    %349 = vector.multi_reduction <add>, %348, %cst_144 [1] : vector<8x32xf32> to vector<8xf32>
    %350 = vector.shape_cast %349 : vector<8xf32> to vector<8x1xf32>
    %cst_145 = arith.constant 3.200000e+01 : f32
    %351 = vector.broadcast %cst_145 : f32 to vector<8x1xf32>
    %352 = arith.divf %350, %351 : vector<8x1xf32>
    %353 = arith.mulf %348, %348 : vector<8x32xf32>
    %cst_146 = arith.constant dense<0.000000e+00> : vector<8xf32>
    %354 = vector.multi_reduction <add>, %353, %cst_146 [1] : vector<8x32xf32> to vector<8xf32>
    %355 = vector.shape_cast %354 : vector<8xf32> to vector<8x1xf32>
    %cst_147 = arith.constant 3.200000e+01 : f32
    %356 = vector.broadcast %cst_147 : f32 to vector<8x1xf32>
    %357 = arith.divf %355, %356 : vector<8x1xf32>
    %358 = arith.mulf %352, %352 : vector<8x1xf32>
    %359 = arith.subf %357, %358 : vector<8x1xf32>
    %360 = vector.broadcast %352 : vector<8x1xf32> to vector<8x32xf32>
    %361 = arith.subf %348, %360 : vector<8x32xf32>
    %cst_148 = arith.constant 9.99999974E-6 : f32
    %362 = vector.broadcast %cst_148 : f32 to vector<8x1xf32>
    %363 = arith.addf %359, %362 : vector<8x1xf32>
    %364 = math.rsqrt %363 : vector<8x1xf32>
    %365 = vector.broadcast %364 : vector<8x1xf32> to vector<8x32xf32>
    %366 = arith.mulf %361, %365 : vector<8x32xf32>
    %c0_149 = arith.constant 0 : index
    %c320 = arith.constant 320 : index
    %367 = vector.load %arg1[%c0_149, %c320] : memref<33x384xf32, #tpu.memory_space<vmem>>, vector<32x64xf32>
    %c32_150 = arith.constant 32 : index
    %c320_151 = arith.constant 320 : index
    %368 = vector.load %arg1[%c32_150, %c320_151] : memref<33x384xf32, #tpu.memory_space<vmem>>, vector<1x64xf32>
    %cst_152 = arith.constant dense<0.000000e+00> : vector<8x64xf32>
    %369 = tpu.matmul %366, %367, %cst_152 {dimension_numbers = #tpu.dot_dimension_numbers<[1], [0], [0], [1], [0, 0, 1, 1], [], []>} : vector<8x32xf32>, vector<32x64xf32>, vector<8x64xf32> -> vector<8x64xf32>
    %370 = vector.broadcast %368 : vector<1x64xf32> to vector<8x64xf32>
    %371 = arith.addf %369, %370 : vector<8x64xf32>
    %cst_153 = arith.constant 0.000000e+00 : f32
    %372 = vector.broadcast %cst_153 : f32 to vector<8x64xf32>
    %373 = arith.maximumf %371, %372 : vector<8x64xf32>
    %c0_154 = arith.constant 0 : index
    %c32_155 = arith.constant 32 : index
    %374 = vector.load %arg2[%c0_154, %c32_155] : memref<65x64xf32, #tpu.memory_space<vmem>>, vector<64x32xf32>
    %c64_156 = arith.constant 64 : index
    %c32_157 = arith.constant 32 : index
    %375 = vector.load %arg2[%c64_156, %c32_157] : memref<65x64xf32, #tpu.memory_space<vmem>>, vector<1x32xf32>
    %cst_158 = arith.constant dense<0.000000e+00> : vector<8x32xf32>
    %376 = tpu.matmul %373, %374, %cst_158 {dimension_numbers = #tpu.dot_dimension_numbers<[1], [0], [0], [1], [0, 0, 1, 1], [], []>} : vector<8x64xf32>, vector<64x32xf32>, vector<8x32xf32> -> vector<8x32xf32>
    %377 = vector.broadcast %375 : vector<1x32xf32> to vector<8x32xf32>
    %378 = arith.addf %376, %377 : vector<8x32xf32>
    %379 = arith.addf %378, %366 : vector<8x32xf32>
    %cst_159 = arith.constant dense<0.000000e+00> : vector<8xf32>
    %380 = vector.multi_reduction <add>, %379, %cst_159 [1] : vector<8x32xf32> to vector<8xf32>
    %381 = vector.shape_cast %380 : vector<8xf32> to vector<8x1xf32>
    %cst_160 = arith.constant 3.200000e+01 : f32
    %382 = vector.broadcast %cst_160 : f32 to vector<8x1xf32>
    %383 = arith.divf %381, %382 : vector<8x1xf32>
    %384 = arith.mulf %379, %379 : vector<8x32xf32>
    %cst_161 = arith.constant dense<0.000000e+00> : vector<8xf32>
    %385 = vector.multi_reduction <add>, %384, %cst_161 [1] : vector<8x32xf32> to vector<8xf32>
    %386 = vector.shape_cast %385 : vector<8xf32> to vector<8x1xf32>
    %cst_162 = arith.constant 3.200000e+01 : f32
    %387 = vector.broadcast %cst_162 : f32 to vector<8x1xf32>
    %388 = arith.divf %386, %387 : vector<8x1xf32>
    %389 = arith.mulf %383, %383 : vector<8x1xf32>
    %390 = arith.subf %388, %389 : vector<8x1xf32>
    %391 = vector.broadcast %383 : vector<8x1xf32> to vector<8x32xf32>
    %392 = arith.subf %379, %391 : vector<8x32xf32>
    %cst_163 = arith.constant 9.99999974E-6 : f32
    %393 = vector.broadcast %cst_163 : f32 to vector<8x1xf32>
    %394 = arith.addf %390, %393 : vector<8x1xf32>
    %395 = math.rsqrt %394 : vector<8x1xf32>
    %396 = vector.broadcast %395 : vector<8x1xf32> to vector<8x32xf32>
    %397 = arith.mulf %392, %396 : vector<8x32xf32>
    %c0_164 = arith.constant 0 : index
    %c192_165 = arith.constant 192 : index
    %398 = vector.load %arg1[%c0_164, %c192_165] : memref<33x384xf32, #tpu.memory_space<vmem>>, vector<32x32xf32>
    %c32_166 = arith.constant 32 : index
    %c192_167 = arith.constant 192 : index
    %399 = vector.load %arg1[%c32_166, %c192_167] : memref<33x384xf32, #tpu.memory_space<vmem>>, vector<1x32xf32>
    %cst_168 = arith.constant dense<0.000000e+00> : vector<8x32xf32>
    %400 = tpu.matmul %397, %398, %cst_168 {dimension_numbers = #tpu.dot_dimension_numbers<[1], [0], [0], [1], [0, 0, 1, 1], [], []>} : vector<8x32xf32>, vector<32x32xf32>, vector<8x32xf32> -> vector<8x32xf32>
    %401 = vector.broadcast %399 : vector<1x32xf32> to vector<8x32xf32>
    %402 = arith.addf %400, %401 : vector<8x32xf32>
    %403 = vector.extract_strided_slice %402 {offsets = [0, 0], sizes = [8, 8], strides = [1, 1]} : vector<8x32xf32> to vector<8x8xf32>
    %cst_169 = arith.constant dense<0.000000e+00> : vector<8x8xf32>
    %404 = tpu.matmul %284, %403, %cst_169 {dimension_numbers = #tpu.dot_dimension_numbers<[1], [0], [0], [1], [0, 0, 1, 1], [], []>} : vector<8x8xf32>, vector<8x8xf32>, vector<8x8xf32> -> vector<8x8xf32>
    %c0_170 = arith.constant 0 : index
    %c0_171 = arith.constant 0 : index
    %405 = vector.load %arg4[%c0_170, %c0_171] : memref<8x32xf32, #tpu.memory_space<vmem>>, vector<8x8xf32>
    tpu.vector_store %arg4[%c0_170, %c0_171], %404 {strides = array<i32>} : memref<8x32xf32, #tpu.memory_space<vmem>>, vector<8x8xf32>,
    %406 = vector.extract_strided_slice %402 {offsets = [0, 8], sizes = [8, 8], strides = [1, 1]} : vector<8x32xf32> to vector<8x8xf32>
    %cst_172 = arith.constant dense<0.000000e+00> : vector<8x8xf32>
    %407 = tpu.matmul %299, %406, %cst_172 {dimension_numbers = #tpu.dot_dimension_numbers<[1], [0], [0], [1], [0, 0, 1, 1], [], []>} : vector<8x8xf32>, vector<8x8xf32>, vector<8x8xf32> -> vector<8x8xf32>
    %c0_173 = arith.constant 0 : index
    %c8_174 = arith.constant 8 : index
    %408 = vector.load %arg4[%c0_173, %c8_174] : memref<8x32xf32, #tpu.memory_space<vmem>>, vector<8x8xf32>
    tpu.vector_store %arg4[%c0_173, %c8_174], %407 {strides = array<i32>} : memref<8x32xf32, #tpu.memory_space<vmem>>, vector<8x8xf32>,
    %409 = vector.extract_strided_slice %402 {offsets = [0, 16], sizes = [8, 8], strides = [1, 1]} : vector<8x32xf32> to vector<8x8xf32>
    %cst_175 = arith.constant dense<0.000000e+00> : vector<8x8xf32>
    %410 = tpu.matmul %314, %409, %cst_175 {dimension_numbers = #tpu.dot_dimension_numbers<[1], [0], [0], [1], [0, 0, 1, 1], [], []>} : vector<8x8xf32>, vector<8x8xf32>, vector<8x8xf32> -> vector<8x8xf32>
    %c0_176 = arith.constant 0 : index
    %c16_177 = arith.constant 16 : index
    %411 = vector.load %arg4[%c0_176, %c16_177] : memref<8x32xf32, #tpu.memory_space<vmem>>, vector<8x8xf32>
    tpu.vector_store %arg4[%c0_176, %c16_177], %410 {strides = array<i32>} : memref<8x32xf32, #tpu.memory_space<vmem>>, vector<8x8xf32>,
    %412 = vector.extract_strided_slice %402 {offsets = [0, 24], sizes = [8, 8], strides = [1, 1]} : vector<8x32xf32> to vector<8x8xf32>
    %cst_178 = arith.constant dense<0.000000e+00> : vector<8x8xf32>
    %413 = tpu.matmul %329, %412, %cst_178 {dimension_numbers = #tpu.dot_dimension_numbers<[1], [0], [0], [1], [0, 0, 1, 1], [], []>} : vector<8x8xf32>, vector<8x8xf32>, vector<8x8xf32> -> vector<8x8xf32>
    %c0_179 = arith.constant 0 : index
    %c24_180 = arith.constant 24 : index
    %414 = vector.load %arg4[%c0_179, %c24_180] : memref<8x32xf32, #tpu.memory_space<vmem>>, vector<8x8xf32>
    tpu.vector_store %arg4[%c0_179, %c24_180], %413 {strides = array<i32>} : memref<8x32xf32, #tpu.memory_space<vmem>>, vector<8x8xf32>,
    %c0_181 = arith.constant 0 : index
    %c0_182 = arith.constant 0 : index
    %415 = vector.load %arg4[%c0_181, %c0_182] : memref<8x32xf32, #tpu.memory_space<vmem>>, vector<8x32xf32>
    %416 = arith.addf %415, %397 : vector<8x32xf32>
    %cst_183 = arith.constant dense<0.000000e+00> : vector<8xf32>
    %417 = vector.multi_reduction <add>, %416, %cst_183 [1] : vector<8x32xf32> to vector<8xf32>
    %418 = vector.shape_cast %417 : vector<8xf32> to vector<8x1xf32>
    %cst_184 = arith.constant 3.200000e+01 : f32
    %419 = vector.broadcast %cst_184 : f32 to vector<8x1xf32>
    %420 = arith.divf %418, %419 : vector<8x1xf32>
    %421 = arith.mulf %416, %416 : vector<8x32xf32>
    %cst_185 = arith.constant dense<0.000000e+00> : vector<8xf32>
    %422 = vector.multi_reduction <add>, %421, %cst_185 [1] : vector<8x32xf32> to vector<8xf32>
    %423 = vector.shape_cast %422 : vector<8xf32> to vector<8x1xf32>
    %cst_186 = arith.constant 3.200000e+01 : f32
    %424 = vector.broadcast %cst_186 : f32 to vector<8x1xf32>
    %425 = arith.divf %423, %424 : vector<8x1xf32>
    %426 = arith.mulf %420, %420 : vector<8x1xf32>
    %427 = arith.subf %425, %426 : vector<8x1xf32>
    %428 = vector.broadcast %420 : vector<8x1xf32> to vector<8x32xf32>
    %429 = arith.subf %416, %428 : vector<8x32xf32>
    %cst_187 = arith.constant 9.99999974E-6 : f32
    %430 = vector.broadcast %cst_187 : f32 to vector<8x1xf32>
    %431 = arith.addf %427, %430 : vector<8x1xf32>
    %432 = math.rsqrt %431 : vector<8x1xf32>
    %433 = vector.broadcast %432 : vector<8x1xf32> to vector<8x32xf32>
    %434 = arith.mulf %429, %433 : vector<8x32xf32>
    %c0_188 = arith.constant 0 : index
    %c320_189 = arith.constant 320 : index
    %435 = vector.load %arg1[%c0_188, %c320_189] : memref<33x384xf32, #tpu.memory_space<vmem>>, vector<32x64xf32>
    %c32_190 = arith.constant 32 : index
    %c320_191 = arith.constant 320 : index
    %436 = vector.load %arg1[%c32_190, %c320_191] : memref<33x384xf32, #tpu.memory_space<vmem>>, vector<1x64xf32>
    %cst_192 = arith.constant dense<0.000000e+00> : vector<8x64xf32>
    %437 = tpu.matmul %434, %435, %cst_192 {dimension_numbers = #tpu.dot_dimension_numbers<[1], [0], [0], [1], [0, 0, 1, 1], [], []>} : vector<8x32xf32>, vector<32x64xf32>, vector<8x64xf32> -> vector<8x64xf32>
    %438 = vector.broadcast %436 : vector<1x64xf32> to vector<8x64xf32>
    %439 = arith.addf %437, %438 : vector<8x64xf32>
    %cst_193 = arith.constant 0.000000e+00 : f32
    %440 = vector.broadcast %cst_193 : f32 to vector<8x64xf32>
    %441 = arith.maximumf %439, %440 : vector<8x64xf32>
    %c0_194 = arith.constant 0 : index
    %c32_195 = arith.constant 32 : index
    %442 = vector.load %arg2[%c0_194, %c32_195] : memref<65x64xf32, #tpu.memory_space<vmem>>, vector<64x32xf32>
    %c64_196 = arith.constant 64 : index
    %c32_197 = arith.constant 32 : index
    %443 = vector.load %arg2[%c64_196, %c32_197] : memref<65x64xf32, #tpu.memory_space<vmem>>, vector<1x32xf32>
    %cst_198 = arith.constant dense<0.000000e+00> : vector<8x32xf32>
    %444 = tpu.matmul %441, %442, %cst_198 {dimension_numbers = #tpu.dot_dimension_numbers<[1], [0], [0], [1], [0, 0, 1, 1], [], []>} : vector<8x64xf32>, vector<64x32xf32>, vector<8x32xf32> -> vector<8x32xf32>
    %445 = vector.broadcast %443 : vector<1x32xf32> to vector<8x32xf32>
    %446 = arith.addf %444, %445 : vector<8x32xf32>
    %447 = arith.addf %446, %434 : vector<8x32xf32>
    %cst_199 = arith.constant dense<0.000000e+00> : vector<8xf32>
    %448 = vector.multi_reduction <add>, %447, %cst_199 [1] : vector<8x32xf32> to vector<8xf32>
    %449 = vector.shape_cast %448 : vector<8xf32> to vector<8x1xf32>
    %cst_200 = arith.constant 3.200000e+01 : f32
    %450 = vector.broadcast %cst_200 : f32 to vector<8x1xf32>
    %451 = arith.divf %449, %450 : vector<8x1xf32>
    %452 = arith.mulf %447, %447 : vector<8x32xf32>
    %cst_201 = arith.constant dense<0.000000e+00> : vector<8xf32>
    %453 = vector.multi_reduction <add>, %452, %cst_201 [1] : vector<8x32xf32> to vector<8xf32>
    %454 = vector.shape_cast %453 : vector<8xf32> to vector<8x1xf32>
    %cst_202 = arith.constant 3.200000e+01 : f32
    %455 = vector.broadcast %cst_202 : f32 to vector<8x1xf32>
    %456 = arith.divf %454, %455 : vector<8x1xf32>
    %457 = arith.mulf %451, %451 : vector<8x1xf32>
    %458 = arith.subf %456, %457 : vector<8x1xf32>
    %459 = vector.broadcast %451 : vector<8x1xf32> to vector<8x32xf32>
    %460 = arith.subf %447, %459 : vector<8x32xf32>
    %cst_203 = arith.constant 9.99999974E-6 : f32
    %461 = vector.broadcast %cst_203 : f32 to vector<8x1xf32>
    %462 = arith.addf %458, %461 : vector<8x1xf32>
    %463 = math.rsqrt %462 : vector<8x1xf32>
    %464 = vector.broadcast %463 : vector<8x1xf32> to vector<8x32xf32>
    %465 = arith.mulf %460, %464 : vector<8x32xf32>
    %c0_204 = arith.constant 0 : index
    %c0_205 = arith.constant 0 : index
    %466 = vector.load %arg3[%c0_204, %c0_205] : memref<8x32xf32, #tpu.memory_space<vmem>>, vector<8x32xf32>
    tpu.vector_store %arg3[%c0_204, %c0_205], %465 {strides = array<i32>} : memref<8x32xf32, #tpu.memory_space<vmem>>, vector<8x32xf32>,
    return
  }
}

</mosaic_0001>

<llo_original>
// kernel: transformer_forward.1
$region0: #{transformer_forward.1}
  #allocation0 [shape = 'u32[]', space=smem, size = 0x4, offset = 0x4, fixed_abs, tag = 'smem constant byte address 0x4 - core index']
  #allocation1 [shape = 'u32[144,128]{1,0:T(1,128)}', space=vmem, size = 0x12000, scoped, tag = 'internal scratch']
  #allocation2 [shape = 'f32[8,32]{1,0:T(8,128)}', space=vmem, size = 0x1000, scoped, tag = 'scratch operand']
  %s0 = inlined_call_operand.vmem [shape: f32[8,32], index: 0, kind: input, shape index: {}]
  %s1 = inlined_call_operand.vmem [shape: f32[33,384], index: 1, kind: input, shape index: {}]
  %s2 = inlined_call_operand.vmem [shape: f32[65,64], index: 2, kind: input, shape index: {}]
  %s3 = inlined_call_operand.hbm [shape: f32[8,32], index: 3, kind: output, shape index: {}]
  %s4 = sld [smem:[#allocation0]]
  $region22: #{transformer_forward.1} parent=0
    _
  %s6 = ssub.s32 1, %s4
  %s7 = scalar_select 0, %s6, %s4
  $region1: #{transformer_forward.1} parent=0
    #allocation3 [shape = 'u8[4096]{0}', space=vmem, size = 0x1000, scoped, tag = 'output window, operand 0, single buffered']
    #allocation4 [shape = 's32[1]{0}', space=sflag, size = 0x4, scoped, tag = 'scoped memory for transformer_forward.1']
    %8 = vsyncpa [#allocation4], 0
    // Predicated region
    $region2: #{transformer_forward.1} parent=1 // pred_check
      _
    $region3: #{transformer_forward.1} parent=1 // pred_check_branch
      %10 = sbr.rel (0) target = $region5
    $region4: #{transformer_forward.1} parent=1 // pred_region
      _
    $region5: #{transformer_forward.1} parent=1 // pred_fallthru
      _
    // Predicated region
    $region6: #{transformer_forward.1} parent=1 // pred_check
      _
    $region7: #{transformer_forward.1} parent=1 // pred_check_branch
      %12 = sbr.rel (0) target = $region9
    $region8: #{transformer_forward.1} parent=1 // pred_region
      _
    $region9: #{transformer_forward.1} parent=1 // pred_fallthru
      _
    // Predicated region
    $region10: #{transformer_forward.1} parent=1 // pred_check
      _
    $region11: #{transformer_forward.1} parent=1 // pred_check_branch
      %14 = sbr.rel (0) target = $region13
    $region12: #{transformer_forward.1} parent=1 // pred_region
      _
    $region13: #{transformer_forward.1} parent=1 // pred_fallthru
      _
    %v15 = vld [vmem:[%s0] sm:$0xff]
    %v16 = vld [vmem:[%s1] sm:$0xff]
    %v17 = vld [vmem:[%s1 + $0x18] sm:$0xff]
    %v18 = vld [vmem:[%s1 + $0x30] sm:$0xff]
    %v19 = vld [vmem:[%s1 + $0x48] sm:$0xff]
    %v20 = vld [vmem:[%s1 + $0x60] ss:$0 sm:$0xff]
    %vm21 = vcmask 261120
    %v23 = vsel %vm21, %v15, 0
    %25 = vmatprep.subr.mxu0 0.0
    %26 = vmatpush1.msra.mxu0 %v16
    %27 = vmatprep.subr.mxu0 0.0
    %28 = vmatpush1.msra.mxu0 %v17
    %29 = vmatprep.subr.mxu0 0.0
    %30 = vmatpush1.msra.mxu0 %v18
    %31 = vmatprep.subr.mxu0 0.0
    %32 = vmatpush1.msra.mxu0 %v19
    %33 = vmatprep.subr.mxu0 0.0
    %34 = vmatpush1.msra.mxu0 0.0
    %35 = vmatprep.subr.mxu0 0.0
    %36 = vmatpush1.msra.mxu0 0.0
    %37 = vmatprep.subr.mxu0 0.0
    %38 = vmatpush1.msra.mxu0 0.0
    %39 = vmatprep.subr.mxu0 0.0
    %40 = vmatpush1.msra.mxu0 0.0
    %41 = vmatprep.subr.mxu0 0.0
    %42 = vmatpush1.msra.mxu0 0.0
    %43 = vmatprep.subr.mxu0 0.0
    %44 = vmatpush1.msra.mxu0 0.0
    %45 = vmatprep.subr.mxu0 0.0
    %46 = vmatpush1.msra.mxu0 0.0
    %47 = vmatprep.subr.mxu0 0.0
    %48 = vmatpush1.msra.mxu0 0.0
    %49 = vmatprep.subr.mxu0 0.0
    %50 = vmatpush1.msra.mxu0 0.0
    %51 = vmatprep.subr.mxu0 0.0
    %52 = vmatpush1.msra.mxu0 0.0
    %53 = vmatprep.subr.mxu0 0.0
    %54 = vmatpush1.msra.mxu0 0.0
    %55 = vmatprep.subr.mxu0 0.0
    %56 = vmatpush1.msra.mxu0 0.0
    %57 = vmatprep.subr.mxu0 0.0
    %58 = vmatpush1.msra.mxu0 0.0
    %59 = vmatprep.subr.mxu0 0.0
    %60 = vmatpush1.msra.mxu0 0.0
    %61 = vmatprep.subr.mxu0 0.0
    %62 = vmatpush1.msra.mxu0 0.0
    %63 = vmatprep.subr.mxu0 0.0
    %64 = vmatpush1.msra.mxu0 0.0
    %65 = vmatprep.subr.mxu0 0.0
    %66 = vmatpush1.msra.mxu0 0.0
    %67 = vmatprep.subr.mxu0 0.0
    %68 = vmatpush1.msra.mxu0 0.0
    %69 = vmatprep.subr.mxu0 0.0
    %70 = vmatpush1.msra.mxu0 0.0
    %71 = vmatprep.subr.mxu0 0.0
    %72 = vmatpush1.msra.mxu0 0.0
    %73 = vmatprep.subr.mxu0 0.0
    %74 = vmatpush1.msra.mxu0 0.0
    %75 = vmatprep.subr.mxu0 0.0
    %76 = vmatpush1.msra.mxu0 0.0
    %77 = vmatprep.subr.mxu0 0.0
    %78 = vmatpush1.msra.mxu0 0.0
    %79 = vmatprep.subr.mxu0 0.0
    %80 = vmatpush1.msra.mxu0 0.0
    %81 = vmatprep.subr.mxu0 0.0
    %82 = vmatpush1.msra.mxu0 0.0
    %83 = vmatprep.subr.mxu0 0.0
    %84 = vmatpush1.msra.mxu0 0.0
    %85 = vmatprep.subr.mxu0 0.0
    %86 = vmatpush1.msra.mxu0 0.0
    %87 = vmatprep.subr.mxu0 0.0
    %88 = vmatpush1.msra.mxu0 0.0
    %89 = vmatprep.mubr.f32.mxu0 0.0
    %90 = vmatmul.mubr.f32.gmra.mrb[0].mxu0 %v23
    %v91 = vpop.f32.mrb[0].mxu0
    %v92 = vadd.f32 %v20, %v91
    %v93 = vpop.f32.mrb[0].mxu0
    %94 = vdwg.mxu0
    %96 = vrot.lane.b32.xlu0 %v92, 96
    %v97 = vpop.permute.xlu0 %96
    %vm98 = vcmask 64512
    %v99 = vsel %vm98, %v92, 0
    %v101 = vsel %vm98, %v97, 0
    %103 = vmatprep.subr.mxu0 0.0
    %104 = vmatpush1.xpose.msra.mxu0 %v101
    %105 = vmatprep.subr.mxu0 0.0
    %106 = vmatpush1.xpose.msra.mxu0 0.0
    %107 = vmatprep.subr.mxu0 0.0
    %108 = vmatpush1.xpose.msra.mxu0 0.0
    %109 = vmatprep.subr.mxu0 0.0
    %110 = vmatpush1.xpose.msra.mxu0 0.0
    %111 = vmatprep.subr.mxu0 0.0
    %112 = vmatpush1.xpose.msra.mxu0 0.0
    %113 = vmatprep.subr.mxu0 0.0
    %114 = vmatpush1.xpose.msra.mxu0 0.0
    %115 = vmatprep.subr.mxu0 0.0
    %116 = vmatpush1.xpose.msra.mxu0 0.0
    %117 = vmatprep.subr.mxu0 0.0
    %118 = vmatpush1.xpose.msra.mxu0 0.0
    %119 = vmatprep.subr.mxu0 0.0
    %120 = vmatpush1.xpose.msra.mxu0 0.0
    %121 = vmatprep.subr.mxu0 0.0
    %122 = vmatpush1.xpose.msra.mxu0 0.0
    %123 = vmatprep.subr.mxu0 0.0
    %124 = vmatpush1.xpose.msra.mxu0 0.0
    %125 = vmatprep.subr.mxu0 0.0
    %126 = vmatpush1.xpose.msra.mxu0 0.0
    %127 = vmatprep.subr.mxu0 0.0
    %128 = vmatpush1.xpose.msra.mxu0 0.0
    %129 = vmatprep.subr.mxu0 0.0
    %130 = vmatpush1.xpose.msra.mxu0 0.0
    %131 = vmatprep.subr.mxu0 0.0
    %132 = vmatpush1.xpose.msra.mxu0 0.0
    %133 = vmatprep.subr.mxu0 0.0
    %134 = vmatpush1.xpose.msra.mxu0 0.0
    %135 = vmatprep.subr.mxu0 0.0
    %136 = vmatpush1.xpose.msra.mxu0 0.0
    %137 = vmatprep.subr.mxu0 0.0
    %138 = vmatpush1.xpose.msra.mxu0 0.0
    %139 = vmatprep.subr.mxu0 0.0
    %140 = vmatpush1.xpose.msra.mxu0 0.0
    %141 = vmatprep.subr.mxu0 0.0
    %142 = vmatpush1.xpose.msra.mxu0 0.0
    %143 = vmatprep.subr.mxu0 0.0
    %144 = vmatpush1.xpose.msra.mxu0 0.0
    %145 = vmatprep.subr.mxu0 0.0
    %146 = vmatpush1.xpose.msra.mxu0 0.0
    %147 = vmatprep.subr.mxu0 0.0
    %148 = vmatpush1.xpose.msra.mxu0 0.0
    %149 = vmatprep.subr.mxu0 0.0
    %150 = vmatpush1.xpose.msra.mxu0 0.0
    %151 = vmatprep.subr.mxu0 0.0
    %152 = vmatpush1.xpose.msra.mxu0 0.0
    %153 = vmatprep.subr.mxu0 0.0
    %154 = vmatpush1.xpose.msra.mxu0 0.0
    %155 = vmatprep.subr.mxu0 0.0
    %156 = vmatpush1.xpose.msra.mxu0 0.0
    %157 = vmatprep.subr.mxu0 0.0
    %158 = vmatpush1.xpose.msra.mxu0 0.0
    %159 = vmatprep.subr.mxu0 0.0
    %160 = vmatpush1.xpose.msra.mxu0 0.0
    %161 = vmatprep.subr.mxu0 0.0
    %162 = vmatpush1.xpose.msra.mxu0 0.0
    %163 = vmatprep.subr.mxu0 0.0
    %164 = vmatpush1.xpose.msra.mxu0 0.0
    %165 = vmatprep.subr.mxu0 0.0
    %166 = vmatpush1.xpose.msra.mxu0 0.0
    %167 = vmatprep.mubr.f32.mxu0 0.0
    %168 = vmatmul.mubr.f32.gmra.mrb[0].mxu0 %v99
    %v169 = vpop.f32.mrb[0].mxu0
    %v170 = vadd.f32 0.0, %v169
    %v171 = vpop.f32.mrb[0].mxu0
    %172 = vdwg.mxu0
    %v173 = vmul.f32 %v170, 0.35355338
    %v174 = vsel %vm98, %v173, -inf
    %175 = vmax.xlane.f32.xlu0 %v174
    %v176 = vpop.xlane.xlu0 %175
    %v177 = vsub.f32 %v173, %v176
    %v178 = vmul.f32 %v177, 1.442695
    %v179 = vpow.pop %v178
    %v180 = vsel %vm98, %v179, 0.0
    %181 = vadd.xlane.f32.xlu0 %v180
    %v182 = vpop.xlane.xlu0 %181
    %v183 = vrcp.pop %v182
    %v184 = vmul.f32 %v179, %v183
    %185 = vrot.lane.b32.xlu0 %v92, 120
    %v186 = vpop.permute.xlu0 %185
    %187 = vrot.lane.b32.xlu0 %v92, 88
    %v188 = vpop.permute.xlu0 %187
    %v189 = vsel %vm98, %v186, 0
    %v191 = vsel %vm98, %v188, 0
    %193 = vmatprep.subr.mxu0 0.0
    %194 = vmatpush1.xpose.msra.mxu0 %v191
    %195 = vmatprep.subr.mxu0 0.0
    %196 = vmatpush1.xpose.msra.mxu0 0.0
    %197 = vmatprep.subr.mxu0 0.0
    %198 = vmatpush1.xpose.msra.mxu0 0.0
    %199 = vmatprep.subr.mxu0 0.0
    %200 = vmatpush1.xpose.msra.mxu0 0.0
    %201 = vmatprep.subr.mxu0 0.0
    %202 = vmatpush1.xpose.msra.mxu0 0.0
    %203 = vmatprep.subr.mxu0 0.0
    %204 = vmatpush1.xpose.msra.mxu0 0.0
    %205 = vmatprep.subr.mxu0 0.0
    %206 = vmatpush1.xpose.msra.mxu0 0.0
    %207 = vmatprep.subr.mxu0 0.0
    %208 = vmatpush1.xpose.msra.mxu0 0.0
    %209 = vmatprep.subr.mxu0 0.0
    %210 = vmatpush1.xpose.msra.mxu0 0.0
    %211 = vmatprep.subr.mxu0 0.0
    %212 = vmatpush1.xpose.msra.mxu0 0.0
    %213 = vmatprep.subr.mxu0 0.0
    %214 = vmatpush1.xpose.msra.mxu0 0.0
    %215 = vmatprep.subr.mxu0 0.0
    %216 = vmatpush1.xpose.msra.mxu0 0.0
    %217 = vmatprep.subr.mxu0 0.0
    %218 = vmatpush1.xpose.msra.mxu0 0.0
    %219 = vmatprep.subr.mxu0 0.0
    %220 = vmatpush1.xpose.msra.mxu0 0.0
    %221 = vmatprep.subr.mxu0 0.0
    %222 = vmatpush1.xpose.msra.mxu0 0.0
    %223 = vmatprep.subr.mxu0 0.0
    %224 = vmatpush1.xpose.msra.mxu0 0.0
    %225 = vmatprep.subr.mxu0 0.0
    %226 = vmatpush1.xpose.msra.mxu0 0.0
    %227 = vmatprep.subr.mxu0 0.0
    %228 = vmatpush1.xpose.msra.mxu0 0.0
    %229 = vmatprep.subr.mxu0 0.0
    %230 = vmatpush1.xpose.msra.mxu0 0.0
    %231 = vmatprep.subr.mxu0 0.0
    %232 = vmatpush1.xpose.msra.mxu0 0.0
    %233 = vmatprep.subr.mxu0 0.0
    %234 = vmatpush1.xpose.msra.mxu0 0.0
    %235 = vmatprep.subr.mxu0 0.0
    %236 = vmatpush1.xpose.msra.mxu0 0.0
    %237 = vmatprep.subr.mxu0 0.0
    %238 = vmatpush1.xpose.msra.mxu0 0.0
    %239 = vmatprep.subr.mxu0 0.0
    %240 = vmatpush1.xpose.msra.mxu0 0.0
    %241 = vmatprep.subr.mxu0 0.0
    %242 = vmatpush1.xpose.msra.mxu0 0.0
    %243 = vmatprep.subr.mxu0 0.0
    %244 = vmatpush1.xpose.msra.mxu0 0.0
    %245 = vmatprep.subr.mxu0 0.0
    %246 = vmatpush1.xpose.msra.mxu0 0.0
    %247 = vmatprep.subr.mxu0 0.0
    %248 = vmatpush1.xpose.msra.mxu0 0.0
    %249 = vmatprep.subr.mxu0 0.0
    %250 = vmatpush1.xpose.msra.mxu0 0.0
    %251 = vmatprep.subr.mxu0 0.0
    %252 = vmatpush1.xpose.msra.mxu0 0.0
    %253 = vmatprep.subr.mxu0 0.0
    %254 = vmatpush1.xpose.msra.mxu0 0.0
    %255 = vmatprep.subr.mxu0 0.0
    %256 = vmatpush1.xpose.msra.mxu0 0.0
    %257 = vmatprep.mubr.f32.mxu0 0.0
    %258 = vmatmul.mubr.f32.gmra.mrb[0].mxu0 %v189
    %v259 = vpop.f32.mrb[0].mxu0
    %v260 = vadd.f32 0.0, %v259
    %v261 = vpop.f32.mrb[0].mxu0
    %262 = vdwg.mxu0
    %v263 = vmul.f32 %v260, 0.35355338
    %v264 = vsel %vm98, %v263, -inf
    %265 = vmax.xlane.f32.xlu0 %v264
    %v266 = vpop.xlane.xlu0 %265
    %v267 = vsub.f32 %v263, %v266
    %v268 = vmul.f32 %v267, 1.442695
    %v269 = vpow.pop %v268
    %v270 = vsel %vm98, %v269, 0.0
    %271 = vadd.xlane.f32.xlu0 %v270
    %v272 = vpop.xlane.xlu0 %271
    %v273 = vrcp.pop %v272
    %v274 = vmul.f32 %v269, %v273
    %275 = vrot.lane.b32.xlu0 %v92, 112
    %v276 = vpop.permute.xlu0 %275
    %277 = vrot.lane.b32.xlu0 %v92, 80
    %v278 = vpop.permute.xlu0 %277
    %v279 = vsel %vm98, %v276, 0
    %v281 = vsel %vm98, %v278, 0
    %283 = vmatprep.subr.mxu0 0.0
    %284 = vmatpush1.xpose.msra.mxu0 %v281
    %285 = vmatprep.subr.mxu0 0.0
    %286 = vmatpush1.xpose.msra.mxu0 0.0
    %287 = vmatprep.subr.mxu0 0.0
    %288 = vmatpush1.xpose.msra.mxu0 0.0
    %289 = vmatprep.subr.mxu0 0.0
    %290 = vmatpush1.xpose.msra.mxu0 0.0
    %291 = vmatprep.subr.mxu0 0.0
    %292 = vmatpush1.xpose.msra.mxu0 0.0
    %293 = vmatprep.subr.mxu0 0.0
    %294 = vmatpush1.xpose.msra.mxu0 0.0
    %295 = vmatprep.subr.mxu0 0.0
    %296 = vmatpush1.xpose.msra.mxu0 0.0
    %297 = vmatprep.subr.mxu0 0.0
    %298 = vmatpush1.xpose.msra.mxu0 0.0
    %299 = vmatprep.subr.mxu0 0.0
    %300 = vmatpush1.xpose.msra.mxu0 0.0
    %301 = vmatprep.subr.mxu0 0.0
    %302 = vmatpush1.xpose.msra.mxu0 0.0
    %303 = vmatprep.subr.mxu0 0.0
    %304 = vmatpush1.xpose.msra.mxu0 0.0
    %305 = vmatprep.subr.mxu0 0.0
    %306 = vmatpush1.xpose.msra.mxu0 0.0
    %307 = vmatprep.subr.mxu0 0.0
    %308 = vmatpush1.xpose.msra.mxu0 0.0
    %309 = vmatprep.subr.mxu0 0.0
    %310 = vmatpush1.xpose.msra.mxu0 0.0
    %311 = vmatprep.subr.mxu0 0.0
    %312 = vmatpush1.xpose.msra.mxu0 0.0
    %313 = vmatprep.subr.mxu0 0.0
    %314 = vmatpush1.xpose.msra.mxu0 0.0
    %315 = vmatprep.subr.mxu0 0.0
    %316 = vmatpush1.xpose.msra.mxu0 0.0
    %317 = vmatprep.subr.mxu0 0.0
    %318 = vmatpush1.xpose.msra.mxu0 0.0
    %319 = vmatprep.subr.mxu0 0.0
    %320 = vmatpush1.xpose.msra.mxu0 0.0
    %321 = vmatprep.subr.mxu0 0.0
    %322 = vmatpush1.xpose.msra.mxu0 0.0
    %323 = vmatprep.subr.mxu0 0.0
    %324 = vmatpush1.xpose.msra.mxu0 0.0
    %325 = vmatprep.subr.mxu0 0.0
    %326 = vmatpush1.xpose.msra.mxu0 0.0
    %327 = vmatprep.subr.mxu0 0.0
    %328 = vmatpush1.xpose.msra.mxu0 0.0
    %329 = vmatprep.subr.mxu0 0.0
    %330 = vmatpush1.xpose.msra.mxu0 0.0
    %331 = vmatprep.subr.mxu0 0.0
    %332 = vmatpush1.xpose.msra.mxu0 0.0
    %333 = vmatprep.subr.mxu0 0.0
    %334 = vmatpush1.xpose.msra.mxu0 0.0
    %335 = vmatprep.subr.mxu0 0.0
    %336 = vmatpush1.xpose.msra.mxu0 0.0
    %337 = vmatprep.subr.mxu0 0.0
    %338 = vmatpush1.xpose.msra.mxu0 0.0
    %339 = vmatprep.subr.mxu0 0.0
    %340 = vmatpush1.xpose.msra.mxu0 0.0
    %341 = vmatprep.subr.mxu0 0.0
    %342 = vmatpush1.xpose.msra.mxu0 0.0
    %343 = vmatprep.subr.mxu0 0.0
    %344 = vmatpush1.xpose.msra.mxu0 0.0
    %345 = vmatprep.subr.mxu0 0.0
    %346 = vmatpush1.xpose.msra.mxu0 0.0
    %347 = vmatprep.mubr.f32.mxu0 0.0
    %348 = vmatmul.mubr.f32.gmra.mrb[0].mxu0 %v279
    %v349 = vpop.f32.mrb[0].mxu0
    %v350 = vadd.f32 0.0, %v349
    %v351 = vpop.f32.mrb[0].mxu0
    %352 = vdwg.mxu0
    %v353 = vmul.f32 %v350, 0.35355338
    %v354 = vsel %vm98, %v353, -inf
    %355 = vmax.xlane.f32.xlu0 %v354
    %v356 = vpop.xlane.xlu0 %355
    %v357 = vsub.f32 %v353, %v356
    %v358 = vmul.f32 %v357, 1.442695
    %v359 = vpow.pop %v358
    %v360 = vsel %vm98, %v359, 0.0
    %361 = vadd.xlane.f32.xlu0 %v360
    %v362 = vpop.xlane.xlu0 %361
    %v363 = vrcp.pop %v362
    %v364 = vmul.f32 %v359, %v363
    %365 = vrot.lane.b32.xlu0 %v92, 104
    %v366 = vpop.permute.xlu0 %365
    %367 = vrot.lane.b32.xlu0 %v92, 72
    %v368 = vpop.permute.xlu0 %367
    %v369 = vsel %vm98, %v366, 0
    %v371 = vsel %vm98, %v368, 0
    %373 = vmatprep.subr.mxu0 0.0
    %374 = vmatpush1.xpose.msra.mxu0 %v371
    %375 = vmatprep.subr.mxu0 0.0
    %376 = vmatpush1.xpose.msra.mxu0 0.0
    %377 = vmatprep.subr.mxu0 0.0
    %378 = vmatpush1.xpose.msra.mxu0 0.0
    %379 = vmatprep.subr.mxu0 0.0
    %380 = vmatpush1.xpose.msra.mxu0 0.0
    %381 = vmatprep.subr.mxu0 0.0
    %382 = vmatpush1.xpose.msra.mxu0 0.0
    %383 = vmatprep.subr.mxu0 0.0
    %384 = vmatpush1.xpose.msra.mxu0 0.0
    %385 = vmatprep.subr.mxu0 0.0
    %386 = vmatpush1.xpose.msra.mxu0 0.0
    %387 = vmatprep.subr.mxu0 0.0
    %388 = vmatpush1.xpose.msra.mxu0 0.0
    %389 = vmatprep.subr.mxu0 0.0
    %390 = vmatpush1.xpose.msra.mxu0 0.0
    %391 = vmatprep.subr.mxu0 0.0
    %392 = vmatpush1.xpose.msra.mxu0 0.0
    %393 = vmatprep.subr.mxu0 0.0
    %394 = vmatpush1.xpose.msra.mxu0 0.0
    %395 = vmatprep.subr.mxu0 0.0
    %396 = vmatpush1.xpose.msra.mxu0 0.0
    %397 = vmatprep.subr.mxu0 0.0
    %398 = vmatpush1.xpose.msra.mxu0 0.0
    %399 = vmatprep.subr.mxu0 0.0
    %400 = vmatpush1.xpose.msra.mxu0 0.0
    %401 = vmatprep.subr.mxu0 0.0
    %402 = vmatpush1.xpose.msra.mxu0 0.0
    %403 = vmatprep.subr.mxu0 0.0
    %404 = vmatpush1.xpose.msra.mxu0 0.0
    %405 = vmatprep.subr.mxu0 0.0
    %406 = vmatpush1.xpose.msra.mxu0 0.0
    %407 = vmatprep.subr.mxu0 0.0
    %408 = vmatpush1.xpose.msra.mxu0 0.0
    %409 = vmatprep.subr.mxu0 0.0
    %410 = vmatpush1.xpose.msra.mxu0 0.0
    %411 = vmatprep.subr.mxu0 0.0
    %412 = vmatpush1.xpose.msra.mxu0 0.0
    %413 = vmatprep.subr.mxu0 0.0
    %414 = vmatpush1.xpose.msra.mxu0 0.0
    %415 = vmatprep.subr.mxu0 0.0
    %416 = vmatpush1.xpose.msra.mxu0 0.0
    %417 = vmatprep.subr.mxu0 0.0
    %418 = vmatpush1.xpose.msra.mxu0 0.0
    %419 = vmatprep.subr.mxu0 0.0
    %420 = vmatpush1.xpose.msra.mxu0 0.0
    %421 = vmatprep.subr.mxu0 0.0
    %422 = vmatpush1.xpose.msra.mxu0 0.0
    %423 = vmatprep.subr.mxu0 0.0
    %424 = vmatpush1.xpose.msra.mxu0 0.0
    %425 = vmatprep.subr.mxu0 0.0
    %426 = vmatpush1.xpose.msra.mxu0 0.0
    %427 = vmatprep.subr.mxu0 0.0
    %428 = vmatpush1.xpose.msra.mxu0 0.0
    %429 = vmatprep.subr.mxu0 0.0
    %430 = vmatpush1.xpose.msra.mxu0 0.0
    %431 = vmatprep.subr.mxu0 0.0
    %432 = vmatpush1.xpose.msra.mxu0 0.0
    %433 = vmatprep.subr.mxu0 0.0
    %434 = vmatpush1.xpose.msra.mxu0 0.0
    %435 = vmatprep.subr.mxu0 0.0
    %436 = vmatpush1.xpose.msra.mxu0 0.0
    %437 = vmatprep.mubr.f32.mxu0 0.0
    %438 = vmatmul.mubr.f32.gmra.mrb[0].mxu0 %v369
    %v439 = vpop.f32.mrb[0].mxu0
    %v440 = vadd.f32 0.0, %v439
    %v441 = vpop.f32.mrb[0].mxu0
    %442 = vdwg.mxu0
    %v443 = vmul.f32 %v440, 0.35355338
    %v444 = vsel %vm98, %v443, -inf
    %445 = vmax.xlane.f32.xlu0 %v444
    %v446 = vpop.xlane.xlu0 %445
    %v447 = vsub.f32 %v443, %v446
    %v448 = vmul.f32 %v447, 1.442695
    %v449 = vpow.pop %v448
    %v450 = vsel %vm98, %v449, 0.0
    %451 = vadd.xlane.f32.xlu0 %v450
    %v452 = vpop.xlane.xlu0 %451
    %v453 = vrcp.pop %v452
    %v454 = vmul.f32 %v449, %v453
    %455 = vrot.lane.b32.xlu0 %v92, 64
    %v456 = vpop.permute.xlu0 %455
    %v459 = vsel %vm98, %v184, 0
    %461 = vmatprep.subr.mxu0 0.0
    %462 = vmatpush1.msra.mxu0 %v456
    %463 = vmatprep.subr.mxu0 0.0
    %464 = vmatpush1.msra.mxu0 0.0
    %465 = vmatprep.subr.mxu0 0.0
    %466 = vmatpush1.msra.mxu0 0.0
    %467 = vmatprep.subr.mxu0 0.0
    %468 = vmatpush1.msra.mxu0 0.0
    %469 = vmatprep.subr.mxu0 0.0
    %470 = vmatpush1.msra.mxu0 0.0
    %471 = vmatprep.subr.mxu0 0.0
    %472 = vmatpush1.msra.mxu0 0.0
    %473 = vmatprep.subr.mxu0 0.0
    %474 = vmatpush1.msra.mxu0 0.0
    %475 = vmatprep.subr.mxu0 0.0
    %476 = vmatpush1.msra.mxu0 0.0
    %477 = vmatprep.subr.mxu0 0.0
    %478 = vmatpush1.msra.mxu0 0.0
    %479 = vmatprep.subr.mxu0 0.0
    %480 = vmatpush1.msra.mxu0 0.0
    %481 = vmatprep.subr.mxu0 0.0
    %482 = vmatpush1.msra.mxu0 0.0
    %483 = vmatprep.subr.mxu0 0.0
    %484 = vmatpush1.msra.mxu0 0.0
    %485 = vmatprep.subr.mxu0 0.0
    %486 = vmatpush1.msra.mxu0 0.0
    %487 = vmatprep.subr.mxu0 0.0
    %488 = vmatpush1.msra.mxu0 0.0
    %489 = vmatprep.subr.mxu0 0.0
    %490 = vmatpush1.msra.mxu0 0.0
    %491 = vmatprep.subr.mxu0 0.0
    %492 = vmatpush1.msra.mxu0 0.0
    %493 = vmatprep.subr.mxu0 0.0
    %494 = vmatpush1.msra.mxu0 0.0
    %495 = vmatprep.subr.mxu0 0.0
    %496 = vmatpush1.msra.mxu0 0.0
    %497 = vmatprep.subr.mxu0 0.0
    %498 = vmatpush1.msra.mxu0 0.0
    %499 = vmatprep.subr.mxu0 0.0
    %500 = vmatpush1.msra.mxu0 0.0
    %501 = vmatprep.subr.mxu0 0.0
    %502 = vmatpush1.msra.mxu0 0.0
    %503 = vmatprep.subr.mxu0 0.0
    %504 = vmatpush1.msra.mxu0 0.0
    %505 = vmatprep.subr.mxu0 0.0
    %506 = vmatpush1.msra.mxu0 0.0
    %507 = vmatprep.subr.mxu0 0.0
    %508 = vmatpush1.msra.mxu0 0.0
    %509 = vmatprep.subr.mxu0 0.0
    %510 = vmatpush1.msra.mxu0 0.0
    %511 = vmatprep.subr.mxu0 0.0
    %512 = vmatpush1.msra.mxu0 0.0
    %513 = vmatprep.subr.mxu0 0.0
    %514 = vmatpush1.msra.mxu0 0.0
    %515 = vmatprep.subr.mxu0 0.0
    %516 = vmatpush1.msra.mxu0 0.0
    %517 = vmatprep.subr.mxu0 0.0
    %518 = vmatpush1.msra.mxu0 0.0
    %519 = vmatprep.subr.mxu0 0.0
    %520 = vmatpush1.msra.mxu0 0.0
    %521 = vmatprep.subr.mxu0 0.0
    %522 = vmatpush1.msra.mxu0 0.0
    %523 = vmatprep.subr.mxu0 0.0
    %524 = vmatpush1.msra.mxu0 0.0
    %525 = vmatprep.mubr.f32.mxu0 0.0
    %526 = vmatmul.mubr.f32.gmra.mrb[0].mxu0 %v459
    %v527 = vpop.f32.mrb[0].mxu0
    %v528 = vadd.f32 0.0, %v527
    %v529 = vpop.f32.mrb[0].mxu0
    %530 = vdwg.mxu0
    %531 = vst.msk [vmem:[#allocation2] sm:$0xff] %vm98, %v528
    %532 = vrot.lane.b32.xlu0 %v92, 56
    %v533 = vpop.permute.xlu0 %532
    %v536 = vsel %vm98, %v274, 0
    %538 = vmatprep.subr.mxu0 0.0
    %539 = vmatpush1.msra.mxu0 %v533
    %540 = vmatprep.subr.mxu0 0.0
    %541 = vmatpush1.msra.mxu0 0.0
    %542 = vmatprep.subr.mxu0 0.0
    %543 = vmatpush1.msra.mxu0 0.0
    %544 = vmatprep.subr.mxu0 0.0
    %545 = vmatpush1.msra.mxu0 0.0
    %546 = vmatprep.subr.mxu0 0.0
    %547 = vmatpush1.msra.mxu0 0.0
    %548 = vmatprep.subr.mxu0 0.0
    %549 = vmatpush1.msra.mxu0 0.0
    %550 = vmatprep.subr.mxu0 0.0
    %551 = vmatpush1.msra.mxu0 0.0
    %552 = vmatprep.subr.mxu0 0.0
    %553 = vmatpush1.msra.mxu0 0.0
    %554 = vmatprep.subr.mxu0 0.0
    %555 = vmatpush1.msra.mxu0 0.0
    %556 = vmatprep.subr.mxu0 0.0
    %557 = vmatpush1.msra.mxu0 0.0
    %558 = vmatprep.subr.mxu0 0.0
    %559 = vmatpush1.msra.mxu0 0.0
    %560 = vmatprep.subr.mxu0 0.0
    %561 = vmatpush1.msra.mxu0 0.0
    %562 = vmatprep.subr.mxu0 0.0
    %563 = vmatpush1.msra.mxu0 0.0
    %564 = vmatprep.subr.mxu0 0.0
    %565 = vmatpush1.msra.mxu0 0.0
    %566 = vmatprep.subr.mxu0 0.0
    %567 = vmatpush1.msra.mxu0 0.0
    %568 = vmatprep.subr.mxu0 0.0
    %569 = vmatpush1.msra.mxu0 0.0
    %570 = vmatprep.subr.mxu0 0.0
    %571 = vmatpush1.msra.mxu0 0.0
    %572 = vmatprep.subr.mxu0 0.0
    %573 = vmatpush1.msra.mxu0 0.0
    %574 = vmatprep.subr.mxu0 0.0
    %575 = vmatpush1.msra.mxu0 0.0
    %576 = vmatprep.subr.mxu0 0.0
    %577 = vmatpush1.msra.mxu0 0.0
    %578 = vmatprep.subr.mxu0 0.0
    %579 = vmatpush1.msra.mxu0 0.0
    %580 = vmatprep.subr.mxu0 0.0
    %581 = vmatpush1.msra.mxu0 0.0
    %582 = vmatprep.subr.mxu0 0.0
    %583 = vmatpush1.msra.mxu0 0.0
    %584 = vmatprep.subr.mxu0 0.0
    %585 = vmatpush1.msra.mxu0 0.0
    %586 = vmatprep.subr.mxu0 0.0
    %587 = vmatpush1.msra.mxu0 0.0
    %588 = vmatprep.subr.mxu0 0.0
    %589 = vmatpush1.msra.mxu0 0.0
    %590 = vmatprep.subr.mxu0 0.0
    %591 = vmatpush1.msra.mxu0 0.0
    %592 = vmatprep.subr.mxu0 0.0
    %593 = vmatpush1.msra.mxu0 0.0
    %594 = vmatprep.subr.mxu0 0.0
    %595 = vmatpush1.msra.mxu0 0.0
    %596 = vmatprep.subr.mxu0 0.0
    %597 = vmatpush1.msra.mxu0 0.0
    %598 = vmatprep.subr.mxu0 0.0
    %599 = vmatpush1.msra.mxu0 0.0
    %600 = vmatprep.subr.mxu0 0.0
    %601 = vmatpush1.msra.mxu0 0.0
    %602 = vmatprep.mubr.f32.mxu0 0.0
    %603 = vmatmul.mubr.f32.gmra.mrb[0].mxu0 %v536
    %v604 = vpop.f32.mrb[0].mxu0
    %v605 = vadd.f32 0.0, %v604
    %v606 = vpop.f32.mrb[0].mxu0
    %607 = vdwg.mxu0
    %609 = vrot.lane.b32.xlu0 %v605, 8
    %v610 = vpop.permute.xlu0 %609
    %vm612 = vcmask 130112
    %613 = vst.msk [vmem:[#allocation2] sm:$0xff] %vm612, %v610
    %614 = vrot.lane.b32.xlu0 %v92, 48
    %v615 = vpop.permute.xlu0 %614
    %v618 = vsel %vm98, %v364, 0
    %620 = vmatprep.subr.mxu0 0.0
    %621 = vmatpush1.msra.mxu0 %v615
    %622 = vmatprep.subr.mxu0 0.0
    %623 = vmatpush1.msra.mxu0 0.0
    %624 = vmatprep.subr.mxu0 0.0
    %625 = vmatpush1.msra.mxu0 0.0
    %626 = vmatprep.subr.mxu0 0.0
    %627 = vmatpush1.msra.mxu0 0.0
    %628 = vmatprep.subr.mxu0 0.0
    %629 = vmatpush1.msra.mxu0 0.0
    %630 = vmatprep.subr.mxu0 0.0
    %631 = vmatpush1.msra.mxu0 0.0
    %632 = vmatprep.subr.mxu0 0.0
    %633 = vmatpush1.msra.mxu0 0.0
    %634 = vmatprep.subr.mxu0 0.0
    %635 = vmatpush1.msra.mxu0 0.0
    %636 = vmatprep.subr.mxu0 0.0
    %637 = vmatpush1.msra.mxu0 0.0
    %638 = vmatprep.subr.mxu0 0.0
    %639 = vmatpush1.msra.mxu0 0.0
    %640 = vmatprep.subr.mxu0 0.0
    %641 = vmatpush1.msra.mxu0 0.0
    %642 = vmatprep.subr.mxu0 0.0
    %643 = vmatpush1.msra.mxu0 0.0
    %644 = vmatprep.subr.mxu0 0.0
    %645 = vmatpush1.msra.mxu0 0.0
    %646 = vmatprep.subr.mxu0 0.0
    %647 = vmatpush1.msra.mxu0 0.0
    %648 = vmatprep.subr.mxu0 0.0
    %649 = vmatpush1.msra.mxu0 0.0
    %650 = vmatprep.subr.mxu0 0.0
    %651 = vmatpush1.msra.mxu0 0.0
    %652 = vmatprep.subr.mxu0 0.0
    %653 = vmatpush1.msra.mxu0 0.0
    %654 = vmatprep.subr.mxu0 0.0
    %655 = vmatpush1.msra.mxu0 0.0
    %656 = vmatprep.subr.mxu0 0.0
    %657 = vmatpush1.msra.mxu0 0.0
    %658 = vmatprep.subr.mxu0 0.0
    %659 = vmatpush1.msra.mxu0 0.0
    %660 = vmatprep.subr.mxu0 0.0
    %661 = vmatpush1.msra.mxu0 0.0
    %662 = vmatprep.subr.mxu0 0.0
    %663 = vmatpush1.msra.mxu0 0.0
    %664 = vmatprep.subr.mxu0 0.0
    %665 = vmatpush1.msra.mxu0 0.0
    %666 = vmatprep.subr.mxu0 0.0
    %667 = vmatpush1.msra.mxu0 0.0
    %668 = vmatprep.subr.mxu0 0.0
    %669 = vmatpush1.msra.mxu0 0.0
    %670 = vmatprep.subr.mxu0 0.0
    %671 = vmatpush1.msra.mxu0 0.0
    %672 = vmatprep.subr.mxu0 0.0
    %673 = vmatpush1.msra.mxu0 0.0
    %674 = vmatprep.subr.mxu0 0.0
    %675 = vmatpush1.msra.mxu0 0.0
    %676 = vmatprep.subr.mxu0 0.0
    %677 = vmatpush1.msra.mxu0 0.0
    %678 = vmatprep.subr.mxu0 0.0
    %679 = vmatpush1.msra.mxu0 0.0
    %680 = vmatprep.subr.mxu0 0.0
    %681 = vmatpush1.msra.mxu0 0.0
    %682 = vmatprep.subr.mxu0 0.0
    %683 = vmatpush1.msra.mxu0 0.0
    %684 = vmatprep.mubr.f32.mxu0 0.0
    %685 = vmatmul.mubr.f32.gmra.mrb[0].mxu0 %v618
    %v686 = vpop.f32.mrb[0].mxu0
    %v687 = vadd.f32 0.0, %v686
    %v688 = vpop.f32.mrb[0].mxu0
    %689 = vdwg.mxu0
    %691 = vrot.lane.b32.xlu0 %v687, 16
    %v692 = vpop.permute.xlu0 %691
    %vm694 = vcmask 195712
    %695 = vst.msk [vmem:[#allocation2] sm:$0xff] %vm694, %v692
    %696 = vrot.lane.b32.xlu0 %v92, 40
    %v697 = vpop.permute.xlu0 %696
    %v700 = vsel %vm98, %v454, 0
    %702 = vmatprep.subr.mxu0 0.0
    %703 = vmatpush1.msra.mxu0 %v697
    %704 = vmatprep.subr.mxu0 0.0
    %705 = vmatpush1.msra.mxu0 0.0
    %706 = vmatprep.subr.mxu0 0.0
    %707 = vmatpush1.msra.mxu0 0.0
    %708 = vmatprep.subr.mxu0 0.0
    %709 = vmatpush1.msra.mxu0 0.0
    %710 = vmatprep.subr.mxu0 0.0
    %711 = vmatpush1.msra.mxu0 0.0
    %712 = vmatprep.subr.mxu0 0.0
    %713 = vmatpush1.msra.mxu0 0.0
    %714 = vmatprep.subr.mxu0 0.0
    %715 = vmatpush1.msra.mxu0 0.0
    %716 = vmatprep.subr.mxu0 0.0
    %717 = vmatpush1.msra.mxu0 0.0
    %718 = vmatprep.subr.mxu0 0.0
    %719 = vmatpush1.msra.mxu0 0.0
    %720 = vmatprep.subr.mxu0 0.0
    %721 = vmatpush1.msra.mxu0 0.0
    %722 = vmatprep.subr.mxu0 0.0
    %723 = vmatpush1.msra.mxu0 0.0
    %724 = vmatprep.subr.mxu0 0.0
    %725 = vmatpush1.msra.mxu0 0.0
    %726 = vmatprep.subr.mxu0 0.0
    %727 = vmatpush1.msra.mxu0 0.0
    %728 = vmatprep.subr.mxu0 0.0
    %729 = vmatpush1.msra.mxu0 0.0
    %730 = vmatprep.subr.mxu0 0.0
    %731 = vmatpush1.msra.mxu0 0.0
    %732 = vmatprep.subr.mxu0 0.0
    %733 = vmatpush1.msra.mxu0 0.0
    %734 = vmatprep.subr.mxu0 0.0
    %735 = vmatpush1.msra.mxu0 0.0
    %736 = vmatprep.subr.mxu0 0.0
    %737 = vmatpush1.msra.mxu0 0.0
    %738 = vmatprep.subr.mxu0 0.0
    %739 = vmatpush1.msra.mxu0 0.0
    %740 = vmatprep.subr.mxu0 0.0
    %741 = vmatpush1.msra.mxu0 0.0
    %742 = vmatprep.subr.mxu0 0.0
    %743 = vmatpush1.msra.mxu0 0.0
    %744 = vmatprep.subr.mxu0 0.0
    %745 = vmatpush1.msra.mxu0 0.0
    %746 = vmatprep.subr.mxu0 0.0
    %747 = vmatpush1.msra.mxu0 0.0
    %748 = vmatprep.subr.mxu0 0.0
    %749 = vmatpush1.msra.mxu0 0.0
    %750 = vmatprep.subr.mxu0 0.0
    %751 = vmatpush1.msra.mxu0 0.0
    %752 = vmatprep.subr.mxu0 0.0
    %753 = vmatpush1.msra.mxu0 0.0
    %754 = vmatprep.subr.mxu0 0.0
    %755 = vmatpush1.msra.mxu0 0.0
    %756 = vmatprep.subr.mxu0 0.0
    %757 = vmatpush1.msra.mxu0 0.0
    %758 = vmatprep.subr.mxu0 0.0
    %759 = vmatpush1.msra.mxu0 0.0
    %760 = vmatprep.subr.mxu0 0.0
    %761 = vmatpush1.msra.mxu0 0.0
    %762 = vmatprep.subr.mxu0 0.0
    %763 = vmatpush1.msra.mxu0 0.0
    %764 = vmatprep.subr.mxu0 0.0
    %765 = vmatpush1.msra.mxu0 0.0
    %766 = vmatprep.mubr.f32.mxu0 0.0
    %767 = vmatmul.mubr.f32.gmra.mrb[0].mxu0 %v700
    %v768 = vpop.f32.mrb[0].mxu0
    %v769 = vadd.f32 0.0, %v768
    %v770 = vpop.f32.mrb[0].mxu0
    %771 = vdwg.mxu0
    %773 = vrot.lane.b32.xlu0 %v769, 24
    %v774 = vpop.permute.xlu0 %773
    %vm776 = vcmask 261312
    %777 = vst.msk [vmem:[#allocation2] sm:$0xff] %vm776, %v774
    %v778 = vld [vmem:[#allocation2] sm:$0xff]
    %v779 = vadd.f32 %v778, %v15
    %v780 = vsel %vm21, %v779, 0.0
    %781 = vadd.xlane.f32.xlu0 %v780
    %v782 = vpop.xlane.xlu0 %781
    %v783 = vrcp.pop 32.0
    %v784 = vmul.f32 %v782, %v783
    %v785 = vmul.f32 %v779, %v779
    %v786 = vsel %vm21, %v785, 0.0
    %787 = vadd.xlane.f32.xlu0 %v786
    %v788 = vpop.xlane.xlu0 %787
    %v789 = vmul.f32 %v788, %v783
    %v790 = vmul.f32 %v784, %v784
    %v791 = vsub.f32 %v789, %v790
    %v792 = vsub.f32 %v779, %v784
    %v793 = vadd.f32 %v791, 1e-05
    %v794 = vrsqrt.pop %v793
    %v795 = vmul.f32 %v792, %v794
    %v796 = vld [vmem:[%s1 + $0x10] sm:$0xff]
    %v797 = vld [vmem:[%s1 + $0x28] sm:$0xff]
    %v798 = vld [vmem:[%s1 + $0x40] sm:$0xff]
    %v799 = vld [vmem:[%s1 + $0x58] sm:$0xff]
    %v800 = vld [vmem:[%s1 + $0x70] ss:$0 sm:$0xff]
    %v802 = vsel %vm21, %v795, 0
    %804 = vmatprep.subr.mxu0 0.0
    %805 = vmatpush1.msra.mxu0 %v796
    %806 = vmatprep.subr.mxu0 0.0
    %807 = vmatpush1.msra.mxu0 %v797
    %808 = vmatprep.subr.mxu0 0.0
    %809 = vmatpush1.msra.mxu0 %v798
    %810 = vmatprep.subr.mxu0 0.0
    %811 = vmatpush1.msra.mxu0 %v799
    %812 = vmatprep.subr.mxu0 0.0
    %813 = vmatpush1.msra.mxu0 0.0
    %814 = vmatprep.subr.mxu0 0.0
    %815 = vmatpush1.msra.mxu0 0.0
    %816 = vmatprep.subr.mxu0 0.0
    %817 = vmatpush1.msra.mxu0 0.0
    %818 = vmatprep.subr.mxu0 0.0
    %819 = vmatpush1.msra.mxu0 0.0
    %820 = vmatprep.subr.mxu0 0.0
    %821 = vmatpush1.msra.mxu0 0.0
    %822 = vmatprep.subr.mxu0 0.0
    %823 = vmatpush1.msra.mxu0 0.0
    %824 = vmatprep.subr.mxu0 0.0
    %825 = vmatpush1.msra.mxu0 0.0
    %826 = vmatprep.subr.mxu0 0.0
    %827 = vmatpush1.msra.mxu0 0.0
    %828 = vmatprep.subr.mxu0 0.0
    %829 = vmatpush1.msra.mxu0 0.0
    %830 = vmatprep.subr.mxu0 0.0
    %831 = vmatpush1.msra.mxu0 0.0
    %832 = vmatprep.subr.mxu0 0.0
    %833 = vmatpush1.msra.mxu0 0.0
    %834 = vmatprep.subr.mxu0 0.0
    %835 = vmatpush1.msra.mxu0 0.0
    %836 = vmatprep.subr.mxu0 0.0
    %837 = vmatpush1.msra.mxu0 0.0
    %838 = vmatprep.subr.mxu0 0.0
    %839 = vmatpush1.msra.mxu0 0.0
    %840 = vmatprep.subr.mxu0 0.0
    %841 = vmatpush1.msra.mxu0 0.0
    %842 = vmatprep.subr.mxu0 0.0
    %843 = vmatpush1.msra.mxu0 0.0
    %844 = vmatprep.subr.mxu0 0.0
    %845 = vmatpush1.msra.mxu0 0.0
    %846 = vmatprep.subr.mxu0 0.0
    %847 = vmatpush1.msra.mxu0 0.0
    %848 = vmatprep.subr.mxu0 0.0
    %849 = vmatpush1.msra.mxu0 0.0
    %850 = vmatprep.subr.mxu0 0.0
    %851 = vmatpush1.msra.mxu0 0.0
    %852 = vmatprep.subr.mxu0 0.0
    %853 = vmatpush1.msra.mxu0 0.0
    %854 = vmatprep.subr.mxu0 0.0
    %855 = vmatpush1.msra.mxu0 0.0
    %856 = vmatprep.subr.mxu0 0.0
    %857 = vmatpush1.msra.mxu0 0.0
    %858 = vmatprep.subr.mxu0 0.0
    %859 = vmatpush1.msra.mxu0 0.0
    %860 = vmatprep.subr.mxu0 0.0
    %861 = vmatpush1.msra.mxu0 0.0
    %862 = vmatprep.subr.mxu0 0.0
    %863 = vmatpush1.msra.mxu0 0.0
    %864 = vmatprep.subr.mxu0 0.0
    %865 = vmatpush1.msra.mxu0 0.0
    %866 = vmatprep.subr.mxu0 0.0
    %867 = vmatpush1.msra.mxu0 0.0
    %868 = vmatprep.mubr.f32.mxu0 0.0
    %869 = vmatmul.mubr.f32.gmra.mrb[0].mxu0 %v802
    %v870 = vpop.f32.mrb[0].mxu0
    %v871 = vadd.f32 %v800, %v870
    %v872 = vpop.f32.mrb[0].mxu0
    %873 = vdwg.mxu0
    %v874 = vmax.f32 %v871, 0.0
    %v875 = vld [vmem:[%s2] sm:$0xff]
    %v876 = vld [vmem:[%s2 + $0x8] sm:$0xff]
    %v877 = vld [vmem:[%s2 + $0x10] sm:$0xff]
    %v878 = vld [vmem:[%s2 + $0x18] sm:$0xff]
    %v879 = vld [vmem:[%s2 + $0x20] sm:$0xff]
    %v880 = vld [vmem:[%s2 + $0x28] sm:$0xff]
    %v881 = vld [vmem:[%s2 + $0x30] sm:$0xff]
    %v882 = vld [vmem:[%s2 + $0x38] sm:$0xff]
    %v883 = vld [vmem:[%s2 + $0x40] sm:$0x1]
    %v884 = vlaneseq
    %v885 = vshrl.u32 %v884, 7
    %v886 = vsub.s32 0, %v885
    %v887 = vrot.slane %v883, %v886
    %vm888 = vcmask 523264
    %v890 = vsel %vm888, %v874, 0
    %892 = vmatprep.subr.mxu0 0.0
    %893 = vmatpush1.msra.mxu0 %v875
    %894 = vmatprep.subr.mxu0 0.0
    %895 = vmatpush1.msra.mxu0 %v876
    %896 = vmatprep.subr.mxu0 0.0
    %897 = vmatpush1.msra.mxu0 %v877
    %898 = vmatprep.subr.mxu0 0.0
    %899 = vmatpush1.msra.mxu0 %v878
    %900 = vmatprep.subr.mxu0 0.0
    %901 = vmatpush1.msra.mxu0 %v879
    %902 = vmatprep.subr.mxu0 0.0
    %903 = vmatpush1.msra.mxu0 %v880
    %904 = vmatprep.subr.mxu0 0.0
    %905 = vmatpush1.msra.mxu0 %v881
    %906 = vmatprep.subr.mxu0 0.0
    %907 = vmatpush1.msra.mxu0 %v882
    %908 = vmatprep.subr.mxu0 0.0
    %909 = vmatpush1.msra.mxu0 0.0
    %910 = vmatprep.subr.mxu0 0.0
    %911 = vmatpush1.msra.mxu0 0.0
    %912 = vmatprep.subr.mxu0 0.0
    %913 = vmatpush1.msra.mxu0 0.0
    %914 = vmatprep.subr.mxu0 0.0
    %915 = vmatpush1.msra.mxu0 0.0
    %916 = vmatprep.subr.mxu0 0.0
    %917 = vmatpush1.msra.mxu0 0.0
    %918 = vmatprep.subr.mxu0 0.0
    %919 = vmatpush1.msra.mxu0 0.0
    %920 = vmatprep.subr.mxu0 0.0
    %921 = vmatpush1.msra.mxu0 0.0
    %922 = vmatprep.subr.mxu0 0.0
    %923 = vmatpush1.msra.mxu0 0.0
    %924 = vmatprep.subr.mxu0 0.0
    %925 = vmatpush1.msra.mxu0 0.0
    %926 = vmatprep.subr.mxu0 0.0
    %927 = vmatpush1.msra.mxu0 0.0
    %928 = vmatprep.subr.mxu0 0.0
    %929 = vmatpush1.msra.mxu0 0.0
    %930 = vmatprep.subr.mxu0 0.0
    %931 = vmatpush1.msra.mxu0 0.0
    %932 = vmatprep.subr.mxu0 0.0
    %933 = vmatpush1.msra.mxu0 0.0
    %934 = vmatprep.subr.mxu0 0.0
    %935 = vmatpush1.msra.mxu0 0.0
    %936 = vmatprep.subr.mxu0 0.0
    %937 = vmatpush1.msra.mxu0 0.0
    %938 = vmatprep.subr.mxu0 0.0
    %939 = vmatpush1.msra.mxu0 0.0
    %940 = vmatprep.subr.mxu0 0.0
    %941 = vmatpush1.msra.mxu0 0.0
    %942 = vmatprep.subr.mxu0 0.0
    %943 = vmatpush1.msra.mxu0 0.0
    %944 = vmatprep.subr.mxu0 0.0
    %945 = vmatpush1.msra.mxu0 0.0
    %946 = vmatprep.subr.mxu0 0.0
    %947 = vmatpush1.msra.mxu0 0.0
    %948 = vmatprep.subr.mxu0 0.0
    %949 = vmatpush1.msra.mxu0 0.0
    %950 = vmatprep.subr.mxu0 0.0
    %951 = vmatpush1.msra.mxu0 0.0
    %952 = vmatprep.subr.mxu0 0.0
    %953 = vmatpush1.msra.mxu0 0.0
    %954 = vmatprep.subr.mxu0 0.0
    %955 = vmatpush1.msra.mxu0 0.0
    %956 = vmatprep.mubr.f32.mxu0 0.0
    %957 = vmatmul.mubr.f32.gmra.mrb[0].mxu0 %v890
    %v958 = vpop.f32.mrb[0].mxu0
    %v959 = vadd.f32 %v887, %v958
    %v960 = vpop.f32.mrb[0].mxu0
    %961 = vdwg.mxu0
    %v962 = vadd.f32 %v959, %v795
    %v963 = vsel %vm21, %v962, 0.0
    %964 = vadd.xlane.f32.xlu0 %v963
    %v965 = vpop.xlane.xlu0 %964
    %v966 = vmul.f32 %v965, %v783
    %v967 = vmul.f32 %v962, %v962
    %v968 = vsel %vm21, %v967, 0.0
    %969 = vadd.xlane.f32.xlu0 %v968
    %v970 = vpop.xlane.xlu0 %969
    %v971 = vmul.f32 %v970, %v783
    %v972 = vmul.f32 %v966, %v966
    %v973 = vsub.f32 %v971, %v972
    %v974 = vsub.f32 %v962, %v966
    %v975 = vadd.f32 %v973, 1e-05
    %v976 = vrsqrt.pop %v975
    %v977 = vmul.f32 %v974, %v976
    %v978 = vld [vmem:[%s1] sm:$0xff]
    %v979 = vld [vmem:[%s1 + $0x18] sm:$0xff]
    %v980 = vld [vmem:[%s1 + $0x30] sm:$0xff]
    %v981 = vld [vmem:[%s1 + $0x48] sm:$0xff]
    %v982 = vld [vmem:[%s1 + $0x60] ss:$0 sm:$0xff]
    %v984 = vsel %vm21, %v977, 0
    %986 = vmatprep.subr.mxu0 0.0
    %987 = vmatpush1.msra.mxu0 %v978
    %988 = vmatprep.subr.mxu0 0.0
    %989 = vmatpush1.msra.mxu0 %v979
    %990 = vmatprep.subr.mxu0 0.0
    %991 = vmatpush1.msra.mxu0 %v980
    %992 = vmatprep.subr.mxu0 0.0
    %993 = vmatpush1.msra.mxu0 %v981
    %994 = vmatprep.subr.mxu0 0.0
    %995 = vmatpush1.msra.mxu0 0.0
    %996 = vmatprep.subr.mxu0 0.0
    %997 = vmatpush1.msra.mxu0 0.0
    %998 = vmatprep.subr.mxu0 0.0
    %999 = vmatpush1.msra.mxu0 0.0
    %1000 = vmatprep.subr.mxu0 0.0
    %1001 = vmatpush1.msra.mxu0 0.0
    %1002 = vmatprep.subr.mxu0 0.0
    %1003 = vmatpush1.msra.mxu0 0.0
    %1004 = vmatprep.subr.mxu0 0.0
    %1005 = vmatpush1.msra.mxu0 0.0
    %1006 = vmatprep.subr.mxu0 0.0
    %1007 = vmatpush1.msra.mxu0 0.0
    %1008 = vmatprep.subr.mxu0 0.0
    %1009 = vmatpush1.msra.mxu0 0.0
    %1010 = vmatprep.subr.mxu0 0.0
    %1011 = vmatpush1.msra.mxu0 0.0
    %1012 = vmatprep.subr.mxu0 0.0
    %1013 = vmatpush1.msra.mxu0 0.0
    %1014 = vmatprep.subr.mxu0 0.0
    %1015 = vmatpush1.msra.mxu0 0.0
    %1016 = vmatprep.subr.mxu0 0.0
    %1017 = vmatpush1.msra.mxu0 0.0
    %1018 = vmatprep.subr.mxu0 0.0
    %1019 = vmatpush1.msra.mxu0 0.0
    %1020 = vmatprep.subr.mxu0 0.0
    %1021 = vmatpush1.msra.mxu0 0.0
    %1022 = vmatprep.subr.mxu0 0.0
    %1023 = vmatpush1.msra.mxu0 0.0
    %1024 = vmatprep.subr.mxu0 0.0
    %1025 = vmatpush1.msra.mxu0 0.0
    %1026 = vmatprep.subr.mxu0 0.0
    %1027 = vmatpush1.msra.mxu0 0.0
    %1028 = vmatprep.subr.mxu0 0.0
    %1029 = vmatpush1.msra.mxu0 0.0
    %1030 = vmatprep.subr.mxu0 0.0
    %1031 = vmatpush1.msra.mxu0 0.0
    %1032 = vmatprep.subr.mxu0 0.0
    %1033 = vmatpush1.msra.mxu0 0.0
    %1034 = vmatprep.subr.mxu0 0.0
    %1035 = vmatpush1.msra.mxu0 0.0
    %1036 = vmatprep.subr.mxu0 0.0
    %1037 = vmatpush1.msra.mxu0 0.0
    %1038 = vmatprep.subr.mxu0 0.0
    %1039 = vmatpush1.msra.mxu0 0.0
    %1040 = vmatprep.subr.mxu0 0.0
    %1041 = vmatpush1.msra.mxu0 0.0
    %1042 = vmatprep.subr.mxu0 0.0
    %1043 = vmatpush1.msra.mxu0 0.0
    %1044 = vmatprep.subr.mxu0 0.0
    %1045 = vmatpush1.msra.mxu0 0.0
    %1046 = vmatprep.subr.mxu0 0.0
    %1047 = vmatpush1.msra.mxu0 0.0
    %1048 = vmatprep.subr.mxu0 0.0
    %1049 = vmatpush1.msra.mxu0 0.0
    %1050 = vmatprep.mubr.f32.mxu0 0.0
    %1051 = vmatmul.mubr.f32.gmra.mrb[0].mxu0 %v984
    %v1052 = vpop.f32.mrb[0].mxu0
    %v1053 = vadd.f32 %v982, %v1052
    %v1054 = vpop.f32.mrb[0].mxu0
    %1055 = vdwg.mxu0
    %1057 = vrot.lane.b32.xlu0 %v1053, 96
    %v1058 = vpop.permute.xlu0 %1057
    %v1059 = vsel %vm98, %v1053, 0
    %v1061 = vsel %vm98, %v1058, 0
    %1063 = vmatprep.subr.mxu0 0.0
    %1064 = vmatpush1.xpose.msra.mxu0 %v1061
    %1065 = vmatprep.subr.mxu0 0.0
    %1066 = vmatpush1.xpose.msra.mxu0 0.0
    %1067 = vmatprep.subr.mxu0 0.0
    %1068 = vmatpush1.xpose.msra.mxu0 0.0
    %1069 = vmatprep.subr.mxu0 0.0
    %1070 = vmatpush1.xpose.msra.mxu0 0.0
    %1071 = vmatprep.subr.mxu0 0.0
    %1072 = vmatpush1.xpose.msra.mxu0 0.0
    %1073 = vmatprep.subr.mxu0 0.0
    %1074 = vmatpush1.xpose.msra.mxu0 0.0
    %1075 = vmatprep.subr.mxu0 0.0
    %1076 = vmatpush1.xpose.msra.mxu0 0.0
    %1077 = vmatprep.subr.mxu0 0.0
    %1078 = vmatpush1.xpose.msra.mxu0 0.0
    %1079 = vmatprep.subr.mxu0 0.0
    %1080 = vmatpush1.xpose.msra.mxu0 0.0
    %1081 = vmatprep.subr.mxu0 0.0
    %1082 = vmatpush1.xpose.msra.mxu0 0.0
    %1083 = vmatprep.subr.mxu0 0.0
    %1084 = vmatpush1.xpose.msra.mxu0 0.0
    %1085 = vmatprep.subr.mxu0 0.0
    %1086 = vmatpush1.xpose.msra.mxu0 0.0
    %1087 = vmatprep.subr.mxu0 0.0
    %1088 = vmatpush1.xpose.msra.mxu0 0.0
    %1089 = vmatprep.subr.mxu0 0.0
    %1090 = vmatpush1.xpose.msra.mxu0 0.0
    %1091 = vmatprep.subr.mxu0 0.0
    %1092 = vmatpush1.xpose.msra.mxu0 0.0
    %1093 = vmatprep.subr.mxu0 0.0
    %1094 = vmatpush1.xpose.msra.mxu0 0.0
    %1095 = vmatprep.subr.mxu0 0.0
    %1096 = vmatpush1.xpose.msra.mxu0 0.0
    %1097 = vmatprep.subr.mxu0 0.0
    %1098 = vmatpush1.xpose.msra.mxu0 0.0
    %1099 = vmatprep.subr.mxu0 0.0
    %1100 = vmatpush1.xpose.msra.mxu0 0.0
    %1101 = vmatprep.subr.mxu0 0.0
    %1102 = vmatpush1.xpose.msra.mxu0 0.0
    %1103 = vmatprep.subr.mxu0 0.0
    %1104 = vmatpush1.xpose.msra.mxu0 0.0
    %1105 = vmatprep.subr.mxu0 0.0
    %1106 = vmatpush1.xpose.msra.mxu0 0.0
    %1107 = vmatprep.subr.mxu0 0.0
    %1108 = vmatpush1.xpose.msra.mxu0 0.0
    %1109 = vmatprep.subr.mxu0 0.0
    %1110 = vmatpush1.xpose.msra.mxu0 0.0
    %1111 = vmatprep.subr.mxu0 0.0
    %1112 = vmatpush1.xpose.msra.mxu0 0.0
    %1113 = vmatprep.subr.mxu0 0.0
    %1114 = vmatpush1.xpose.msra.mxu0 0.0
    %1115 = vmatprep.subr.mxu0 0.0
    %1116 = vmatpush1.xpose.msra.mxu0 0.0
    %1117 = vmatprep.subr.mxu0 0.0
    %1118 = vmatpush1.xpose.msra.mxu0 0.0
    %1119 = vmatprep.subr.mxu0 0.0
    %1120 = vmatpush1.xpose.msra.mxu0 0.0
    %1121 = vmatprep.subr.mxu0 0.0
    %1122 = vmatpush1.xpose.msra.mxu0 0.0
    %1123 = vmatprep.subr.mxu0 0.0
    %1124 = vmatpush1.xpose.msra.mxu0 0.0
    %1125 = vmatprep.subr.mxu0 0.0
    %1126 = vmatpush1.xpose.msra.mxu0 0.0
    %1127 = vmatprep.mubr.f32.mxu0 0.0
    %1128 = vmatmul.mubr.f32.gmra.mrb[0].mxu0 %v1059
    %v1129 = vpop.f32.mrb[0].mxu0
    %v1130 = vadd.f32 0.0, %v1129
    %v1131 = vpop.f32.mrb[0].mxu0
    %1132 = vdwg.mxu0
    %v1133 = vmul.f32 %v1130, 0.35355338
    %v1134 = vsel %vm98, %v1133, -inf
    %1135 = vmax.xlane.f32.xlu0 %v1134
    %v1136 = vpop.xlane.xlu0 %1135
    %v1137 = vsub.f32 %v1133, %v1136
    %v1138 = vmul.f32 %v1137, 1.442695
    %v1139 = vpow.pop %v1138
    %v1140 = vsel %vm98, %v1139, 0.0
    %1141 = vadd.xlane.f32.xlu0 %v1140
    %v1142 = vpop.xlane.xlu0 %1141
    %v1143 = vrcp.pop %v1142
    %v1144 = vmul.f32 %v1139, %v1143
    %1145 = vrot.lane.b32.xlu0 %v1053, 120
    %v1146 = vpop.permute.xlu0 %1145
    %1147 = vrot.lane.b32.xlu0 %v1053, 88
    %v1148 = vpop.permute.xlu0 %1147
    %v1149 = vsel %vm98, %v1146, 0
    %v1151 = vsel %vm98, %v1148, 0
    %1153 = vmatprep.subr.mxu0 0.0
    %1154 = vmatpush1.xpose.msra.mxu0 %v1151
    %1155 = vmatprep.subr.mxu0 0.0
    %1156 = vmatpush1.xpose.msra.mxu0 0.0
    %1157 = vmatprep.subr.mxu0 0.0
    %1158 = vmatpush1.xpose.msra.mxu0 0.0
    %1159 = vmatprep.subr.mxu0 0.0
    %1160 = vmatpush1.xpose.msra.mxu0 0.0
    %1161 = vmatprep.subr.mxu0 0.0
    %1162 = vmatpush1.xpose.msra.mxu0 0.0
    %1163 = vmatprep.subr.mxu0 0.0
    %1164 = vmatpush1.xpose.msra.mxu0 0.0
    %1165 = vmatprep.subr.mxu0 0.0
    %1166 = vmatpush1.xpose.msra.mxu0 0.0
    %1167 = vmatprep.subr.mxu0 0.0
    %1168 = vmatpush1.xpose.msra.mxu0 0.0
    %1169 = vmatprep.subr.mxu0 0.0
    %1170 = vmatpush1.xpose.msra.mxu0 0.0
    %1171 = vmatprep.subr.mxu0 0.0
    %1172 = vmatpush1.xpose.msra.mxu0 0.0
    %1173 = vmatprep.subr.mxu0 0.0
    %1174 = vmatpush1.xpose.msra.mxu0 0.0
    %1175 = vmatprep.subr.mxu0 0.0
    %1176 = vmatpush1.xpose.msra.mxu0 0.0
    %1177 = vmatprep.subr.mxu0 0.0
    %1178 = vmatpush1.xpose.msra.mxu0 0.0
    %1179 = vmatprep.subr.mxu0 0.0
    %1180 = vmatpush1.xpose.msra.mxu0 0.0
    %1181 = vmatprep.subr.mxu0 0.0
    %1182 = vmatpush1.xpose.msra.mxu0 0.0
    %1183 = vmatprep.subr.mxu0 0.0
    %1184 = vmatpush1.xpose.msra.mxu0 0.0
    %1185 = vmatprep.subr.mxu0 0.0
    %1186 = vmatpush1.xpose.msra.mxu0 0.0
    %1187 = vmatprep.subr.mxu0 0.0
    %1188 = vmatpush1.xpose.msra.mxu0 0.0
    %1189 = vmatprep.subr.mxu0 0.0
    %1190 = vmatpush1.xpose.msra.mxu0 0.0
    %1191 = vmatprep.subr.mxu0 0.0
    %1192 = vmatpush1.xpose.msra.mxu0 0.0
    %1193 = vmatprep.subr.mxu0 0.0
    %1194 = vmatpush1.xpose.msra.mxu0 0.0
    %1195 = vmatprep.subr.mxu0 0.0
    %1196 = vmatpush1.xpose.msra.mxu0 0.0
    %1197 = vmatprep.subr.mxu0 0.0
    %1198 = vmatpush1.xpose.msra.mxu0 0.0
    %1199 = vmatprep.subr.mxu0 0.0
    %1200 = vmatpush1.xpose.msra.mxu0 0.0
    %1201 = vmatprep.subr.mxu0 0.0
    %1202 = vmatpush1.xpose.msra.mxu0 0.0
    %1203 = vmatprep.subr.mxu0 0.0
    %1204 = vmatpush1.xpose.msra.mxu0 0.0
    %1205 = vmatprep.subr.mxu0 0.0
    %1206 = vmatpush1.xpose.msra.mxu0 0.0
    %1207 = vmatprep.subr.mxu0 0.0
    %1208 = vmatpush1.xpose.msra.mxu0 0.0
    %1209 = vmatprep.subr.mxu0 0.0
    %1210 = vmatpush1.xpose.msra.mxu0 0.0
    %1211 = vmatprep.subr.mxu0 0.0
    %1212 = vmatpush1.xpose.msra.mxu0 0.0
    %1213 = vmatprep.subr.mxu0 0.0
    %1214 = vmatpush1.xpose.msra.mxu0 0.0
    %1215 = vmatprep.subr.mxu0 0.0
    %1216 = vmatpush1.xpose.msra.mxu0 0.0
    %1217 = vmatprep.mubr.f32.mxu0 0.0
    %1218 = vmatmul.mubr.f32.gmra.mrb[0].mxu0 %v1149
    %v1219 = vpop.f32.mrb[0].mxu0
    %v1220 = vadd.f32 0.0, %v1219
    %v1221 = vpop.f32.mrb[0].mxu0
    %1222 = vdwg.mxu0
    %v1223 = vmul.f32 %v1220, 0.35355338
    %v1224 = vsel %vm98, %v1223, -inf
    %1225 = vmax.xlane.f32.xlu0 %v1224
    %v1226 = vpop.xlane.xlu0 %1225
    %v1227 = vsub.f32 %v1223, %v1226
    %v1228 = vmul.f32 %v1227, 1.442695
    %v1229 = vpow.pop %v1228
    %v1230 = vsel %vm98, %v1229, 0.0
    %1231 = vadd.xlane.f32.xlu0 %v1230
    %v1232 = vpop.xlane.xlu0 %1231
    %v1233 = vrcp.pop %v1232
    %v1234 = vmul.f32 %v1229, %v1233
    %1235 = vrot.lane.b32.xlu0 %v1053, 112
    %v1236 = vpop.permute.xlu0 %1235
    %1237 = vrot.lane.b32.xlu0 %v1053, 80
    %v1238 = vpop.permute.xlu0 %1237
    %v1239 = vsel %vm98, %v1236, 0
    %v1241 = vsel %vm98, %v1238, 0
    %1243 = vmatprep.subr.mxu0 0.0
    %1244 = vmatpush1.xpose.msra.mxu0 %v1241
    %1245 = vmatprep.subr.mxu0 0.0
    %1246 = vmatpush1.xpose.msra.mxu0 0.0
    %1247 = vmatprep.subr.mxu0 0.0
    %1248 = vmatpush1.xpose.msra.mxu0 0.0
    %1249 = vmatprep.subr.mxu0 0.0
    %1250 = vmatpush1.xpose.msra.mxu0 0.0
    %1251 = vmatprep.subr.mxu0 0.0
    %1252 = vmatpush1.xpose.msra.mxu0 0.0
    %1253 = vmatprep.subr.mxu0 0.0
    %1254 = vmatpush1.xpose.msra.mxu0 0.0
    %1255 = vmatprep.subr.mxu0 0.0
    %1256 = vmatpush1.xpose.msra.mxu0 0.0
    %1257 = vmatprep.subr.mxu0 0.0
    %1258 = vmatpush1.xpose.msra.mxu0 0.0
    %1259 = vmatprep.subr.mxu0 0.0
    %1260 = vmatpush1.xpose.msra.mxu0 0.0
    %1261 = vmatprep.subr.mxu0 0.0
    %1262 = vmatpush1.xpose.msra.mxu0 0.0
    %1263 = vmatprep.subr.mxu0 0.0
    %1264 = vmatpush1.xpose.msra.mxu0 0.0
    %1265 = vmatprep.subr.mxu0 0.0
    %1266 = vmatpush1.xpose.msra.mxu0 0.0
    %1267 = vmatprep.subr.mxu0 0.0
    %1268 = vmatpush1.xpose.msra.mxu0 0.0
    %1269 = vmatprep.subr.mxu0 0.0
    %1270 = vmatpush1.xpose.msra.mxu0 0.0
    %1271 = vmatprep.subr.mxu0 0.0
    %1272 = vmatpush1.xpose.msra.mxu0 0.0
    %1273 = vmatprep.subr.mxu0 0.0
    %1274 = vmatpush1.xpose.msra.mxu0 0.0
    %1275 = vmatprep.subr.mxu0 0.0
    %1276 = vmatpush1.xpose.msra.mxu0 0.0
    %1277 = vmatprep.subr.mxu0 0.0
    %1278 = vmatpush1.xpose.msra.mxu0 0.0
    %1279 = vmatprep.subr.mxu0 0.0
    %1280 = vmatpush1.xpose.msra.mxu0 0.0
    %1281 = vmatprep.subr.mxu0 0.0
    %1282 = vmatpush1.xpose.msra.mxu0 0.0
    %1283 = vmatprep.subr.mxu0 0.0
    %1284 = vmatpush1.xpose.msra.mxu0 0.0
    %1285 = vmatprep.subr.mxu0 0.0
    %1286 = vmatpush1.xpose.msra.mxu0 0.0
    %1287 = vmatprep.subr.mxu0 0.0
    %1288 = vmatpush1.xpose.msra.mxu0 0.0
    %1289 = vmatprep.subr.mxu0 0.0
    %1290 = vmatpush1.xpose.msra.mxu0 0.0
    %1291 = vmatprep.subr.mxu0 0.0
    %1292 = vmatpush1.xpose.msra.mxu0 0.0
    %1293 = vmatprep.subr.mxu0 0.0
    %1294 = vmatpush1.xpose.msra.mxu0 0.0
    %1295 = vmatprep.subr.mxu0 0.0
    %1296 = vmatpush1.xpose.msra.mxu0 0.0
    %1297 = vmatprep.subr.mxu0 0.0
    %1298 = vmatpush1.xpose.msra.mxu0 0.0
    %1299 = vmatprep.subr.mxu0 0.0
    %1300 = vmatpush1.xpose.msra.mxu0 0.0
    %1301 = vmatprep.subr.mxu0 0.0
    %1302 = vmatpush1.xpose.msra.mxu0 0.0
    %1303 = vmatprep.subr.mxu0 0.0
    %1304 = vmatpush1.xpose.msra.mxu0 0.0
    %1305 = vmatprep.subr.mxu0 0.0
    %1306 = vmatpush1.xpose.msra.mxu0 0.0
    %1307 = vmatprep.mubr.f32.mxu0 0.0
    %1308 = vmatmul.mubr.f32.gmra.mrb[0].mxu0 %v1239
    %v1309 = vpop.f32.mrb[0].mxu0
    %v1310 = vadd.f32 0.0, %v1309
    %v1311 = vpop.f32.mrb[0].mxu0
    %1312 = vdwg.mxu0
    %v1313 = vmul.f32 %v1310, 0.35355338
    %v1314 = vsel %vm98, %v1313, -inf
    %1315 = vmax.xlane.f32.xlu0 %v1314
    %v1316 = vpop.xlane.xlu0 %1315
    %v1317 = vsub.f32 %v1313, %v1316
    %v1318 = vmul.f32 %v1317, 1.442695
    %v1319 = vpow.pop %v1318
    %v1320 = vsel %vm98, %v1319, 0.0
    %1321 = vadd.xlane.f32.xlu0 %v1320
    %v1322 = vpop.xlane.xlu0 %1321
    %v1323 = vrcp.pop %v1322
    %v1324 = vmul.f32 %v1319, %v1323
    %1325 = vrot.lane.b32.xlu0 %v1053, 104
    %v1326 = vpop.permute.xlu0 %1325
    %1327 = vrot.lane.b32.xlu0 %v1053, 72
    %v1328 = vpop.permute.xlu0 %1327
    %v1329 = vsel %vm98, %v1326, 0
    %v1331 = vsel %vm98, %v1328, 0
    %1333 = vmatprep.subr.mxu0 0.0
    %1334 = vmatpush1.xpose.msra.mxu0 %v1331
    %1335 = vmatprep.subr.mxu0 0.0
    %1336 = vmatpush1.xpose.msra.mxu0 0.0
    %1337 = vmatprep.subr.mxu0 0.0
    %1338 = vmatpush1.xpose.msra.mxu0 0.0
    %1339 = vmatprep.subr.mxu0 0.0
    %1340 = vmatpush1.xpose.msra.mxu0 0.0
    %1341 = vmatprep.subr.mxu0 0.0
    %1342 = vmatpush1.xpose.msra.mxu0 0.0
    %1343 = vmatprep.subr.mxu0 0.0
    %1344 = vmatpush1.xpose.msra.mxu0 0.0
    %1345 = vmatprep.subr.mxu0 0.0
    %1346 = vmatpush1.xpose.msra.mxu0 0.0
    %1347 = vmatprep.subr.mxu0 0.0
    %1348 = vmatpush1.xpose.msra.mxu0 0.0
    %1349 = vmatprep.subr.mxu0 0.0
    %1350 = vmatpush1.xpose.msra.mxu0 0.0
    %1351 = vmatprep.subr.mxu0 0.0
    %1352 = vmatpush1.xpose.msra.mxu0 0.0
    %1353 = vmatprep.subr.mxu0 0.0
    %1354 = vmatpush1.xpose.msra.mxu0 0.0
    %1355 = vmatprep.subr.mxu0 0.0
    %1356 = vmatpush1.xpose.msra.mxu0 0.0
    %1357 = vmatprep.subr.mxu0 0.0
    %1358 = vmatpush1.xpose.msra.mxu0 0.0
    %1359 = vmatprep.subr.mxu0 0.0
    %1360 = vmatpush1.xpose.msra.mxu0 0.0
    %1361 = vmatprep.subr.mxu0 0.0
    %1362 = vmatpush1.xpose.msra.mxu0 0.0
    %1363 = vmatprep.subr.mxu0 0.0
    %1364 = vmatpush1.xpose.msra.mxu0 0.0
    %1365 = vmatprep.subr.mxu0 0.0
    %1366 = vmatpush1.xpose.msra.mxu0 0.0
    %1367 = vmatprep.subr.mxu0 0.0
    %1368 = vmatpush1.xpose.msra.mxu0 0.0
    %1369 = vmatprep.subr.mxu0 0.0
    %1370 = vmatpush1.xpose.msra.mxu0 0.0
    %1371 = vmatprep.subr.mxu0 0.0
    %1372 = vmatpush1.xpose.msra.mxu0 0.0
    %1373 = vmatprep.subr.mxu0 0.0
    %1374 = vmatpush1.xpose.msra.mxu0 0.0
    %1375 = vmatprep.subr.mxu0 0.0
    %1376 = vmatpush1.xpose.msra.mxu0 0.0
    %1377 = vmatprep.subr.mxu0 0.0
    %1378 = vmatpush1.xpose.msra.mxu0 0.0
    %1379 = vmatprep.subr.mxu0 0.0
    %1380 = vmatpush1.xpose.msra.mxu0 0.0
    %1381 = vmatprep.subr.mxu0 0.0
    %1382 = vmatpush1.xpose.msra.mxu0 0.0
    %1383 = vmatprep.subr.mxu0 0.0
    %1384 = vmatpush1.xpose.msra.mxu0 0.0
    %1385 = vmatprep.subr.mxu0 0.0
    %1386 = vmatpush1.xpose.msra.mxu0 0.0
    %1387 = vmatprep.subr.mxu0 0.0
    %1388 = vmatpush1.xpose.msra.mxu0 0.0
    %1389 = vmatprep.subr.mxu0 0.0
    %1390 = vmatpush1.xpose.msra.mxu0 0.0
    %1391 = vmatprep.subr.mxu0 0.0
    %1392 = vmatpush1.xpose.msra.mxu0 0.0
    %1393 = vmatprep.subr.mxu0 0.0
    %1394 = vmatpush1.xpose.msra.mxu0 0.0
    %1395 = vmatprep.subr.mxu0 0.0
    %1396 = vmatpush1.xpose.msra.mxu0 0.0
    %1397 = vmatprep.mubr.f32.mxu0 0.0
    %1398 = vmatmul.mubr.f32.gmra.mrb[0].mxu0 %v1329
    %v1399 = vpop.f32.mrb[0].mxu0
    %v1400 = vadd.f32 0.0, %v1399
    %v1401 = vpop.f32.mrb[0].mxu0
    %1402 = vdwg.mxu0
    %v1403 = vmul.f32 %v1400, 0.35355338
    %v1404 = vsel %vm98, %v1403, -inf
    %1405 = vmax.xlane.f32.xlu0 %v1404
    %v1406 = vpop.xlane.xlu0 %1405
    %v1407 = vsub.f32 %v1403, %v1406
    %v1408 = vmul.f32 %v1407, 1.442695
    %v1409 = vpow.pop %v1408
    %v1410 = vsel %vm98, %v1409, 0.0
    %1411 = vadd.xlane.f32.xlu0 %v1410
    %v1412 = vpop.xlane.xlu0 %1411
    %v1413 = vrcp.pop %v1412
    %v1414 = vmul.f32 %v1409, %v1413
    %1415 = vrot.lane.b32.xlu0 %v1053, 64
    %v1416 = vpop.permute.xlu0 %1415
    %v1419 = vsel %vm98, %v1144, 0
    %1421 = vmatprep.subr.mxu0 0.0
    %1422 = vmatpush1.msra.mxu0 %v1416
    %1423 = vmatprep.subr.mxu0 0.0
    %1424 = vmatpush1.msra.mxu0 0.0
    %1425 = vmatprep.subr.mxu0 0.0
    %1426 = vmatpush1.msra.mxu0 0.0
    %1427 = vmatprep.subr.mxu0 0.0
    %1428 = vmatpush1.msra.mxu0 0.0
    %1429 = vmatprep.subr.mxu0 0.0
    %1430 = vmatpush1.msra.mxu0 0.0
    %1431 = vmatprep.subr.mxu0 0.0
    %1432 = vmatpush1.msra.mxu0 0.0
    %1433 = vmatprep.subr.mxu0 0.0
    %1434 = vmatpush1.msra.mxu0 0.0
    %1435 = vmatprep.subr.mxu0 0.0
    %1436 = vmatpush1.msra.mxu0 0.0
    %1437 = vmatprep.subr.mxu0 0.0
    %1438 = vmatpush1.msra.mxu0 0.0
    %1439 = vmatprep.subr.mxu0 0.0
    %1440 = vmatpush1.msra.mxu0 0.0
    %1441 = vmatprep.subr.mxu0 0.0
    %1442 = vmatpush1.msra.mxu0 0.0
    %1443 = vmatprep.subr.mxu0 0.0
    %1444 = vmatpush1.msra.mxu0 0.0
    %1445 = vmatprep.subr.mxu0 0.0
    %1446 = vmatpush1.msra.mxu0 0.0
    %1447 = vmatprep.subr.mxu0 0.0
    %1448 = vmatpush1.msra.mxu0 0.0
    %1449 = vmatprep.subr.mxu0 0.0
    %1450 = vmatpush1.msra.mxu0 0.0
    %1451 = vmatprep.subr.mxu0 0.0
    %1452 = vmatpush1.msra.mxu0 0.0
    %1453 = vmatprep.subr.mxu0 0.0
    %1454 = vmatpush1.msra.mxu0 0.0
    %1455 = vmatprep.subr.mxu0 0.0
    %1456 = vmatpush1.msra.mxu0 0.0
    %1457 = vmatprep.subr.mxu0 0.0
    %1458 = vmatpush1.msra.mxu0 0.0
    %1459 = vmatprep.subr.mxu0 0.0
    %1460 = vmatpush1.msra.mxu0 0.0
    %1461 = vmatprep.subr.mxu0 0.0
    %1462 = vmatpush1.msra.mxu0 0.0
    %1463 = vmatprep.subr.mxu0 0.0
    %1464 = vmatpush1.msra.mxu0 0.0
    %1465 = vmatprep.subr.mxu0 0.0
    %1466 = vmatpush1.msra.mxu0 0.0
    %1467 = vmatprep.subr.mxu0 0.0
    %1468 = vmatpush1.msra.mxu0 0.0
    %1469 = vmatprep.subr.mxu0 0.0
    %1470 = vmatpush1.msra.mxu0 0.0
    %1471 = vmatprep.subr.mxu0 0.0
    %1472 = vmatpush1.msra.mxu0 0.0
    %1473 = vmatprep.subr.mxu0 0.0
    %1474 = vmatpush1.msra.mxu0 0.0
    %1475 = vmatprep.subr.mxu0 0.0
    %1476 = vmatpush1.msra.mxu0 0.0
    %1477 = vmatprep.subr.mxu0 0.0
    %1478 = vmatpush1.msra.mxu0 0.0
    %1479 = vmatprep.subr.mxu0 0.0
    %1480 = vmatpush1.msra.mxu0 0.0
    %1481 = vmatprep.subr.mxu0 0.0
    %1482 = vmatpush1.msra.mxu0 0.0
    %1483 = vmatprep.subr.mxu0 0.0
    %1484 = vmatpush1.msra.mxu0 0.0
    %1485 = vmatprep.mubr.f32.mxu0 0.0
    %1486 = vmatmul.mubr.f32.gmra.mrb[0].mxu0 %v1419
    %v1487 = vpop.f32.mrb[0].mxu0
    %v1488 = vadd.f32 0.0, %v1487
    %v1489 = vpop.f32.mrb[0].mxu0
    %1490 = vdwg.mxu0
    %1491 = vst.msk [vmem:[#allocation2] sm:$0xff] %vm98, %v1488
    %1492 = vrot.lane.b32.xlu0 %v1053, 56
    %v1493 = vpop.permute.xlu0 %1492
    %v1496 = vsel %vm98, %v1234, 0
    %1498 = vmatprep.subr.mxu0 0.0
    %1499 = vmatpush1.msra.mxu0 %v1493
    %1500 = vmatprep.subr.mxu0 0.0
    %1501 = vmatpush1.msra.mxu0 0.0
    %1502 = vmatprep.subr.mxu0 0.0
    %1503 = vmatpush1.msra.mxu0 0.0
    %1504 = vmatprep.subr.mxu0 0.0
    %1505 = vmatpush1.msra.mxu0 0.0
    %1506 = vmatprep.subr.mxu0 0.0
    %1507 = vmatpush1.msra.mxu0 0.0
    %1508 = vmatprep.subr.mxu0 0.0
    %1509 = vmatpush1.msra.mxu0 0.0
    %1510 = vmatprep.subr.mxu0 0.0
    %1511 = vmatpush1.msra.mxu0 0.0
    %1512 = vmatprep.subr.mxu0 0.0
    %1513 = vmatpush1.msra.mxu0 0.0
    %1514 = vmatprep.subr.mxu0 0.0
    %1515 = vmatpush1.msra.mxu0 0.0
    %1516 = vmatprep.subr.mxu0 0.0
    %1517 = vmatpush1.msra.mxu0 0.0
    %1518 = vmatprep.subr.mxu0 0.0
    %1519 = vmatpush1.msra.mxu0 0.0
    %1520 = vmatprep.subr.mxu0 0.0
    %1521 = vmatpush1.msra.mxu0 0.0
    %1522 = vmatprep.subr.mxu0 0.0
    %1523 = vmatpush1.msra.mxu0 0.0
    %1524 = vmatprep.subr.mxu0 0.0
    %1525 = vmatpush1.msra.mxu0 0.0
    %1526 = vmatprep.subr.mxu0 0.0
    %1527 = vmatpush1.msra.mxu0 0.0
    %1528 = vmatprep.subr.mxu0 0.0
    %1529 = vmatpush1.msra.mxu0 0.0
    %1530 = vmatprep.subr.mxu0 0.0
    %1531 = vmatpush1.msra.mxu0 0.0
    %1532 = vmatprep.subr.mxu0 0.0
    %1533 = vmatpush1.msra.mxu0 0.0
    %1534 = vmatprep.subr.mxu0 0.0
    %1535 = vmatpush1.msra.mxu0 0.0
    %1536 = vmatprep.subr.mxu0 0.0
    %1537 = vmatpush1.msra.mxu0 0.0
    %1538 = vmatprep.subr.mxu0 0.0
    %1539 = vmatpush1.msra.mxu0 0.0
    %1540 = vmatprep.subr.mxu0 0.0
    %1541 = vmatpush1.msra.mxu0 0.0
    %1542 = vmatprep.subr.mxu0 0.0
    %1543 = vmatpush1.msra.mxu0 0.0
    %1544 = vmatprep.subr.mxu0 0.0
    %1545 = vmatpush1.msra.mxu0 0.0
    %1546 = vmatprep.subr.mxu0 0.0
    %1547 = vmatpush1.msra.mxu0 0.0
    %1548 = vmatprep.subr.mxu0 0.0
    %1549 = vmatpush1.msra.mxu0 0.0
    %1550 = vmatprep.subr.mxu0 0.0
    %1551 = vmatpush1.msra.mxu0 0.0
    %1552 = vmatprep.subr.mxu0 0.0
    %1553 = vmatpush1.msra.mxu0 0.0
    %1554 = vmatprep.subr.mxu0 0.0
    %1555 = vmatpush1.msra.mxu0 0.0
    %1556 = vmatprep.subr.mxu0 0.0
    %1557 = vmatpush1.msra.mxu0 0.0
    %1558 = vmatprep.subr.mxu0 0.0
    %1559 = vmatpush1.msra.mxu0 0.0
    %1560 = vmatprep.subr.mxu0 0.0
    %1561 = vmatpush1.msra.mxu0 0.0
    %1562 = vmatprep.mubr.f32.mxu0 0.0
    %1563 = vmatmul.mubr.f32.gmra.mrb[0].mxu0 %v1496
    %v1564 = vpop.f32.mrb[0].mxu0
    %v1565 = vadd.f32 0.0, %v1564
    %v1566 = vpop.f32.mrb[0].mxu0
    %1567 = vdwg.mxu0
    %1569 = vrot.lane.b32.xlu0 %v1565, 8
    %v1570 = vpop.permute.xlu0 %1569
    %1572 = vst.msk [vmem:[#allocation2] sm:$0xff] %vm612, %v1570
    %1573 = vrot.lane.b32.xlu0 %v1053, 48
    %v1574 = vpop.permute.xlu0 %1573
    %v1577 = vsel %vm98, %v1324, 0
    %1579 = vmatprep.subr.mxu0 0.0
    %1580 = vmatpush1.msra.mxu0 %v1574
    %1581 = vmatprep.subr.mxu0 0.0
    %1582 = vmatpush1.msra.mxu0 0.0
    %1583 = vmatprep.subr.mxu0 0.0
    %1584 = vmatpush1.msra.mxu0 0.0
    %1585 = vmatprep.subr.mxu0 0.0
    %1586 = vmatpush1.msra.mxu0 0.0
    %1587 = vmatprep.subr.mxu0 0.0
    %1588 = vmatpush1.msra.mxu0 0.0
    %1589 = vmatprep.subr.mxu0 0.0
    %1590 = vmatpush1.msra.mxu0 0.0
    %1591 = vmatprep.subr.mxu0 0.0
    %1592 = vmatpush1.msra.mxu0 0.0
    %1593 = vmatprep.subr.mxu0 0.0
    %1594 = vmatpush1.msra.mxu0 0.0
    %1595 = vmatprep.subr.mxu0 0.0
    %1596 = vmatpush1.msra.mxu0 0.0
    %1597 = vmatprep.subr.mxu0 0.0
    %1598 = vmatpush1.msra.mxu0 0.0
    %1599 = vmatprep.subr.mxu0 0.0
    %1600 = vmatpush1.msra.mxu0 0.0
    %1601 = vmatprep.subr.mxu0 0.0
    %1602 = vmatpush1.msra.mxu0 0.0
    %1603 = vmatprep.subr.mxu0 0.0
    %1604 = vmatpush1.msra.mxu0 0.0
    %1605 = vmatprep.subr.mxu0 0.0
    %1606 = vmatpush1.msra.mxu0 0.0
    %1607 = vmatprep.subr.mxu0 0.0
    %1608 = vmatpush1.msra.mxu0 0.0
    %1609 = vmatprep.subr.mxu0 0.0
    %1610 = vmatpush1.msra.mxu0 0.0
    %1611 = vmatprep.subr.mxu0 0.0
    %1612 = vmatpush1.msra.mxu0 0.0
    %1613 = vmatprep.subr.mxu0 0.0
    %1614 = vmatpush1.msra.mxu0 0.0
    %1615 = vmatprep.subr.mxu0 0.0
    %1616 = vmatpush1.msra.mxu0 0.0
    %1617 = vmatprep.subr.mxu0 0.0
    %1618 = vmatpush1.msra.mxu0 0.0
    %1619 = vmatprep.subr.mxu0 0.0
    %1620 = vmatpush1.msra.mxu0 0.0
    %1621 = vmatprep.subr.mxu0 0.0
    %1622 = vmatpush1.msra.mxu0 0.0
    %1623 = vmatprep.subr.mxu0 0.0
    %1624 = vmatpush1.msra.mxu0 0.0
    %1625 = vmatprep.subr.mxu0 0.0
    %1626 = vmatpush1.msra.mxu0 0.0
    %1627 = vmatprep.subr.mxu0 0.0
    %1628 = vmatpush1.msra.mxu0 0.0
    %1629 = vmatprep.subr.mxu0 0.0
    %1630 = vmatpush1.msra.mxu0 0.0
    %1631 = vmatprep.subr.mxu0 0.0
    %1632 = vmatpush1.msra.mxu0 0.0
    %1633 = vmatprep.subr.mxu0 0.0
    %1634 = vmatpush1.msra.mxu0 0.0
    %1635 = vmatprep.subr.mxu0 0.0
    %1636 = vmatpush1.msra.mxu0 0.0
    %1637 = vmatprep.subr.mxu0 0.0
    %1638 = vmatpush1.msra.mxu0 0.0
    %1639 = vmatprep.subr.mxu0 0.0
    %1640 = vmatpush1.msra.mxu0 0.0
    %1641 = vmatprep.subr.mxu0 0.0
    %1642 = vmatpush1.msra.mxu0 0.0
    %1643 = vmatprep.mubr.f32.mxu0 0.0
    %1644 = vmatmul.mubr.f32.gmra.mrb[0].mxu0 %v1577
    %v1645 = vpop.f32.mrb[0].mxu0
    %v1646 = vadd.f32 0.0, %v1645
    %v1647 = vpop.f32.mrb[0].mxu0
    %1648 = vdwg.mxu0
    %1650 = vrot.lane.b32.xlu0 %v1646, 16
    %v1651 = vpop.permute.xlu0 %1650
    %1653 = vst.msk [vmem:[#allocation2] sm:$0xff] %vm694, %v1651
    %1654 = vrot.lane.b32.xlu0 %v1053, 40
    %v1655 = vpop.permute.xlu0 %1654
    %v1658 = vsel %vm98, %v1414, 0
    %1660 = vmatprep.subr.mxu0 0.0
    %1661 = vmatpush1.msra.mxu0 %v1655
    %1662 = vmatprep.subr.mxu0 0.0
    %1663 = vmatpush1.msra.mxu0 0.0
    %1664 = vmatprep.subr.mxu0 0.0
    %1665 = vmatpush1.msra.mxu0 0.0
    %1666 = vmatprep.subr.mxu0 0.0
    %1667 = vmatpush1.msra.mxu0 0.0
    %1668 = vmatprep.subr.mxu0 0.0
    %1669 = vmatpush1.msra.mxu0 0.0
    %1670 = vmatprep.subr.mxu0 0.0
    %1671 = vmatpush1.msra.mxu0 0.0
    %1672 = vmatprep.subr.mxu0 0.0
    %1673 = vmatpush1.msra.mxu0 0.0
    %1674 = vmatprep.subr.mxu0 0.0
    %1675 = vmatpush1.msra.mxu0 0.0
    %1676 = vmatprep.subr.mxu0 0.0
    %1677 = vmatpush1.msra.mxu0 0.0
    %1678 = vmatprep.subr.mxu0 0.0
    %1679 = vmatpush1.msra.mxu0 0.0
    %1680 = vmatprep.subr.mxu0 0.0
    %1681 = vmatpush1.msra.mxu0 0.0
    %1682 = vmatprep.subr.mxu0 0.0
    %1683 = vmatpush1.msra.mxu0 0.0
    %1684 = vmatprep.subr.mxu0 0.0
    %1685 = vmatpush1.msra.mxu0 0.0
    %1686 = vmatprep.subr.mxu0 0.0
    %1687 = vmatpush1.msra.mxu0 0.0
    %1688 = vmatprep.subr.mxu0 0.0
    %1689 = vmatpush1.msra.mxu0 0.0
    %1690 = vmatprep.subr.mxu0 0.0
    %1691 = vmatpush1.msra.mxu0 0.0
    %1692 = vmatprep.subr.mxu0 0.0
    %1693 = vmatpush1.msra.mxu0 0.0
    %1694 = vmatprep.subr.mxu0 0.0
    %1695 = vmatpush1.msra.mxu0 0.0
    %1696 = vmatprep.subr.mxu0 0.0
    %1697 = vmatpush1.msra.mxu0 0.0
    %1698 = vmatprep.subr.mxu0 0.0
    %1699 = vmatpush1.msra.mxu0 0.0
    %1700 = vmatprep.subr.mxu0 0.0
    %1701 = vmatpush1.msra.mxu0 0.0
    %1702 = vmatprep.subr.mxu0 0.0
    %1703 = vmatpush1.msra.mxu0 0.0
    %1704 = vmatprep.subr.mxu0 0.0
    %1705 = vmatpush1.msra.mxu0 0.0
    %1706 = vmatprep.subr.mxu0 0.0
    %1707 = vmatpush1.msra.mxu0 0.0
    %1708 = vmatprep.subr.mxu0 0.0
    %1709 = vmatpush1.msra.mxu0 0.0
    %1710 = vmatprep.subr.mxu0 0.0
    %1711 = vmatpush1.msra.mxu0 0.0
    %1712 = vmatprep.subr.mxu0 0.0
    %1713 = vmatpush1.msra.mxu0 0.0
    %1714 = vmatprep.subr.mxu0 0.0
    %1715 = vmatpush1.msra.mxu0 0.0
    %1716 = vmatprep.subr.mxu0 0.0
    %1717 = vmatpush1.msra.mxu0 0.0
    %1718 = vmatprep.subr.mxu0 0.0
    %1719 = vmatpush1.msra.mxu0 0.0
    %1720 = vmatprep.subr.mxu0 0.0
    %1721 = vmatpush1.msra.mxu0 0.0
    %1722 = vmatprep.subr.mxu0 0.0
    %1723 = vmatpush1.msra.mxu0 0.0
    %1724 = vmatprep.mubr.f32.mxu0 0.0
    %1725 = vmatmul.mubr.f32.gmra.mrb[0].mxu0 %v1658
    %v1726 = vpop.f32.mrb[0].mxu0
    %v1727 = vadd.f32 0.0, %v1726
    %v1728 = vpop.f32.mrb[0].mxu0
    %1729 = vdwg.mxu0
    %1731 = vrot.lane.b32.xlu0 %v1727, 24
    %v1732 = vpop.permute.xlu0 %1731
    %1734 = vst.msk [vmem:[#allocation2] sm:$0xff] %vm776, %v1732
    %v1735 = vld [vmem:[#allocation2] sm:$0xff]
    %v1736 = vadd.f32 %v1735, %v977
    %v1737 = vsel %vm21, %v1736, 0.0
    %1738 = vadd.xlane.f32.xlu0 %v1737
    %v1739 = vpop.xlane.xlu0 %1738
    %v1740 = vmul.f32 %v1739, %v783
    %v1741 = vmul.f32 %v1736, %v1736
    %v1742 = vsel %vm21, %v1741, 0.0
    %1743 = vadd.xlane.f32.xlu0 %v1742
    %v1744 = vpop.xlane.xlu0 %1743
    %v1745 = vmul.f32 %v1744, %v783
    %v1746 = vmul.f32 %v1740, %v1740
    %v1747 = vsub.f32 %v1745, %v1746
    %v1748 = vsub.f32 %v1736, %v1740
    %v1749 = vadd.f32 %v1747, 1e-05
    %v1750 = vrsqrt.pop %v1749
    %v1751 = vmul.f32 %v1748, %v1750
    %v1752 = vld [vmem:[%s1 + $0x10] sm:$0xff]
    %v1753 = vld [vmem:[%s1 + $0x28] sm:$0xff]
    %v1754 = vld [vmem:[%s1 + $0x40] sm:$0xff]
    %v1755 = vld [vmem:[%s1 + $0x58] sm:$0xff]
    %v1756 = vld [vmem:[%s1 + $0x70] ss:$0 sm:$0xff]
    %v1758 = vsel %vm21, %v1751, 0
    %1760 = vmatprep.subr.mxu0 0.0
    %1761 = vmatpush1.msra.mxu0 %v1752
    %1762 = vmatprep.subr.mxu0 0.0
    %1763 = vmatpush1.msra.mxu0 %v1753
    %1764 = vmatprep.subr.mxu0 0.0
    %1765 = vmatpush1.msra.mxu0 %v1754
    %1766 = vmatprep.subr.mxu0 0.0
    %1767 = vmatpush1.msra.mxu0 %v1755
    %1768 = vmatprep.subr.mxu0 0.0
    %1769 = vmatpush1.msra.mxu0 0.0
    %1770 = vmatprep.subr.mxu0 0.0
    %1771 = vmatpush1.msra.mxu0 0.0
    %1772 = vmatprep.subr.mxu0 0.0
    %1773 = vmatpush1.msra.mxu0 0.0
    %1774 = vmatprep.subr.mxu0 0.0
    %1775 = vmatpush1.msra.mxu0 0.0
    %1776 = vmatprep.subr.mxu0 0.0
    %1777 = vmatpush1.msra.mxu0 0.0
    %1778 = vmatprep.subr.mxu0 0.0
    %1779 = vmatpush1.msra.mxu0 0.0
    %1780 = vmatprep.subr.mxu0 0.0
    %1781 = vmatpush1.msra.mxu0 0.0
    %1782 = vmatprep.subr.mxu0 0.0
    %1783 = vmatpush1.msra.mxu0 0.0
    %1784 = vmatprep.subr.mxu0 0.0
    %1785 = vmatpush1.msra.mxu0 0.0
    %1786 = vmatprep.subr.mxu0 0.0
    %1787 = vmatpush1.msra.mxu0 0.0
    %1788 = vmatprep.subr.mxu0 0.0
    %1789 = vmatpush1.msra.mxu0 0.0
    %1790 = vmatprep.subr.mxu0 0.0
    %1791 = vmatpush1.msra.mxu0 0.0
    %1792 = vmatprep.subr.mxu0 0.0
    %1793 = vmatpush1.msra.mxu0 0.0
    %1794 = vmatprep.subr.mxu0 0.0
    %1795 = vmatpush1.msra.mxu0 0.0
    %1796 = vmatprep.subr.mxu0 0.0
    %1797 = vmatpush1.msra.mxu0 0.0
    %1798 = vmatprep.subr.mxu0 0.0
    %1799 = vmatpush1.msra.mxu0 0.0
    %1800 = vmatprep.subr.mxu0 0.0
    %1801 = vmatpush1.msra.mxu0 0.0
    %1802 = vmatprep.subr.mxu0 0.0
    %1803 = vmatpush1.msra.mxu0 0.0
    %1804 = vmatprep.subr.mxu0 0.0
    %1805 = vmatpush1.msra.mxu0 0.0
    %1806 = vmatprep.subr.mxu0 0.0
    %1807 = vmatpush1.msra.mxu0 0.0
    %1808 = vmatprep.subr.mxu0 0.0
    %1809 = vmatpush1.msra.mxu0 0.0
    %1810 = vmatprep.subr.mxu0 0.0
    %1811 = vmatpush1.msra.mxu0 0.0
    %1812 = vmatprep.subr.mxu0 0.0
    %1813 = vmatpush1.msra.mxu0 0.0
    %1814 = vmatprep.subr.mxu0 0.0
    %1815 = vmatpush1.msra.mxu0 0.0
    %1816 = vmatprep.subr.mxu0 0.0
    %1817 = vmatpush1.msra.mxu0 0.0
    %1818 = vmatprep.subr.mxu0 0.0
    %1819 = vmatpush1.msra.mxu0 0.0
    %1820 = vmatprep.subr.mxu0 0.0
    %1821 = vmatpush1.msra.mxu0 0.0
    %1822 = vmatprep.subr.mxu0 0.0
    %1823 = vmatpush1.msra.mxu0 0.0
    %1824 = vmatprep.mubr.f32.mxu0 0.0
    %1825 = vmatmul.mubr.f32.gmra.mrb[0].mxu0 %v1758
    %v1826 = vpop.f32.mrb[0].mxu0
    %v1827 = vadd.f32 %v1756, %v1826
    %v1828 = vpop.f32.mrb[0].mxu0
    %1829 = vdwg.mxu0
    %v1830 = vmax.f32 %v1827, 0.0
    %v1831 = vld [vmem:[%s2] sm:$0xff]
    %v1832 = vld [vmem:[%s2 + $0x8] sm:$0xff]
    %v1833 = vld [vmem:[%s2 + $0x10] sm:$0xff]
    %v1834 = vld [vmem:[%s2 + $0x18] sm:$0xff]
    %v1835 = vld [vmem:[%s2 + $0x20] sm:$0xff]
    %v1836 = vld [vmem:[%s2 + $0x28] sm:$0xff]
    %v1837 = vld [vmem:[%s2 + $0x30] sm:$0xff]
    %v1838 = vld [vmem:[%s2 + $0x38] sm:$0xff]
    %v1839 = vld [vmem:[%s2 + $0x40] sm:$0x1]
    %v1840 = vlaneseq
    %v1841 = vshrl.u32 %v1840, 7
    %v1842 = vsub.s32 0, %v1841
    %v1843 = vrot.slane %v1839, %v1842
    %v1845 = vsel %vm888, %v1830, 0
    %1847 = vmatprep.subr.mxu0 0.0
    %1848 = vmatpush1.msra.mxu0 %v1831
    %1849 = vmatprep.subr.mxu0 0.0
    %1850 = vmatpush1.msra.mxu0 %v1832
    %1851 = vmatprep.subr.mxu0 0.0
    %1852 = vmatpush1.msra.mxu0 %v1833
    %1853 = vmatprep.subr.mxu0 0.0
    %1854 = vmatpush1.msra.mxu0 %v1834
    %1855 = vmatprep.subr.mxu0 0.0
    %1856 = vmatpush1.msra.mxu0 %v1835
    %1857 = vmatprep.subr.mxu0 0.0
    %1858 = vmatpush1.msra.mxu0 %v1836
    %1859 = vmatprep.subr.mxu0 0.0
    %1860 = vmatpush1.msra.mxu0 %v1837
    %1861 = vmatprep.subr.mxu0 0.0
    %1862 = vmatpush1.msra.mxu0 %v1838
    %1863 = vmatprep.subr.mxu0 0.0
    %1864 = vmatpush1.msra.mxu0 0.0
    %1865 = vmatprep.subr.mxu0 0.0
    %1866 = vmatpush1.msra.mxu0 0.0
    %1867 = vmatprep.subr.mxu0 0.0
    %1868 = vmatpush1.msra.mxu0 0.0
    %1869 = vmatprep.subr.mxu0 0.0
    %1870 = vmatpush1.msra.mxu0 0.0
    %1871 = vmatprep.subr.mxu0 0.0
    %1872 = vmatpush1.msra.mxu0 0.0
    %1873 = vmatprep.subr.mxu0 0.0
    %1874 = vmatpush1.msra.mxu0 0.0
    %1875 = vmatprep.subr.mxu0 0.0
    %1876 = vmatpush1.msra.mxu0 0.0
    %1877 = vmatprep.subr.mxu0 0.0
    %1878 = vmatpush1.msra.mxu0 0.0
    %1879 = vmatprep.subr.mxu0 0.0
    %1880 = vmatpush1.msra.mxu0 0.0
    %1881 = vmatprep.subr.mxu0 0.0
    %1882 = vmatpush1.msra.mxu0 0.0
    %1883 = vmatprep.subr.mxu0 0.0
    %1884 = vmatpush1.msra.mxu0 0.0
    %1885 = vmatprep.subr.mxu0 0.0
    %1886 = vmatpush1.msra.mxu0 0.0
    %1887 = vmatprep.subr.mxu0 0.0
    %1888 = vmatpush1.msra.mxu0 0.0
    %1889 = vmatprep.subr.mxu0 0.0
    %1890 = vmatpush1.msra.mxu0 0.0
    %1891 = vmatprep.subr.mxu0 0.0
    %1892 = vmatpush1.msra.mxu0 0.0
    %1893 = vmatprep.subr.mxu0 0.0
    %1894 = vmatpush1.msra.mxu0 0.0
    %1895 = vmatprep.subr.mxu0 0.0
    %1896 = vmatpush1.msra.mxu0 0.0
    %1897 = vmatprep.subr.mxu0 0.0
    %1898 = vmatpush1.msra.mxu0 0.0
    %1899 = vmatprep.subr.mxu0 0.0
    %1900 = vmatpush1.msra.mxu0 0.0
    %1901 = vmatprep.subr.mxu0 0.0
    %1902 = vmatpush1.msra.mxu0 0.0
    %1903 = vmatprep.subr.mxu0 0.0
    %1904 = vmatpush1.msra.mxu0 0.0
    %1905 = vmatprep.subr.mxu0 0.0
    %1906 = vmatpush1.msra.mxu0 0.0
    %1907 = vmatprep.subr.mxu0 0.0
    %1908 = vmatpush1.msra.mxu0 0.0
    %1909 = vmatprep.subr.mxu0 0.0
    %1910 = vmatpush1.msra.mxu0 0.0
    %1911 = vmatprep.mubr.f32.mxu0 0.0
    %1912 = vmatmul.mubr.f32.gmra.mrb[0].mxu0 %v1845
    %v1913 = vpop.f32.mrb[0].mxu0
    %v1914 = vadd.f32 %v1843, %v1913
    %v1915 = vpop.f32.mrb[0].mxu0
    %1916 = vdwg.mxu0
    %v1917 = vadd.f32 %v1914, %v1751
    %v1918 = vsel %vm21, %v1917, 0.0
    %1919 = vadd.xlane.f32.xlu0 %v1918
    %v1920 = vpop.xlane.xlu0 %1919
    %v1921 = vmul.f32 %v1920, %v783
    %v1922 = vmul.f32 %v1917, %v1917
    %v1923 = vsel %vm21, %v1922, 0.0
    %1924 = vadd.xlane.f32.xlu0 %v1923
    %v1925 = vpop.xlane.xlu0 %1924
    %v1926 = vmul.f32 %v1925, %v783
    %v1927 = vmul.f32 %v1921, %v1921
    %v1928 = vsub.f32 %v1926, %v1927
    %v1929 = vsub.f32 %v1917, %v1921
    %v1930 = vadd.f32 %v1928, 1e-05
    %v1931 = vrsqrt.pop %v1930
    %v1932 = vmul.f32 %v1929, %v1931
    %v1933 = vld [vmem:[%s1 + $0x8] sm:$0xff]
    %v1934 = vld [vmem:[%s1 + $0x20] sm:$0xff]
    %v1935 = vld [vmem:[%s1 + $0x38] sm:$0xff]
    %v1936 = vld [vmem:[%s1 + $0x50] sm:$0xff]
    %v1937 = vld [vmem:[%s1 + $0x68] ss:$0 sm:$0xff]
    %v1939 = vsel %vm21, %v1932, 0
    %1941 = vmatprep.subr.mxu0 0.0
    %1942 = vmatpush1.msra.mxu0 %v1933
    %1943 = vmatprep.subr.mxu0 0.0
    %1944 = vmatpush1.msra.mxu0 %v1934
    %1945 = vmatprep.subr.mxu0 0.0
    %1946 = vmatpush1.msra.mxu0 %v1935
    %1947 = vmatprep.subr.mxu0 0.0
    %1948 = vmatpush1.msra.mxu0 %v1936
    %1949 = vmatprep.subr.mxu0 0.0
    %1950 = vmatpush1.msra.mxu0 0.0
    %1951 = vmatprep.subr.mxu0 0.0
    %1952 = vmatpush1.msra.mxu0 0.0
    %1953 = vmatprep.subr.mxu0 0.0
    %1954 = vmatpush1.msra.mxu0 0.0
    %1955 = vmatprep.subr.mxu0 0.0
    %1956 = vmatpush1.msra.mxu0 0.0
    %1957 = vmatprep.subr.mxu0 0.0
    %1958 = vmatpush1.msra.mxu0 0.0
    %1959 = vmatprep.subr.mxu0 0.0
    %1960 = vmatpush1.msra.mxu0 0.0
    %1961 = vmatprep.subr.mxu0 0.0
    %1962 = vmatpush1.msra.mxu0 0.0
    %1963 = vmatprep.subr.mxu0 0.0
    %1964 = vmatpush1.msra.mxu0 0.0
    %1965 = vmatprep.subr.mxu0 0.0
    %1966 = vmatpush1.msra.mxu0 0.0
    %1967 = vmatprep.subr.mxu0 0.0
    %1968 = vmatpush1.msra.mxu0 0.0
    %1969 = vmatprep.subr.mxu0 0.0
    %1970 = vmatpush1.msra.mxu0 0.0
    %1971 = vmatprep.subr.mxu0 0.0
    %1972 = vmatpush1.msra.mxu0 0.0
    %1973 = vmatprep.subr.mxu0 0.0
    %1974 = vmatpush1.msra.mxu0 0.0
    %1975 = vmatprep.subr.mxu0 0.0
    %1976 = vmatpush1.msra.mxu0 0.0
    %1977 = vmatprep.subr.mxu0 0.0
    %1978 = vmatpush1.msra.mxu0 0.0
    %1979 = vmatprep.subr.mxu0 0.0
    %1980 = vmatpush1.msra.mxu0 0.0
    %1981 = vmatprep.subr.mxu0 0.0
    %1982 = vmatpush1.msra.mxu0 0.0
    %1983 = vmatprep.subr.mxu0 0.0
    %1984 = vmatpush1.msra.mxu0 0.0
    %1985 = vmatprep.subr.mxu0 0.0
    %1986 = vmatpush1.msra.mxu0 0.0
    %1987 = vmatprep.subr.mxu0 0.0
    %1988 = vmatpush1.msra.mxu0 0.0
    %1989 = vmatprep.subr.mxu0 0.0
    %1990 = vmatpush1.msra.mxu0 0.0
    %1991 = vmatprep.subr.mxu0 0.0
    %1992 = vmatpush1.msra.mxu0 0.0
    %1993 = vmatprep.subr.mxu0 0.0
    %1994 = vmatpush1.msra.mxu0 0.0
    %1995 = vmatprep.subr.mxu0 0.0
    %1996 = vmatpush1.msra.mxu0 0.0
    %1997 = vmatprep.subr.mxu0 0.0
    %1998 = vmatpush1.msra.mxu0 0.0
    %1999 = vmatprep.subr.mxu0 0.0
    %2000 = vmatpush1.msra.mxu0 0.0
    %2001 = vmatprep.subr.mxu0 0.0
    %2002 = vmatpush1.msra.mxu0 0.0
    %2003 = vmatprep.subr.mxu0 0.0
    %2004 = vmatpush1.msra.mxu0 0.0
    %2005 = vmatprep.mubr.f32.mxu0 0.0
    %2006 = vmatmul.mubr.f32.gmra.mrb[0].mxu0 %v1939
    %v2007 = vpop.f32.mrb[0].mxu0
    %v2008 = vadd.f32 %v1937, %v2007
    %v2009 = vpop.f32.mrb[0].mxu0
    %2010 = vdwg.mxu0
    %2012 = vrot.lane.b32.xlu0 %v2008, 96
    %v2013 = vpop.permute.xlu0 %2012
    %v2014 = vsel %vm98, %v2008, 0
    %v2016 = vsel %vm98, %v2013, 0
    %2018 = vmatprep.subr.mxu0 0.0
    %2019 = vmatpush1.xpose.msra.mxu0 %v2016
    %2020 = vmatprep.subr.mxu0 0.0
    %2021 = vmatpush1.xpose.msra.mxu0 0.0
    %2022 = vmatprep.subr.mxu0 0.0
    %2023 = vmatpush1.xpose.msra.mxu0 0.0
    %2024 = vmatprep.subr.mxu0 0.0
    %2025 = vmatpush1.xpose.msra.mxu0 0.0
    %2026 = vmatprep.subr.mxu0 0.0
    %2027 = vmatpush1.xpose.msra.mxu0 0.0
    %2028 = vmatprep.subr.mxu0 0.0
    %2029 = vmatpush1.xpose.msra.mxu0 0.0
    %2030 = vmatprep.subr.mxu0 0.0
    %2031 = vmatpush1.xpose.msra.mxu0 0.0
    %2032 = vmatprep.subr.mxu0 0.0
    %2033 = vmatpush1.xpose.msra.mxu0 0.0
    %2034 = vmatprep.subr.mxu0 0.0
    %2035 = vmatpush1.xpose.msra.mxu0 0.0
    %2036 = vmatprep.subr.mxu0 0.0
    %2037 = vmatpush1.xpose.msra.mxu0 0.0
    %2038 = vmatprep.subr.mxu0 0.0
    %2039 = vmatpush1.xpose.msra.mxu0 0.0
    %2040 = vmatprep.subr.mxu0 0.0
    %2041 = vmatpush1.xpose.msra.mxu0 0.0
    %2042 = vmatprep.subr.mxu0 0.0
    %2043 = vmatpush1.xpose.msra.mxu0 0.0
    %2044 = vmatprep.subr.mxu0 0.0
    %2045 = vmatpush1.xpose.msra.mxu0 0.0
    %2046 = vmatprep.subr.mxu0 0.0
    %2047 = vmatpush1.xpose.msra.mxu0 0.0
    %2048 = vmatprep.subr.mxu0 0.0
    %2049 = vmatpush1.xpose.msra.mxu0 0.0
    %2050 = vmatprep.subr.mxu0 0.0
    %2051 = vmatpush1.xpose.msra.mxu0 0.0
    %2052 = vmatprep.subr.mxu0 0.0
    %2053 = vmatpush1.xpose.msra.mxu0 0.0
    %2054 = vmatprep.subr.mxu0 0.0
    %2055 = vmatpush1.xpose.msra.mxu0 0.0
    %2056 = vmatprep.subr.mxu0 0.0
    %2057 = vmatpush1.xpose.msra.mxu0 0.0
    %2058 = vmatprep.subr.mxu0 0.0
    %2059 = vmatpush1.xpose.msra.mxu0 0.0
    %2060 = vmatprep.subr.mxu0 0.0
    %2061 = vmatpush1.xpose.msra.mxu0 0.0
    %2062 = vmatprep.subr.mxu0 0.0
    %2063 = vmatpush1.xpose.msra.mxu0 0.0
    %2064 = vmatprep.subr.mxu0 0.0
    %2065 = vmatpush1.xpose.msra.mxu0 0.0
    %2066 = vmatprep.subr.mxu0 0.0
    %2067 = vmatpush1.xpose.msra.mxu0 0.0
    %2068 = vmatprep.subr.mxu0 0.0
    %2069 = vmatpush1.xpose.msra.mxu0 0.0
    %2070 = vmatprep.subr.mxu0 0.0
    %2071 = vmatpush1.xpose.msra.mxu0 0.0
    %2072 = vmatprep.subr.mxu0 0.0
    %2073 = vmatpush1.xpose.msra.mxu0 0.0
    %2074 = vmatprep.subr.mxu0 0.0
    %2075 = vmatpush1.xpose.msra.mxu0 0.0
    %2076 = vmatprep.subr.mxu0 0.0
    %2077 = vmatpush1.xpose.msra.mxu0 0.0
    %2078 = vmatprep.subr.mxu0 0.0
    %2079 = vmatpush1.xpose.msra.mxu0 0.0
    %2080 = vmatprep.subr.mxu0 0.0
    %2081 = vmatpush1.xpose.msra.mxu0 0.0
    %2082 = vmatprep.mubr.f32.mxu0 0.0
    %2083 = vmatmul.mubr.f32.gmra.mrb[0].mxu0 %v2014
    %v2084 = vpop.f32.mrb[0].mxu0
    %v2085 = vadd.f32 0.0, %v2084
    %v2086 = vpop.f32.mrb[0].mxu0
    %2087 = vdwg.mxu0
    %v2088 = vmul.f32 %v2085, 0.35355338
    %v2089 = vsel %vm98, %v2088, -inf
    %2090 = vmax.xlane.f32.xlu0 %v2089
    %v2091 = vpop.xlane.xlu0 %2090
    %v2092 = vsub.f32 %v2088, %v2091
    %v2093 = vmul.f32 %v2092, 1.442695
    %v2094 = vpow.pop %v2093
    %v2095 = vsel %vm98, %v2094, 0.0
    %2096 = vadd.xlane.f32.xlu0 %v2095
    %v2097 = vpop.xlane.xlu0 %2096
    %v2098 = vrcp.pop %v2097
    %v2099 = vmul.f32 %v2094, %v2098
    %2100 = vrot.lane.b32.xlu0 %v2008, 120
    %v2101 = vpop.permute.xlu0 %2100
    %2102 = vrot.lane.b32.xlu0 %v2008, 88
    %v2103 = vpop.permute.xlu0 %2102
    %v2104 = vsel %vm98, %v2101, 0
    %v2106 = vsel %vm98, %v2103, 0
    %2108 = vmatprep.subr.mxu0 0.0
    %2109 = vmatpush1.xpose.msra.mxu0 %v2106
    %2110 = vmatprep.subr.mxu0 0.0
    %2111 = vmatpush1.xpose.msra.mxu0 0.0
    %2112 = vmatprep.subr.mxu0 0.0
    %2113 = vmatpush1.xpose.msra.mxu0 0.0
    %2114 = vmatprep.subr.mxu0 0.0
    %2115 = vmatpush1.xpose.msra.mxu0 0.0
    %2116 = vmatprep.subr.mxu0 0.0
    %2117 = vmatpush1.xpose.msra.mxu0 0.0
    %2118 = vmatprep.subr.mxu0 0.0
    %2119 = vmatpush1.xpose.msra.mxu0 0.0
    %2120 = vmatprep.subr.mxu0 0.0
    %2121 = vmatpush1.xpose.msra.mxu0 0.0
    %2122 = vmatprep.subr.mxu0 0.0
    %2123 = vmatpush1.xpose.msra.mxu0 0.0
    %2124 = vmatprep.subr.mxu0 0.0
    %2125 = vmatpush1.xpose.msra.mxu0 0.0
    %2126 = vmatprep.subr.mxu0 0.0
    %2127 = vmatpush1.xpose.msra.mxu0 0.0
    %2128 = vmatprep.subr.mxu0 0.0
    %2129 = vmatpush1.xpose.msra.mxu0 0.0
    %2130 = vmatprep.subr.mxu0 0.0
    %2131 = vmatpush1.xpose.msra.mxu0 0.0
    %2132 = vmatprep.subr.mxu0 0.0
    %2133 = vmatpush1.xpose.msra.mxu0 0.0
    %2134 = vmatprep.subr.mxu0 0.0
    %2135 = vmatpush1.xpose.msra.mxu0 0.0
    %2136 = vmatprep.subr.mxu0 0.0
    %2137 = vmatpush1.xpose.msra.mxu0 0.0
    %2138 = vmatprep.subr.mxu0 0.0
    %2139 = vmatpush1.xpose.msra.mxu0 0.0
    %2140 = vmatprep.subr.mxu0 0.0
    %2141 = vmatpush1.xpose.msra.mxu0 0.0
    %2142 = vmatprep.subr.mxu0 0.0
    %2143 = vmatpush1.xpose.msra.mxu0 0.0
    %2144 = vmatprep.subr.mxu0 0.0
    %2145 = vmatpush1.xpose.msra.mxu0 0.0
    %2146 = vmatprep.subr.mxu0 0.0
    %2147 = vmatpush1.xpose.msra.mxu0 0.0
    %2148 = vmatprep.subr.mxu0 0.0
    %2149 = vmatpush1.xpose.msra.mxu0 0.0
    %2150 = vmatprep.subr.mxu0 0.0
    %2151 = vmatpush1.xpose.msra.mxu0 0.0
    %2152 = vmatprep.subr.mxu0 0.0
    %2153 = vmatpush1.xpose.msra.mxu0 0.0
    %2154 = vmatprep.subr.mxu0 0.0
    %2155 = vmatpush1.xpose.msra.mxu0 0.0
    %2156 = vmatprep.subr.mxu0 0.0
    %2157 = vmatpush1.xpose.msra.mxu0 0.0
    %2158 = vmatprep.subr.mxu0 0.0
    %2159 = vmatpush1.xpose.msra.mxu0 0.0
    %2160 = vmatprep.subr.mxu0 0.0
    %2161 = vmatpush1.xpose.msra.mxu0 0.0
    %2162 = vmatprep.subr.mxu0 0.0
    %2163 = vmatpush1.xpose.msra.mxu0 0.0
    %2164 = vmatprep.subr.mxu0 0.0
    %2165 = vmatpush1.xpose.msra.mxu0 0.0
    %2166 = vmatprep.subr.mxu0 0.0
    %2167 = vmatpush1.xpose.msra.mxu0 0.0
    %2168 = vmatprep.subr.mxu0 0.0
    %2169 = vmatpush1.xpose.msra.mxu0 0.0
    %2170 = vmatprep.subr.mxu0 0.0
    %2171 = vmatpush1.xpose.msra.mxu0 0.0
    %2172 = vmatprep.mubr.f32.mxu0 0.0
    %2173 = vmatmul.mubr.f32.gmra.mrb[0].mxu0 %v2104
    %v2174 = vpop.f32.mrb[0].mxu0
    %v2175 = vadd.f32 0.0, %v2174
    %v2176 = vpop.f32.mrb[0].mxu0
    %2177 = vdwg.mxu0
    %v2178 = vmul.f32 %v2175, 0.35355338
    %v2179 = vsel %vm98, %v2178, -inf
    %2180 = vmax.xlane.f32.xlu0 %v2179
    %v2181 = vpop.xlane.xlu0 %2180
    %v2182 = vsub.f32 %v2178, %v2181
    %v2183 = vmul.f32 %v2182, 1.442695
    %v2184 = vpow.pop %v2183
    %v2185 = vsel %vm98, %v2184, 0.0
    %2186 = vadd.xlane.f32.xlu0 %v2185
    %v2187 = vpop.xlane.xlu0 %2186
    %v2188 = vrcp.pop %v2187
    %v2189 = vmul.f32 %v2184, %v2188
    %2190 = vrot.lane.b32.xlu0 %v2008, 112
    %v2191 = vpop.permute.xlu0 %2190
    %2192 = vrot.lane.b32.xlu0 %v2008, 80
    %v2193 = vpop.permute.xlu0 %2192
    %v2194 = vsel %vm98, %v2191, 0
    %v2196 = vsel %vm98, %v2193, 0
    %2198 = vmatprep.subr.mxu0 0.0
    %2199 = vmatpush1.xpose.msra.mxu0 %v2196
    %2200 = vmatprep.subr.mxu0 0.0
    %2201 = vmatpush1.xpose.msra.mxu0 0.0
    %2202 = vmatprep.subr.mxu0 0.0
    %2203 = vmatpush1.xpose.msra.mxu0 0.0
    %2204 = vmatprep.subr.mxu0 0.0
    %2205 = vmatpush1.xpose.msra.mxu0 0.0
    %2206 = vmatprep.subr.mxu0 0.0
    %2207 = vmatpush1.xpose.msra.mxu0 0.0
    %2208 = vmatprep.subr.mxu0 0.0
    %2209 = vmatpush1.xpose.msra.mxu0 0.0
    %2210 = vmatprep.subr.mxu0 0.0
    %2211 = vmatpush1.xpose.msra.mxu0 0.0
    %2212 = vmatprep.subr.mxu0 0.0
    %2213 = vmatpush1.xpose.msra.mxu0 0.0
    %2214 = vmatprep.subr.mxu0 0.0
    %2215 = vmatpush1.xpose.msra.mxu0 0.0
    %2216 = vmatprep.subr.mxu0 0.0
    %2217 = vmatpush1.xpose.msra.mxu0 0.0
    %2218 = vmatprep.subr.mxu0 0.0
    %2219 = vmatpush1.xpose.msra.mxu0 0.0
    %2220 = vmatprep.subr.mxu0 0.0
    %2221 = vmatpush1.xpose.msra.mxu0 0.0
    %2222 = vmatprep.subr.mxu0 0.0
    %2223 = vmatpush1.xpose.msra.mxu0 0.0
    %2224 = vmatprep.subr.mxu0 0.0
    %2225 = vmatpush1.xpose.msra.mxu0 0.0
    %2226 = vmatprep.subr.mxu0 0.0
    %2227 = vmatpush1.xpose.msra.mxu0 0.0
    %2228 = vmatprep.subr.mxu0 0.0
    %2229 = vmatpush1.xpose.msra.mxu0 0.0
    %2230 = vmatprep.subr.mxu0 0.0
    %2231 = vmatpush1.xpose.msra.mxu0 0.0
    %2232 = vmatprep.subr.mxu0 0.0
    %2233 = vmatpush1.xpose.msra.mxu0 0.0
    %2234 = vmatprep.subr.mxu0 0.0
    %2235 = vmatpush1.xpose.msra.mxu0 0.0
    %2236 = vmatprep.subr.mxu0 0.0
    %2237 = vmatpush1.xpose.msra.mxu0 0.0
    %2238 = vmatprep.subr.mxu0 0.0
    %2239 = vmatpush1.xpose.msra.mxu0 0.0
    %2240 = vmatprep.subr.mxu0 0.0
    %2241 = vmatpush1.xpose.msra.mxu0 0.0
    %2242 = vmatprep.subr.mxu0 0.0
    %2243 = vmatpush1.xpose.msra.mxu0 0.0
    %2244 = vmatprep.subr.mxu0 0.0
    %2245 = vmatpush1.xpose.msra.mxu0 0.0
    %2246 = vmatprep.subr.mxu0 0.0
    %2247 = vmatpush1.xpose.msra.mxu0 0.0
    %2248 = vmatprep.subr.mxu0 0.0
    %2249 = vmatpush1.xpose.msra.mxu0 0.0
    %2250 = vmatprep.subr.mxu0 0.0
    %2251 = vmatpush1.xpose.msra.mxu0 0.0
    %2252 = vmatprep.subr.mxu0 0.0
    %2253 = vmatpush1.xpose.msra.mxu0 0.0
    %2254 = vmatprep.subr.mxu0 0.0
    %2255 = vmatpush1.xpose.msra.mxu0 0.0
    %2256 = vmatprep.subr.mxu0 0.0
    %2257 = vmatpush1.xpose.msra.mxu0 0.0
    %2258 = vmatprep.subr.mxu0 0.0
    %2259 = vmatpush1.xpose.msra.mxu0 0.0
    %2260 = vmatprep.subr.mxu0 0.0
    %2261 = vmatpush1.xpose.msra.mxu0 0.0
    %2262 = vmatprep.mubr.f32.mxu0 0.0
    %2263 = vmatmul.mubr.f32.gmra.mrb[0].mxu0 %v2194
    %v2264 = vpop.f32.mrb[0].mxu0
    %v2265 = vadd.f32 0.0, %v2264
    %v2266 = vpop.f32.mrb[0].mxu0
    %2267 = vdwg.mxu0
    %v2268 = vmul.f32 %v2265, 0.35355338
    %v2269 = vsel %vm98, %v2268, -inf
    %2270 = vmax.xlane.f32.xlu0 %v2269
    %v2271 = vpop.xlane.xlu0 %2270
    %v2272 = vsub.f32 %v2268, %v2271
    %v2273 = vmul.f32 %v2272, 1.442695
    %v2274 = vpow.pop %v2273
    %v2275 = vsel %vm98, %v2274, 0.0
    %2276 = vadd.xlane.f32.xlu0 %v2275
    %v2277 = vpop.xlane.xlu0 %2276
    %v2278 = vrcp.pop %v2277
    %v2279 = vmul.f32 %v2274, %v2278
    %2280 = vrot.lane.b32.xlu0 %v2008, 104
    %v2281 = vpop.permute.xlu0 %2280
    %2282 = vrot.lane.b32.xlu0 %v2008, 72
    %v2283 = vpop.permute.xlu0 %2282
    %v2284 = vsel %vm98, %v2281, 0
    %v2286 = vsel %vm98, %v2283, 0
    %2288 = vmatprep.subr.mxu0 0.0
    %2289 = vmatpush1.xpose.msra.mxu0 %v2286
    %2290 = vmatprep.subr.mxu0 0.0
    %2291 = vmatpush1.xpose.msra.mxu0 0.0
    %2292 = vmatprep.subr.mxu0 0.0
    %2293 = vmatpush1.xpose.msra.mxu0 0.0
    %2294 = vmatprep.subr.mxu0 0.0
    %2295 = vmatpush1.xpose.msra.mxu0 0.0
    %2296 = vmatprep.subr.mxu0 0.0
    %2297 = vmatpush1.xpose.msra.mxu0 0.0
    %2298 = vmatprep.subr.mxu0 0.0
    %2299 = vmatpush1.xpose.msra.mxu0 0.0
    %2300 = vmatprep.subr.mxu0 0.0
    %2301 = vmatpush1.xpose.msra.mxu0 0.0
    %2302 = vmatprep.subr.mxu0 0.0
    %2303 = vmatpush1.xpose.msra.mxu0 0.0
    %2304 = vmatprep.subr.mxu0 0.0
    %2305 = vmatpush1.xpose.msra.mxu0 0.0
    %2306 = vmatprep.subr.mxu0 0.0
    %2307 = vmatpush1.xpose.msra.mxu0 0.0
    %2308 = vmatprep.subr.mxu0 0.0
    %2309 = vmatpush1.xpose.msra.mxu0 0.0
    %2310 = vmatprep.subr.mxu0 0.0
    %2311 = vmatpush1.xpose.msra.mxu0 0.0
    %2312 = vmatprep.subr.mxu0 0.0
    %2313 = vmatpush1.xpose.msra.mxu0 0.0
    %2314 = vmatprep.subr.mxu0 0.0
    %2315 = vmatpush1.xpose.msra.mxu0 0.0
    %2316 = vmatprep.subr.mxu0 0.0
    %2317 = vmatpush1.xpose.msra.mxu0 0.0
    %2318 = vmatprep.subr.mxu0 0.0
    %2319 = vmatpush1.xpose.msra.mxu0 0.0
    %2320 = vmatprep.subr.mxu0 0.0
    %2321 = vmatpush1.xpose.msra.mxu0 0.0
    %2322 = vmatprep.subr.mxu0 0.0
    %2323 = vmatpush1.xpose.msra.mxu0 0.0
    %2324 = vmatprep.subr.mxu0 0.0
    %2325 = vmatpush1.xpose.msra.mxu0 0.0
    %2326 = vmatprep.subr.mxu0 0.0
    %2327 = vmatpush1.xpose.msra.mxu0 0.0
    %2328 = vmatprep.subr.mxu0 0.0
    %2329 = vmatpush1.xpose.msra.mxu0 0.0
    %2330 = vmatprep.subr.mxu0 0.0
    %2331 = vmatpush1.xpose.msra.mxu0 0.0
    %2332 = vmatprep.subr.mxu0 0.0
    %2333 = vmatpush1.xpose.msra.mxu0 0.0
    %2334 = vmatprep.subr.mxu0 0.0
    %2335 = vmatpush1.xpose.msra.mxu0 0.0
    %2336 = vmatprep.subr.mxu0 0.0
    %2337 = vmatpush1.xpose.msra.mxu0 0.0
    %2338 = vmatprep.subr.mxu0 0.0
    %2339 = vmatpush1.xpose.msra.mxu0 0.0
    %2340 = vmatprep.subr.mxu0 0.0
    %2341 = vmatpush1.xpose.msra.mxu0 0.0
    %2342 = vmatprep.subr.mxu0 0.0
    %2343 = vmatpush1.xpose.msra.mxu0 0.0
    %2344 = vmatprep.subr.mxu0 0.0
    %2345 = vmatpush1.xpose.msra.mxu0 0.0
    %2346 = vmatprep.subr.mxu0 0.0
    %2347 = vmatpush1.xpose.msra.mxu0 0.0
    %2348 = vmatprep.subr.mxu0 0.0
    %2349 = vmatpush1.xpose.msra.mxu0 0.0
    %2350 = vmatprep.subr.mxu0 0.0
    %2351 = vmatpush1.xpose.msra.mxu0 0.0
    %2352 = vmatprep.mubr.f32.mxu0 0.0
    %2353 = vmatmul.mubr.f32.gmra.mrb[0].mxu0 %v2284
    %v2354 = vpop.f32.mrb[0].mxu0
    %v2355 = vadd.f32 0.0, %v2354
    %v2356 = vpop.f32.mrb[0].mxu0
    %2357 = vdwg.mxu0
    %v2358 = vmul.f32 %v2355, 0.35355338
    %v2359 = vsel %vm98, %v2358, -inf
    %2360 = vmax.xlane.f32.xlu0 %v2359
    %v2361 = vpop.xlane.xlu0 %2360
    %v2362 = vsub.f32 %v2358, %v2361
    %v2363 = vmul.f32 %v2362, 1.442695
    %v2364 = vpow.pop %v2363
    %v2365 = vsel %vm98, %v2364, 0.0
    %2366 = vadd.xlane.f32.xlu0 %v2365
    %v2367 = vpop.xlane.xlu0 %2366
    %v2368 = vrcp.pop %v2367
    %v2369 = vmul.f32 %v2364, %v2368
    %2374 = vrot.lane.b32.xlu0 %v1933, 64
    %v2375 = vpop.permute.xlu0 %2374
    %2376 = vrot.lane.b32.xlu0 %v1934, 64
    %v2377 = vpop.permute.xlu0 %2376
    %2378 = vrot.lane.b32.xlu0 %v1935, 64
    %v2379 = vpop.permute.xlu0 %2378
    %2380 = vrot.lane.b32.xlu0 %v1936, 64
    %v2381 = vpop.permute.xlu0 %2380
    %2387 = vrot.lane.b32.xlu0 %v1937, 64
    %v2388 = vpop.permute.xlu0 %2387
    %2390 = vmatprep.subr.mxu0 0.0
    %2391 = vmatpush1.msra.mxu0 %v2375
    %2392 = vmatprep.subr.mxu0 0.0
    %2393 = vmatpush1.msra.mxu0 %v2377
    %2394 = vmatprep.subr.mxu0 0.0
    %2395 = vmatpush1.msra.mxu0 %v2379
    %2396 = vmatprep.subr.mxu0 0.0
    %2397 = vmatpush1.msra.mxu0 %v2381
    %2398 = vmatprep.subr.mxu0 0.0
    %2399 = vmatpush1.msra.mxu0 0.0
    %2400 = vmatprep.subr.mxu0 0.0
    %2401 = vmatpush1.msra.mxu0 0.0
    %2402 = vmatprep.subr.mxu0 0.0
    %2403 = vmatpush1.msra.mxu0 0.0
    %2404 = vmatprep.subr.mxu0 0.0
    %2405 = vmatpush1.msra.mxu0 0.0
    %2406 = vmatprep.subr.mxu0 0.0
    %2407 = vmatpush1.msra.mxu0 0.0
    %2408 = vmatprep.subr.mxu0 0.0
    %2409 = vmatpush1.msra.mxu0 0.0
    %2410 = vmatprep.subr.mxu0 0.0
    %2411 = vmatpush1.msra.mxu0 0.0
    %2412 = vmatprep.subr.mxu0 0.0
    %2413 = vmatpush1.msra.mxu0 0.0
    %2414 = vmatprep.subr.mxu0 0.0
    %2415 = vmatpush1.msra.mxu0 0.0
    %2416 = vmatprep.subr.mxu0 0.0
    %2417 = vmatpush1.msra.mxu0 0.0
    %2418 = vmatprep.subr.mxu0 0.0
    %2419 = vmatpush1.msra.mxu0 0.0
    %2420 = vmatprep.subr.mxu0 0.0
    %2421 = vmatpush1.msra.mxu0 0.0
    %2422 = vmatprep.subr.mxu0 0.0
    %2423 = vmatpush1.msra.mxu0 0.0
    %2424 = vmatprep.subr.mxu0 0.0
    %2425 = vmatpush1.msra.mxu0 0.0
    %2426 = vmatprep.subr.mxu0 0.0
    %2427 = vmatpush1.msra.mxu0 0.0
    %2428 = vmatprep.subr.mxu0 0.0
    %2429 = vmatpush1.msra.mxu0 0.0
    %2430 = vmatprep.subr.mxu0 0.0
    %2431 = vmatpush1.msra.mxu0 0.0
    %2432 = vmatprep.subr.mxu0 0.0
    %2433 = vmatpush1.msra.mxu0 0.0
    %2434 = vmatprep.subr.mxu0 0.0
    %2435 = vmatpush1.msra.mxu0 0.0
    %2436 = vmatprep.subr.mxu0 0.0
    %2437 = vmatpush1.msra.mxu0 0.0
    %2438 = vmatprep.subr.mxu0 0.0
    %2439 = vmatpush1.msra.mxu0 0.0
    %2440 = vmatprep.subr.mxu0 0.0
    %2441 = vmatpush1.msra.mxu0 0.0
    %2442 = vmatprep.subr.mxu0 0.0
    %2443 = vmatpush1.msra.mxu0 0.0
    %2444 = vmatprep.subr.mxu0 0.0
    %2445 = vmatpush1.msra.mxu0 0.0
    %2446 = vmatprep.subr.mxu0 0.0
    %2447 = vmatpush1.msra.mxu0 0.0
    %2448 = vmatprep.subr.mxu0 0.0
    %2449 = vmatpush1.msra.mxu0 0.0
    %2450 = vmatprep.subr.mxu0 0.0
    %2451 = vmatpush1.msra.mxu0 0.0
    %2452 = vmatprep.subr.mxu0 0.0
    %2453 = vmatpush1.msra.mxu0 0.0
    %2454 = vmatprep.mubr.f32.mxu0 0.0
    %2455 = vmatmul.mubr.f32.gmra.mrb[0].mxu0 %v23
    %v2456 = vpop.f32.mrb[0].mxu0
    %v2457 = vadd.f32 %v2388, %v2456
    %v2458 = vpop.f32.mrb[0].mxu0
    %2459 = vdwg.mxu0
    %v2461 = vsel %vm98, %v2099, 0
    %2463 = vmatprep.subr.mxu0 0.0
    %2464 = vmatpush1.msra.mxu0 %v2457
    %2465 = vmatprep.subr.mxu0 0.0
    %2466 = vmatpush1.msra.mxu0 0.0
    %2467 = vmatprep.subr.mxu0 0.0
    %2468 = vmatpush1.msra.mxu0 0.0
    %2469 = vmatprep.subr.mxu0 0.0
    %2470 = vmatpush1.msra.mxu0 0.0
    %2471 = vmatprep.subr.mxu0 0.0
    %2472 = vmatpush1.msra.mxu0 0.0
    %2473 = vmatprep.subr.mxu0 0.0
    %2474 = vmatpush1.msra.mxu0 0.0
    %2475 = vmatprep.subr.mxu0 0.0
    %2476 = vmatpush1.msra.mxu0 0.0
    %2477 = vmatprep.subr.mxu0 0.0
    %2478 = vmatpush1.msra.mxu0 0.0
    %2479 = vmatprep.subr.mxu0 0.0
    %2480 = vmatpush1.msra.mxu0 0.0
    %2481 = vmatprep.subr.mxu0 0.0
    %2482 = vmatpush1.msra.mxu0 0.0
    %2483 = vmatprep.subr.mxu0 0.0
    %2484 = vmatpush1.msra.mxu0 0.0
    %2485 = vmatprep.subr.mxu0 0.0
    %2486 = vmatpush1.msra.mxu0 0.0
    %2487 = vmatprep.subr.mxu0 0.0
    %2488 = vmatpush1.msra.mxu0 0.0
    %2489 = vmatprep.subr.mxu0 0.0
    %2490 = vmatpush1.msra.mxu0 0.0
    %2491 = vmatprep.subr.mxu0 0.0
    %2492 = vmatpush1.msra.mxu0 0.0
    %2493 = vmatprep.subr.mxu0 0.0
    %2494 = vmatpush1.msra.mxu0 0.0
    %2495 = vmatprep.subr.mxu0 0.0
    %2496 = vmatpush1.msra.mxu0 0.0
    %2497 = vmatprep.subr.mxu0 0.0
    %2498 = vmatpush1.msra.mxu0 0.0
    %2499 = vmatprep.subr.mxu0 0.0
    %2500 = vmatpush1.msra.mxu0 0.0
    %2501 = vmatprep.subr.mxu0 0.0
    %2502 = vmatpush1.msra.mxu0 0.0
    %2503 = vmatprep.subr.mxu0 0.0
    %2504 = vmatpush1.msra.mxu0 0.0
    %2505 = vmatprep.subr.mxu0 0.0
    %2506 = vmatpush1.msra.mxu0 0.0
    %2507 = vmatprep.subr.mxu0 0.0
    %2508 = vmatpush1.msra.mxu0 0.0
    %2509 = vmatprep.subr.mxu0 0.0
    %2510 = vmatpush1.msra.mxu0 0.0
    %2511 = vmatprep.subr.mxu0 0.0
    %2512 = vmatpush1.msra.mxu0 0.0
    %2513 = vmatprep.subr.mxu0 0.0
    %2514 = vmatpush1.msra.mxu0 0.0
    %2515 = vmatprep.subr.mxu0 0.0
    %2516 = vmatpush1.msra.mxu0 0.0
    %2517 = vmatprep.subr.mxu0 0.0
    %2518 = vmatpush1.msra.mxu0 0.0
    %2519 = vmatprep.subr.mxu0 0.0
    %2520 = vmatpush1.msra.mxu0 0.0
    %2521 = vmatprep.subr.mxu0 0.0
    %2522 = vmatpush1.msra.mxu0 0.0
    %2523 = vmatprep.subr.mxu0 0.0
    %2524 = vmatpush1.msra.mxu0 0.0
    %2525 = vmatprep.subr.mxu0 0.0
    %2526 = vmatpush1.msra.mxu0 0.0
    %2527 = vmatprep.mubr.f32.mxu0 0.0
    %2528 = vmatmul.mubr.f32.gmra.mrb[0].mxu0 %v2461
    %v2529 = vpop.f32.mrb[0].mxu0
    %v2530 = vadd.f32 0.0, %v2529
    %v2531 = vpop.f32.mrb[0].mxu0
    %2532 = vdwg.mxu0
    %2533 = vst.msk [vmem:[#allocation2] sm:$0xff] %vm98, %v2530
    %2535 = vrot.lane.b32.xlu0 %v2457, 120
    %v2536 = vpop.permute.xlu0 %2535
    %v2539 = vsel %vm98, %v2189, 0
    %2541 = vmatprep.subr.mxu0 0.0
    %2542 = vmatpush1.msra.mxu0 %v2536
    %2543 = vmatprep.subr.mxu0 0.0
    %2544 = vmatpush1.msra.mxu0 0.0
    %2545 = vmatprep.subr.mxu0 0.0
    %2546 = vmatpush1.msra.mxu0 0.0
    %2547 = vmatprep.subr.mxu0 0.0
    %2548 = vmatpush1.msra.mxu0 0.0
    %2549 = vmatprep.subr.mxu0 0.0
    %2550 = vmatpush1.msra.mxu0 0.0
    %2551 = vmatprep.subr.mxu0 0.0
    %2552 = vmatpush1.msra.mxu0 0.0
    %2553 = vmatprep.subr.mxu0 0.0
    %2554 = vmatpush1.msra.mxu0 0.0
    %2555 = vmatprep.subr.mxu0 0.0
    %2556 = vmatpush1.msra.mxu0 0.0
    %2557 = vmatprep.subr.mxu0 0.0
    %2558 = vmatpush1.msra.mxu0 0.0
    %2559 = vmatprep.subr.mxu0 0.0
    %2560 = vmatpush1.msra.mxu0 0.0
    %2561 = vmatprep.subr.mxu0 0.0
    %2562 = vmatpush1.msra.mxu0 0.0
    %2563 = vmatprep.subr.mxu0 0.0
    %2564 = vmatpush1.msra.mxu0 0.0
    %2565 = vmatprep.subr.mxu0 0.0
    %2566 = vmatpush1.msra.mxu0 0.0
    %2567 = vmatprep.subr.mxu0 0.0
    %2568 = vmatpush1.msra.mxu0 0.0
    %2569 = vmatprep.subr.mxu0 0.0
    %2570 = vmatpush1.msra.mxu0 0.0
    %2571 = vmatprep.subr.mxu0 0.0
    %2572 = vmatpush1.msra.mxu0 0.0
    %2573 = vmatprep.subr.mxu0 0.0
    %2574 = vmatpush1.msra.mxu0 0.0
    %2575 = vmatprep.subr.mxu0 0.0
    %2576 = vmatpush1.msra.mxu0 0.0
    %2577 = vmatprep.subr.mxu0 0.0
    %2578 = vmatpush1.msra.mxu0 0.0
    %2579 = vmatprep.subr.mxu0 0.0
    %2580 = vmatpush1.msra.mxu0 0.0
    %2581 = vmatprep.subr.mxu0 0.0
    %2582 = vmatpush1.msra.mxu0 0.0
    %2583 = vmatprep.subr.mxu0 0.0
    %2584 = vmatpush1.msra.mxu0 0.0
    %2585 = vmatprep.subr.mxu0 0.0
    %2586 = vmatpush1.msra.mxu0 0.0
    %2587 = vmatprep.subr.mxu0 0.0
    %2588 = vmatpush1.msra.mxu0 0.0
    %2589 = vmatprep.subr.mxu0 0.0
    %2590 = vmatpush1.msra.mxu0 0.0
    %2591 = vmatprep.subr.mxu0 0.0
    %2592 = vmatpush1.msra.mxu0 0.0
    %2593 = vmatprep.subr.mxu0 0.0
    %2594 = vmatpush1.msra.mxu0 0.0
    %2595 = vmatprep.subr.mxu0 0.0
    %2596 = vmatpush1.msra.mxu0 0.0
    %2597 = vmatprep.subr.mxu0 0.0
    %2598 = vmatpush1.msra.mxu0 0.0
    %2599 = vmatprep.subr.mxu0 0.0
    %2600 = vmatpush1.msra.mxu0 0.0
    %2601 = vmatprep.subr.mxu0 0.0
    %2602 = vmatpush1.msra.mxu0 0.0
    %2603 = vmatprep.subr.mxu0 0.0
    %2604 = vmatpush1.msra.mxu0 0.0
    %2605 = vmatprep.mubr.f32.mxu0 0.0
    %2606 = vmatmul.mubr.f32.gmra.mrb[0].mxu0 %v2539
    %v2607 = vpop.f32.mrb[0].mxu0
    %v2608 = vadd.f32 0.0, %v2607
    %v2609 = vpop.f32.mrb[0].mxu0
    %2610 = vdwg.mxu0
    %2612 = vrot.lane.b32.xlu0 %v2608, 8
    %v2613 = vpop.permute.xlu0 %2612
    %2615 = vst.msk [vmem:[#allocation2] sm:$0xff] %vm612, %v2613
    %2616 = vrot.lane.b32.xlu0 %v2457, 112
    %v2617 = vpop.permute.xlu0 %2616
    %v2620 = vsel %vm98, %v2279, 0
    %2622 = vmatprep.subr.mxu0 0.0
    %2623 = vmatpush1.msra.mxu0 %v2617
    %2624 = vmatprep.subr.mxu0 0.0
    %2625 = vmatpush1.msra.mxu0 0.0
    %2626 = vmatprep.subr.mxu0 0.0
    %2627 = vmatpush1.msra.mxu0 0.0
    %2628 = vmatprep.subr.mxu0 0.0
    %2629 = vmatpush1.msra.mxu0 0.0
    %2630 = vmatprep.subr.mxu0 0.0
    %2631 = vmatpush1.msra.mxu0 0.0
    %2632 = vmatprep.subr.mxu0 0.0
    %2633 = vmatpush1.msra.mxu0 0.0
    %2634 = vmatprep.subr.mxu0 0.0
    %2635 = vmatpush1.msra.mxu0 0.0
    %2636 = vmatprep.subr.mxu0 0.0
    %2637 = vmatpush1.msra.mxu0 0.0
    %2638 = vmatprep.subr.mxu0 0.0
    %2639 = vmatpush1.msra.mxu0 0.0
    %2640 = vmatprep.subr.mxu0 0.0
    %2641 = vmatpush1.msra.mxu0 0.0
    %2642 = vmatprep.subr.mxu0 0.0
    %2643 = vmatpush1.msra.mxu0 0.0
    %2644 = vmatprep.subr.mxu0 0.0
    %2645 = vmatpush1.msra.mxu0 0.0
    %2646 = vmatprep.subr.mxu0 0.0
    %2647 = vmatpush1.msra.mxu0 0.0
    %2648 = vmatprep.subr.mxu0 0.0
    %2649 = vmatpush1.msra.mxu0 0.0
    %2650 = vmatprep.subr.mxu0 0.0
    %2651 = vmatpush1.msra.mxu0 0.0
    %2652 = vmatprep.subr.mxu0 0.0
    %2653 = vmatpush1.msra.mxu0 0.0
    %2654 = vmatprep.subr.mxu0 0.0
    %2655 = vmatpush1.msra.mxu0 0.0
    %2656 = vmatprep.subr.mxu0 0.0
    %2657 = vmatpush1.msra.mxu0 0.0
    %2658 = vmatprep.subr.mxu0 0.0
    %2659 = vmatpush1.msra.mxu0 0.0
    %2660 = vmatprep.subr.mxu0 0.0
    %2661 = vmatpush1.msra.mxu0 0.0
    %2662 = vmatprep.subr.mxu0 0.0
    %2663 = vmatpush1.msra.mxu0 0.0
    %2664 = vmatprep.subr.mxu0 0.0
    %2665 = vmatpush1.msra.mxu0 0.0
    %2666 = vmatprep.subr.mxu0 0.0
    %2667 = vmatpush1.msra.mxu0 0.0
    %2668 = vmatprep.subr.mxu0 0.0
    %2669 = vmatpush1.msra.mxu0 0.0
    %2670 = vmatprep.subr.mxu0 0.0
    %2671 = vmatpush1.msra.mxu0 0.0
    %2672 = vmatprep.subr.mxu0 0.0
    %2673 = vmatpush1.msra.mxu0 0.0
    %2674 = vmatprep.subr.mxu0 0.0
    %2675 = vmatpush1.msra.mxu0 0.0
    %2676 = vmatprep.subr.mxu0 0.0
    %2677 = vmatpush1.msra.mxu0 0.0
    %2678 = vmatprep.subr.mxu0 0.0
    %2679 = vmatpush1.msra.mxu0 0.0
    %2680 = vmatprep.subr.mxu0 0.0
    %2681 = vmatpush1.msra.mxu0 0.0
    %2682 = vmatprep.subr.mxu0 0.0
    %2683 = vmatpush1.msra.mxu0 0.0
    %2684 = vmatprep.subr.mxu0 0.0
    %2685 = vmatpush1.msra.mxu0 0.0
    %2686 = vmatprep.mubr.f32.mxu0 0.0
    %2687 = vmatmul.mubr.f32.gmra.mrb[0].mxu0 %v2620
    %v2688 = vpop.f32.mrb[0].mxu0
    %v2689 = vadd.f32 0.0, %v2688
    %v2690 = vpop.f32.mrb[0].mxu0
    %2691 = vdwg.mxu0
    %2693 = vrot.lane.b32.xlu0 %v2689, 16
    %v2694 = vpop.permute.xlu0 %2693
    %2696 = vst.msk [vmem:[#allocation2] sm:$0xff] %vm694, %v2694
    %2697 = vrot.lane.b32.xlu0 %v2457, 104
    %v2698 = vpop.permute.xlu0 %2697
    %v2701 = vsel %vm98, %v2369, 0
    %2703 = vmatprep.subr.mxu0 0.0
    %2704 = vmatpush1.msra.mxu0 %v2698
    %2705 = vmatprep.subr.mxu0 0.0
    %2706 = vmatpush1.msra.mxu0 0.0
    %2707 = vmatprep.subr.mxu0 0.0
    %2708 = vmatpush1.msra.mxu0 0.0
    %2709 = vmatprep.subr.mxu0 0.0
    %2710 = vmatpush1.msra.mxu0 0.0
    %2711 = vmatprep.subr.mxu0 0.0
    %2712 = vmatpush1.msra.mxu0 0.0
    %2713 = vmatprep.subr.mxu0 0.0
    %2714 = vmatpush1.msra.mxu0 0.0
    %2715 = vmatprep.subr.mxu0 0.0
    %2716 = vmatpush1.msra.mxu0 0.0
    %2717 = vmatprep.subr.mxu0 0.0
    %2718 = vmatpush1.msra.mxu0 0.0
    %2719 = vmatprep.subr.mxu0 0.0
    %2720 = vmatpush1.msra.mxu0 0.0
    %2721 = vmatprep.subr.mxu0 0.0
    %2722 = vmatpush1.msra.mxu0 0.0
    %2723 = vmatprep.subr.mxu0 0.0
    %2724 = vmatpush1.msra.mxu0 0.0
    %2725 = vmatprep.subr.mxu0 0.0
    %2726 = vmatpush1.msra.mxu0 0.0
    %2727 = vmatprep.subr.mxu0 0.0
    %2728 = vmatpush1.msra.mxu0 0.0
    %2729 = vmatprep.subr.mxu0 0.0
    %2730 = vmatpush1.msra.mxu0 0.0
    %2731 = vmatprep.subr.mxu0 0.0
    %2732 = vmatpush1.msra.mxu0 0.0
    %2733 = vmatprep.subr.mxu0 0.0
    %2734 = vmatpush1.msra.mxu0 0.0
    %2735 = vmatprep.subr.mxu0 0.0
    %2736 = vmatpush1.msra.mxu0 0.0
    %2737 = vmatprep.subr.mxu0 0.0
    %2738 = vmatpush1.msra.mxu0 0.0
    %2739 = vmatprep.subr.mxu0 0.0
    %2740 = vmatpush1.msra.mxu0 0.0
    %2741 = vmatprep.subr.mxu0 0.0
    %2742 = vmatpush1.msra.mxu0 0.0
    %2743 = vmatprep.subr.mxu0 0.0
    %2744 = vmatpush1.msra.mxu0 0.0
    %2745 = vmatprep.subr.mxu0 0.0
    %2746 = vmatpush1.msra.mxu0 0.0
    %2747 = vmatprep.subr.mxu0 0.0
    %2748 = vmatpush1.msra.mxu0 0.0
    %2749 = vmatprep.subr.mxu0 0.0
    %2750 = vmatpush1.msra.mxu0 0.0
    %2751 = vmatprep.subr.mxu0 0.0
    %2752 = vmatpush1.msra.mxu0 0.0
    %2753 = vmatprep.subr.mxu0 0.0
    %2754 = vmatpush1.msra.mxu0 0.0
    %2755 = vmatprep.subr.mxu0 0.0
    %2756 = vmatpush1.msra.mxu0 0.0
    %2757 = vmatprep.subr.mxu0 0.0
    %2758 = vmatpush1.msra.mxu0 0.0
    %2759 = vmatprep.subr.mxu0 0.0
    %2760 = vmatpush1.msra.mxu0 0.0
    %2761 = vmatprep.subr.mxu0 0.0
    %2762 = vmatpush1.msra.mxu0 0.0
    %2763 = vmatprep.subr.mxu0 0.0
    %2764 = vmatpush1.msra.mxu0 0.0
    %2765 = vmatprep.subr.mxu0 0.0
    %2766 = vmatpush1.msra.mxu0 0.0
    %2767 = vmatprep.mubr.f32.mxu0 0.0
    %2768 = vmatmul.mubr.f32.gmra.mrb[0].mxu0 %v2701
    %v2769 = vpop.f32.mrb[0].mxu0
    %v2770 = vadd.f32 0.0, %v2769
    %v2771 = vpop.f32.mrb[0].mxu0
    %2772 = vdwg.mxu0
    %2774 = vrot.lane.b32.xlu0 %v2770, 24
    %v2775 = vpop.permute.xlu0 %2774
    %2777 = vst.msk [vmem:[#allocation2] sm:$0xff] %vm776, %v2775
    %v2778 = vld [vmem:[#allocation2] sm:$0xff]
    %v2779 = vadd.f32 %v2778, %v15
    %v2780 = vsel %vm21, %v2779, 0.0
    %2781 = vadd.xlane.f32.xlu0 %v2780
    %v2782 = vpop.xlane.xlu0 %2781
    %v2783 = vmul.f32 %v2782, %v783
    %v2784 = vmul.f32 %v2779, %v2779
    %v2785 = vsel %vm21, %v2784, 0.0
    %2786 = vadd.xlane.f32.xlu0 %v2785
    %v2787 = vpop.xlane.xlu0 %2786
    %v2788 = vmul.f32 %v2787, %v783
    %v2789 = vmul.f32 %v2783, %v2783
    %v2790 = vsub.f32 %v2788, %v2789
    %v2791 = vsub.f32 %v2779, %v2783
    %v2792 = vadd.f32 %v2790, 1e-05
    %v2793 = vrsqrt.pop %v2792
    %v2794 = vmul.f32 %v2791, %v2793
    %v2795 = vld [vmem:[%s1 + $0x10] sm:$0xff]
    %v2796 = vld [vmem:[%s1 + $0x28] sm:$0xff]
    %v2797 = vld [vmem:[%s1 + $0x40] sm:$0xff]
    %v2798 = vld [vmem:[%s1 + $0x58] sm:$0xff]
    %v2799 = vld [vmem:[%s1 + $0x70] ss:$0 sm:$0xff]
    %2804 = vrot.lane.b32.xlu0 %v2795, 64
    %v2805 = vpop.permute.xlu0 %2804
    %2806 = vrot.lane.b32.xlu0 %v2796, 64
    %v2807 = vpop.permute.xlu0 %2806
    %2808 = vrot.lane.b32.xlu0 %v2797, 64
    %v2809 = vpop.permute.xlu0 %2808
    %2810 = vrot.lane.b32.xlu0 %v2798, 64
    %v2811 = vpop.permute.xlu0 %2810
    %2817 = vrot.lane.b32.xlu0 %v2799, 64
    %v2818 = vpop.permute.xlu0 %2817
    %v2821 = vsel %vm21, %v2794, 0
    %2823 = vmatprep.subr.mxu0 0.0
    %2824 = vmatpush1.msra.mxu0 %v2805
    %2825 = vmatprep.subr.mxu0 0.0
    %2826 = vmatpush1.msra.mxu0 %v2807
    %2827 = vmatprep.subr.mxu0 0.0
    %2828 = vmatpush1.msra.mxu0 %v2809
    %2829 = vmatprep.subr.mxu0 0.0
    %2830 = vmatpush1.msra.mxu0 %v2811
    %2831 = vmatprep.subr.mxu0 0.0
    %2832 = vmatpush1.msra.mxu0 0.0
    %2833 = vmatprep.subr.mxu0 0.0
    %2834 = vmatpush1.msra.mxu0 0.0
    %2835 = vmatprep.subr.mxu0 0.0
    %2836 = vmatpush1.msra.mxu0 0.0
    %2837 = vmatprep.subr.mxu0 0.0
    %2838 = vmatpush1.msra.mxu0 0.0
    %2839 = vmatprep.subr.mxu0 0.0
    %2840 = vmatpush1.msra.mxu0 0.0
    %2841 = vmatprep.subr.mxu0 0.0
    %2842 = vmatpush1.msra.mxu0 0.0
    %2843 = vmatprep.subr.mxu0 0.0
    %2844 = vmatpush1.msra.mxu0 0.0
    %2845 = vmatprep.subr.mxu0 0.0
    %2846 = vmatpush1.msra.mxu0 0.0
    %2847 = vmatprep.subr.mxu0 0.0
    %2848 = vmatpush1.msra.mxu0 0.0
    %2849 = vmatprep.subr.mxu0 0.0
    %2850 = vmatpush1.msra.mxu0 0.0
    %2851 = vmatprep.subr.mxu0 0.0
    %2852 = vmatpush1.msra.mxu0 0.0
    %2853 = vmatprep.subr.mxu0 0.0
    %2854 = vmatpush1.msra.mxu0 0.0
    %2855 = vmatprep.subr.mxu0 0.0
    %2856 = vmatpush1.msra.mxu0 0.0
    %2857 = vmatprep.subr.mxu0 0.0
    %2858 = vmatpush1.msra.mxu0 0.0
    %2859 = vmatprep.subr.mxu0 0.0
    %2860 = vmatpush1.msra.mxu0 0.0
    %2861 = vmatprep.subr.mxu0 0.0
    %2862 = vmatpush1.msra.mxu0 0.0
    %2863 = vmatprep.subr.mxu0 0.0
    %2864 = vmatpush1.msra.mxu0 0.0
    %2865 = vmatprep.subr.mxu0 0.0
    %2866 = vmatpush1.msra.mxu0 0.0
    %2867 = vmatprep.subr.mxu0 0.0
    %2868 = vmatpush1.msra.mxu0 0.0
    %2869 = vmatprep.subr.mxu0 0.0
    %2870 = vmatpush1.msra.mxu0 0.0
    %2871 = vmatprep.subr.mxu0 0.0
    %2872 = vmatpush1.msra.mxu0 0.0
    %2873 = vmatprep.subr.mxu0 0.0
    %2874 = vmatpush1.msra.mxu0 0.0
    %2875 = vmatprep.subr.mxu0 0.0
    %2876 = vmatpush1.msra.mxu0 0.0
    %2877 = vmatprep.subr.mxu0 0.0
    %2878 = vmatpush1.msra.mxu0 0.0
    %2879 = vmatprep.subr.mxu0 0.0
    %2880 = vmatpush1.msra.mxu0 0.0
    %2881 = vmatprep.subr.mxu0 0.0
    %2882 = vmatpush1.msra.mxu0 0.0
    %2883 = vmatprep.subr.mxu0 0.0
    %2884 = vmatpush1.msra.mxu0 0.0
    %2885 = vmatprep.subr.mxu0 0.0
    %2886 = vmatpush1.msra.mxu0 0.0
    %2887 = vmatprep.mubr.f32.mxu0 0.0
    %2888 = vmatmul.mubr.f32.gmra.mrb[0].mxu0 %v2821
    %v2889 = vpop.f32.mrb[0].mxu0
    %v2890 = vadd.f32 %v2818, %v2889
    %v2891 = vpop.f32.mrb[0].mxu0
    %2892 = vdwg.mxu0
    %v2893 = vmax.f32 %v2890, 0.0
    %v2894 = vld [vmem:[%s2] sm:$0xff]
    %v2895 = vld [vmem:[%s2 + $0x8] sm:$0xff]
    %v2896 = vld [vmem:[%s2 + $0x10] sm:$0xff]
    %v2897 = vld [vmem:[%s2 + $0x18] sm:$0xff]
    %v2898 = vld [vmem:[%s2 + $0x20] sm:$0xff]
    %v2899 = vld [vmem:[%s2 + $0x28] sm:$0xff]
    %v2900 = vld [vmem:[%s2 + $0x30] sm:$0xff]
    %v2901 = vld [vmem:[%s2 + $0x38] sm:$0xff]
    %v2902 = vld [vmem:[%s2 + $0x40] sm:$0x1]
    %v2903 = vlaneseq
    %v2904 = vshrl.u32 %v2903, 7
    %v2905 = vsub.s32 0, %v2904
    %v2906 = vrot.slane %v2902, %v2905
    %2915 = vrot.lane.b32.xlu0 %v2894, 96
    %v2916 = vpop.permute.xlu0 %2915
    %2917 = vrot.lane.b32.xlu0 %v2895, 96
    %v2918 = vpop.permute.xlu0 %2917
    %2919 = vrot.lane.b32.xlu0 %v2896, 96
    %v2920 = vpop.permute.xlu0 %2919
    %2921 = vrot.lane.b32.xlu0 %v2897, 96
    %v2922 = vpop.permute.xlu0 %2921
    %2923 = vrot.lane.b32.xlu0 %v2898, 96
    %v2924 = vpop.permute.xlu0 %2923
    %2925 = vrot.lane.b32.xlu0 %v2899, 96
    %v2926 = vpop.permute.xlu0 %2925
    %2927 = vrot.lane.b32.xlu0 %v2900, 96
    %v2928 = vpop.permute.xlu0 %2927
    %2929 = vrot.lane.b32.xlu0 %v2901, 96
    %v2930 = vpop.permute.xlu0 %2929
    %2940 = vrot.lane.b32.xlu0 %v2906, 96
    %v2941 = vpop.permute.xlu0 %2940
    %v2944 = vsel %vm888, %v2893, 0
    %2946 = vmatprep.subr.mxu0 0.0
    %2947 = vmatpush1.msra.mxu0 %v2916
    %2948 = vmatprep.subr.mxu0 0.0
    %2949 = vmatpush1.msra.mxu0 %v2918
    %2950 = vmatprep.subr.mxu0 0.0
    %2951 = vmatpush1.msra.mxu0 %v2920
    %2952 = vmatprep.subr.mxu0 0.0
    %2953 = vmatpush1.msra.mxu0 %v2922
    %2954 = vmatprep.subr.mxu0 0.0
    %2955 = vmatpush1.msra.mxu0 %v2924
    %2956 = vmatprep.subr.mxu0 0.0
    %2957 = vmatpush1.msra.mxu0 %v2926
    %2958 = vmatprep.subr.mxu0 0.0
    %2959 = vmatpush1.msra.mxu0 %v2928
    %2960 = vmatprep.subr.mxu0 0.0
    %2961 = vmatpush1.msra.mxu0 %v2930
    %2962 = vmatprep.subr.mxu0 0.0
    %2963 = vmatpush1.msra.mxu0 0.0
    %2964 = vmatprep.subr.mxu0 0.0
    %2965 = vmatpush1.msra.mxu0 0.0
    %2966 = vmatprep.subr.mxu0 0.0
    %2967 = vmatpush1.msra.mxu0 0.0
    %2968 = vmatprep.subr.mxu0 0.0
    %2969 = vmatpush1.msra.mxu0 0.0
    %2970 = vmatprep.subr.mxu0 0.0
    %2971 = vmatpush1.msra.mxu0 0.0
    %2972 = vmatprep.subr.mxu0 0.0
    %2973 = vmatpush1.msra.mxu0 0.0
    %2974 = vmatprep.subr.mxu0 0.0
    %2975 = vmatpush1.msra.mxu0 0.0
    %2976 = vmatprep.subr.mxu0 0.0
    %2977 = vmatpush1.msra.mxu0 0.0
    %2978 = vmatprep.subr.mxu0 0.0
    %2979 = vmatpush1.msra.mxu0 0.0
    %2980 = vmatprep.subr.mxu0 0.0
    %2981 = vmatpush1.msra.mxu0 0.0
    %2982 = vmatprep.subr.mxu0 0.0
    %2983 = vmatpush1.msra.mxu0 0.0
    %2984 = vmatprep.subr.mxu0 0.0
    %2985 = vmatpush1.msra.mxu0 0.0
    %2986 = vmatprep.subr.mxu0 0.0
    %2987 = vmatpush1.msra.mxu0 0.0
    %2988 = vmatprep.subr.mxu0 0.0
    %2989 = vmatpush1.msra.mxu0 0.0
    %2990 = vmatprep.subr.mxu0 0.0
    %2991 = vmatpush1.msra.mxu0 0.0
    %2992 = vmatprep.subr.mxu0 0.0
    %2993 = vmatpush1.msra.mxu0 0.0
    %2994 = vmatprep.subr.mxu0 0.0
    %2995 = vmatpush1.msra.mxu0 0.0
    %2996 = vmatprep.subr.mxu0 0.0
    %2997 = vmatpush1.msra.mxu0 0.0
    %2998 = vmatprep.subr.mxu0 0.0
    %2999 = vmatpush1.msra.mxu0 0.0
    %3000 = vmatprep.subr.mxu0 0.0
    %3001 = vmatpush1.msra.mxu0 0.0
    %3002 = vmatprep.subr.mxu0 0.0
    %3003 = vmatpush1.msra.mxu0 0.0
    %3004 = vmatprep.subr.mxu0 0.0
    %3005 = vmatpush1.msra.mxu0 0.0
    %3006 = vmatprep.subr.mxu0 0.0
    %3007 = vmatpush1.msra.mxu0 0.0
    %3008 = vmatprep.subr.mxu0 0.0
    %3009 = vmatpush1.msra.mxu0 0.0
    %3010 = vmatprep.mubr.f32.mxu0 0.0
    %3011 = vmatmul.mubr.f32.gmra.mrb[0].mxu0 %v2944
    %v3012 = vpop.f32.mrb[0].mxu0
    %v3013 = vadd.f32 %v2941, %v3012
    %v3014 = vpop.f32.mrb[0].mxu0
    %3015 = vdwg.mxu0
    %v3016 = vadd.f32 %v3013, %v2794
    %v3017 = vsel %vm21, %v3016, 0.0
    %3018 = vadd.xlane.f32.xlu0 %v3017
    %v3019 = vpop.xlane.xlu0 %3018
    %v3020 = vmul.f32 %v3019, %v783
    %v3021 = vmul.f32 %v3016, %v3016
    %v3022 = vsel %vm21, %v3021, 0.0
    %3023 = vadd.xlane.f32.xlu0 %v3022
    %v3024 = vpop.xlane.xlu0 %3023
    %v3025 = vmul.f32 %v3024, %v783
    %v3026 = vmul.f32 %v3020, %v3020
    %v3027 = vsub.f32 %v3025, %v3026
    %v3028 = vsub.f32 %v3016, %v3020
    %v3029 = vadd.f32 %v3027, 1e-05
    %v3030 = vrsqrt.pop %v3029
    %v3031 = vmul.f32 %v3028, %v3030
    %v3032 = vld [vmem:[%s1 + $0x8] sm:$0xff]
    %v3033 = vld [vmem:[%s1 + $0x20] sm:$0xff]
    %v3034 = vld [vmem:[%s1 + $0x38] sm:$0xff]
    %v3035 = vld [vmem:[%s1 + $0x50] sm:$0xff]
    %v3036 = vld [vmem:[%s1 + $0x68] ss:$0 sm:$0xff]
    %3041 = vrot.lane.b32.xlu0 %v3032, 64
    %v3042 = vpop.permute.xlu0 %3041
    %3043 = vrot.lane.b32.xlu0 %v3033, 64
    %v3044 = vpop.permute.xlu0 %3043
    %3045 = vrot.lane.b32.xlu0 %v3034, 64
    %v3046 = vpop.permute.xlu0 %3045
    %3047 = vrot.lane.b32.xlu0 %v3035, 64
    %v3048 = vpop.permute.xlu0 %3047
    %3054 = vrot.lane.b32.xlu0 %v3036, 64
    %v3055 = vpop.permute.xlu0 %3054
    %v3058 = vsel %vm21, %v3031, 0
    %3060 = vmatprep.subr.mxu0 0.0
    %3061 = vmatpush1.msra.mxu0 %v3042
    %3062 = vmatprep.subr.mxu0 0.0
    %3063 = vmatpush1.msra.mxu0 %v3044
    %3064 = vmatprep.subr.mxu0 0.0
    %3065 = vmatpush1.msra.mxu0 %v3046
    %3066 = vmatprep.subr.mxu0 0.0
    %3067 = vmatpush1.msra.mxu0 %v3048
    %3068 = vmatprep.subr.mxu0 0.0
    %3069 = vmatpush1.msra.mxu0 0.0
    %3070 = vmatprep.subr.mxu0 0.0
    %3071 = vmatpush1.msra.mxu0 0.0
    %3072 = vmatprep.subr.mxu0 0.0
    %3073 = vmatpush1.msra.mxu0 0.0
    %3074 = vmatprep.subr.mxu0 0.0
    %3075 = vmatpush1.msra.mxu0 0.0
    %3076 = vmatprep.subr.mxu0 0.0
    %3077 = vmatpush1.msra.mxu0 0.0
    %3078 = vmatprep.subr.mxu0 0.0
    %3079 = vmatpush1.msra.mxu0 0.0
    %3080 = vmatprep.subr.mxu0 0.0
    %3081 = vmatpush1.msra.mxu0 0.0
    %3082 = vmatprep.subr.mxu0 0.0
    %3083 = vmatpush1.msra.mxu0 0.0
    %3084 = vmatprep.subr.mxu0 0.0
    %3085 = vmatpush1.msra.mxu0 0.0
    %3086 = vmatprep.subr.mxu0 0.0
    %3087 = vmatpush1.msra.mxu0 0.0
    %3088 = vmatprep.subr.mxu0 0.0
    %3089 = vmatpush1.msra.mxu0 0.0
    %3090 = vmatprep.subr.mxu0 0.0
    %3091 = vmatpush1.msra.mxu0 0.0
    %3092 = vmatprep.subr.mxu0 0.0
    %3093 = vmatpush1.msra.mxu0 0.0
    %3094 = vmatprep.subr.mxu0 0.0
    %3095 = vmatpush1.msra.mxu0 0.0
    %3096 = vmatprep.subr.mxu0 0.0
    %3097 = vmatpush1.msra.mxu0 0.0
    %3098 = vmatprep.subr.mxu0 0.0
    %3099 = vmatpush1.msra.mxu0 0.0
    %3100 = vmatprep.subr.mxu0 0.0
    %3101 = vmatpush1.msra.mxu0 0.0
    %3102 = vmatprep.subr.mxu0 0.0
    %3103 = vmatpush1.msra.mxu0 0.0
    %3104 = vmatprep.subr.mxu0 0.0
    %3105 = vmatpush1.msra.mxu0 0.0
    %3106 = vmatprep.subr.mxu0 0.0
    %3107 = vmatpush1.msra.mxu0 0.0
    %3108 = vmatprep.subr.mxu0 0.0
    %3109 = vmatpush1.msra.mxu0 0.0
    %3110 = vmatprep.subr.mxu0 0.0
    %3111 = vmatpush1.msra.mxu0 0.0
    %3112 = vmatprep.subr.mxu0 0.0
    %3113 = vmatpush1.msra.mxu0 0.0
    %3114 = vmatprep.subr.mxu0 0.0
    %3115 = vmatpush1.msra.mxu0 0.0
    %3116 = vmatprep.subr.mxu0 0.0
    %3117 = vmatpush1.msra.mxu0 0.0
    %3118 = vmatprep.subr.mxu0 0.0
    %3119 = vmatpush1.msra.mxu0 0.0
    %3120 = vmatprep.subr.mxu0 0.0
    %3121 = vmatpush1.msra.mxu0 0.0
    %3122 = vmatprep.subr.mxu0 0.0
    %3123 = vmatpush1.msra.mxu0 0.0
    %3124 = vmatprep.mubr.f32.mxu0 0.0
    %3125 = vmatmul.mubr.f32.gmra.mrb[0].mxu0 %v3058
    %v3126 = vpop.f32.mrb[0].mxu0
    %v3127 = vadd.f32 %v3055, %v3126
    %v3128 = vpop.f32.mrb[0].mxu0
    %3129 = vdwg.mxu0
    %3130 = vmatprep.subr.mxu0 0.0
    %3131 = vmatpush1.msra.mxu0 %v3127
    %3132 = vmatprep.subr.mxu0 0.0
    %3133 = vmatpush1.msra.mxu0 0.0
    %3134 = vmatprep.subr.mxu0 0.0
    %3135 = vmatpush1.msra.mxu0 0.0
    %3136 = vmatprep.subr.mxu0 0.0
    %3137 = vmatpush1.msra.mxu0 0.0
    %3138 = vmatprep.subr.mxu0 0.0
    %3139 = vmatpush1.msra.mxu0 0.0
    %3140 = vmatprep.subr.mxu0 0.0
    %3141 = vmatpush1.msra.mxu0 0.0
    %3142 = vmatprep.subr.mxu0 0.0
    %3143 = vmatpush1.msra.mxu0 0.0
    %3144 = vmatprep.subr.mxu0 0.0
    %3145 = vmatpush1.msra.mxu0 0.0
    %3146 = vmatprep.subr.mxu0 0.0
    %3147 = vmatpush1.msra.mxu0 0.0
    %3148 = vmatprep.subr.mxu0 0.0
    %3149 = vmatpush1.msra.mxu0 0.0
    %3150 = vmatprep.subr.mxu0 0.0
    %3151 = vmatpush1.msra.mxu0 0.0
    %3152 = vmatprep.subr.mxu0 0.0
    %3153 = vmatpush1.msra.mxu0 0.0
    %3154 = vmatprep.subr.mxu0 0.0
    %3155 = vmatpush1.msra.mxu0 0.0
    %3156 = vmatprep.subr.mxu0 0.0
    %3157 = vmatpush1.msra.mxu0 0.0
    %3158 = vmatprep.subr.mxu0 0.0
    %3159 = vmatpush1.msra.mxu0 0.0
    %3160 = vmatprep.subr.mxu0 0.0
    %3161 = vmatpush1.msra.mxu0 0.0
    %3162 = vmatprep.subr.mxu0 0.0
    %3163 = vmatpush1.msra.mxu0 0.0
    %3164 = vmatprep.subr.mxu0 0.0
    %3165 = vmatpush1.msra.mxu0 0.0
    %3166 = vmatprep.subr.mxu0 0.0
    %3167 = vmatpush1.msra.mxu0 0.0
    %3168 = vmatprep.subr.mxu0 0.0
    %3169 = vmatpush1.msra.mxu0 0.0
    %3170 = vmatprep.subr.mxu0 0.0
    %3171 = vmatpush1.msra.mxu0 0.0
    %3172 = vmatprep.subr.mxu0 0.0
    %3173 = vmatpush1.msra.mxu0 0.0
    %3174 = vmatprep.subr.mxu0 0.0
    %3175 = vmatpush1.msra.mxu0 0.0
    %3176 = vmatprep.subr.mxu0 0.0
    %3177 = vmatpush1.msra.mxu0 0.0
    %3178 = vmatprep.subr.mxu0 0.0
    %3179 = vmatpush1.msra.mxu0 0.0
    %3180 = vmatprep.subr.mxu0 0.0
    %3181 = vmatpush1.msra.mxu0 0.0
    %3182 = vmatprep.subr.mxu0 0.0
    %3183 = vmatpush1.msra.mxu0 0.0
    %3184 = vmatprep.subr.mxu0 0.0
    %3185 = vmatpush1.msra.mxu0 0.0
    %3186 = vmatprep.subr.mxu0 0.0
    %3187 = vmatpush1.msra.mxu0 0.0
    %3188 = vmatprep.subr.mxu0 0.0
    %3189 = vmatpush1.msra.mxu0 0.0
    %3190 = vmatprep.subr.mxu0 0.0
    %3191 = vmatpush1.msra.mxu0 0.0
    %3192 = vmatprep.subr.mxu0 0.0
    %3193 = vmatpush1.msra.mxu0 0.0
    %3194 = vmatprep.mubr.f32.mxu0 0.0
    %3195 = vmatmul.mubr.f32.gmra.mrb[0].mxu0 %v2461
    %v3196 = vpop.f32.mrb[0].mxu0
    %v3197 = vadd.f32 0.0, %v3196
    %v3198 = vpop.f32.mrb[0].mxu0
    %3199 = vdwg.mxu0
    %3200 = vst.msk [vmem:[#allocation2] sm:$0xff] %vm98, %v3197
    %3202 = vrot.lane.b32.xlu0 %v3127, 120
    %v3203 = vpop.permute.xlu0 %3202
    %3205 = vmatprep.subr.mxu0 0.0
    %3206 = vmatpush1.msra.mxu0 %v3203
    %3207 = vmatprep.subr.mxu0 0.0
    %3208 = vmatpush1.msra.mxu0 0.0
    %3209 = vmatprep.subr.mxu0 0.0
    %3210 = vmatpush1.msra.mxu0 0.0
    %3211 = vmatprep.subr.mxu0 0.0
    %3212 = vmatpush1.msra.mxu0 0.0
    %3213 = vmatprep.subr.mxu0 0.0
    %3214 = vmatpush1.msra.mxu0 0.0
    %3215 = vmatprep.subr.mxu0 0.0
    %3216 = vmatpush1.msra.mxu0 0.0
    %3217 = vmatprep.subr.mxu0 0.0
    %3218 = vmatpush1.msra.mxu0 0.0
    %3219 = vmatprep.subr.mxu0 0.0
    %3220 = vmatpush1.msra.mxu0 0.0
    %3221 = vmatprep.subr.mxu0 0.0
    %3222 = vmatpush1.msra.mxu0 0.0
    %3223 = vmatprep.subr.mxu0 0.0
    %3224 = vmatpush1.msra.mxu0 0.0
    %3225 = vmatprep.subr.mxu0 0.0
    %3226 = vmatpush1.msra.mxu0 0.0
    %3227 = vmatprep.subr.mxu0 0.0
    %3228 = vmatpush1.msra.mxu0 0.0
    %3229 = vmatprep.subr.mxu0 0.0
    %3230 = vmatpush1.msra.mxu0 0.0
    %3231 = vmatprep.subr.mxu0 0.0
    %3232 = vmatpush1.msra.mxu0 0.0
    %3233 = vmatprep.subr.mxu0 0.0
    %3234 = vmatpush1.msra.mxu0 0.0
    %3235 = vmatprep.subr.mxu0 0.0
    %3236 = vmatpush1.msra.mxu0 0.0
    %3237 = vmatprep.subr.mxu0 0.0
    %3238 = vmatpush1.msra.mxu0 0.0
    %3239 = vmatprep.subr.mxu0 0.0
    %3240 = vmatpush1.msra.mxu0 0.0
    %3241 = vmatprep.subr.mxu0 0.0
    %3242 = vmatpush1.msra.mxu0 0.0
    %3243 = vmatprep.subr.mxu0 0.0
    %3244 = vmatpush1.msra.mxu0 0.0
    %3245 = vmatprep.subr.mxu0 0.0
    %3246 = vmatpush1.msra.mxu0 0.0
    %3247 = vmatprep.subr.mxu0 0.0
    %3248 = vmatpush1.msra.mxu0 0.0
    %3249 = vmatprep.subr.mxu0 0.0
    %3250 = vmatpush1.msra.mxu0 0.0
    %3251 = vmatprep.subr.mxu0 0.0
    %3252 = vmatpush1.msra.mxu0 0.0
    %3253 = vmatprep.subr.mxu0 0.0
    %3254 = vmatpush1.msra.mxu0 0.0
    %3255 = vmatprep.subr.mxu0 0.0
    %3256 = vmatpush1.msra.mxu0 0.0
    %3257 = vmatprep.subr.mxu0 0.0
    %3258 = vmatpush1.msra.mxu0 0.0
    %3259 = vmatprep.subr.mxu0 0.0
    %3260 = vmatpush1.msra.mxu0 0.0
    %3261 = vmatprep.subr.mxu0 0.0
    %3262 = vmatpush1.msra.mxu0 0.0
    %3263 = vmatprep.subr.mxu0 0.0
    %3264 = vmatpush1.msra.mxu0 0.0
    %3265 = vmatprep.subr.mxu0 0.0
    %3266 = vmatpush1.msra.mxu0 0.0
    %3267 = vmatprep.subr.mxu0 0.0
    %3268 = vmatpush1.msra.mxu0 0.0
    %3269 = vmatprep.mubr.f32.mxu0 0.0
    %3270 = vmatmul.mubr.f32.gmra.mrb[0].mxu0 %v2539
    %v3271 = vpop.f32.mrb[0].mxu0
    %v3272 = vadd.f32 0.0, %v3271
    %v3273 = vpop.f32.mrb[0].mxu0
    %3274 = vdwg.mxu0
    %3276 = vrot.lane.b32.xlu0 %v3272, 8
    %v3277 = vpop.permute.xlu0 %3276
    %3279 = vst.msk [vmem:[#allocation2] sm:$0xff] %vm612, %v3277
    %3280 = vrot.lane.b32.xlu0 %v3127, 112
    %v3281 = vpop.permute.xlu0 %3280
    %3283 = vmatprep.subr.mxu0 0.0
    %3284 = vmatpush1.msra.mxu0 %v3281
    %3285 = vmatprep.subr.mxu0 0.0
    %3286 = vmatpush1.msra.mxu0 0.0
    %3287 = vmatprep.subr.mxu0 0.0
    %3288 = vmatpush1.msra.mxu0 0.0
    %3289 = vmatprep.subr.mxu0 0.0
    %3290 = vmatpush1.msra.mxu0 0.0
    %3291 = vmatprep.subr.mxu0 0.0
    %3292 = vmatpush1.msra.mxu0 0.0
    %3293 = vmatprep.subr.mxu0 0.0
    %3294 = vmatpush1.msra.mxu0 0.0
    %3295 = vmatprep.subr.mxu0 0.0
    %3296 = vmatpush1.msra.mxu0 0.0
    %3297 = vmatprep.subr.mxu0 0.0
    %3298 = vmatpush1.msra.mxu0 0.0
    %3299 = vmatprep.subr.mxu0 0.0
    %3300 = vmatpush1.msra.mxu0 0.0
    %3301 = vmatprep.subr.mxu0 0.0
    %3302 = vmatpush1.msra.mxu0 0.0
    %3303 = vmatprep.subr.mxu0 0.0
    %3304 = vmatpush1.msra.mxu0 0.0
    %3305 = vmatprep.subr.mxu0 0.0
    %3306 = vmatpush1.msra.mxu0 0.0
    %3307 = vmatprep.subr.mxu0 0.0
    %3308 = vmatpush1.msra.mxu0 0.0
    %3309 = vmatprep.subr.mxu0 0.0
    %3310 = vmatpush1.msra.mxu0 0.0
    %3311 = vmatprep.subr.mxu0 0.0
    %3312 = vmatpush1.msra.mxu0 0.0
    %3313 = vmatprep.subr.mxu0 0.0
    %3314 = vmatpush1.msra.mxu0 0.0
    %3315 = vmatprep.subr.mxu0 0.0
    %3316 = vmatpush1.msra.mxu0 0.0
    %3317 = vmatprep.subr.mxu0 0.0
    %3318 = vmatpush1.msra.mxu0 0.0
    %3319 = vmatprep.subr.mxu0 0.0
    %3320 = vmatpush1.msra.mxu0 0.0
    %3321 = vmatprep.subr.mxu0 0.0
    %3322 = vmatpush1.msra.mxu0 0.0
    %3323 = vmatprep.subr.mxu0 0.0
    %3324 = vmatpush1.msra.mxu0 0.0
    %3325 = vmatprep.subr.mxu0 0.0
    %3326 = vmatpush1.msra.mxu0 0.0
    %3327 = vmatprep.subr.mxu0 0.0
    %3328 = vmatpush1.msra.mxu0 0.0
    %3329 = vmatprep.subr.mxu0 0.0
    %3330 = vmatpush1.msra.mxu0 0.0
    %3331 = vmatprep.subr.mxu0 0.0
    %3332 = vmatpush1.msra.mxu0 0.0
    %3333 = vmatprep.subr.mxu0 0.0
    %3334 = vmatpush1.msra.mxu0 0.0
    %3335 = vmatprep.subr.mxu0 0.0
    %3336 = vmatpush1.msra.mxu0 0.0
    %3337 = vmatprep.subr.mxu0 0.0
    %3338 = vmatpush1.msra.mxu0 0.0
    %3339 = vmatprep.subr.mxu0 0.0
    %3340 = vmatpush1.msra.mxu0 0.0
    %3341 = vmatprep.subr.mxu0 0.0
    %3342 = vmatpush1.msra.mxu0 0.0
    %3343 = vmatprep.subr.mxu0 0.0
    %3344 = vmatpush1.msra.mxu0 0.0
    %3345 = vmatprep.subr.mxu0 0.0
    %3346 = vmatpush1.msra.mxu0 0.0
    %3347 = vmatprep.mubr.f32.mxu0 0.0
    %3348 = vmatmul.mubr.f32.gmra.mrb[0].mxu0 %v2620
    %v3349 = vpop.f32.mrb[0].mxu0
    %v3350 = vadd.f32 0.0, %v3349
    %v3351 = vpop.f32.mrb[0].mxu0
    %3352 = vdwg.mxu0
    %3354 = vrot.lane.b32.xlu0 %v3350, 16
    %v3355 = vpop.permute.xlu0 %3354
    %3357 = vst.msk [vmem:[#allocation2] sm:$0xff] %vm694, %v3355
    %3358 = vrot.lane.b32.xlu0 %v3127, 104
    %v3359 = vpop.permute.xlu0 %3358
    %3361 = vmatprep.subr.mxu0 0.0
    %3362 = vmatpush1.msra.mxu0 %v3359
    %3363 = vmatprep.subr.mxu0 0.0
    %3364 = vmatpush1.msra.mxu0 0.0
    %3365 = vmatprep.subr.mxu0 0.0
    %3366 = vmatpush1.msra.mxu0 0.0
    %3367 = vmatprep.subr.mxu0 0.0
    %3368 = vmatpush1.msra.mxu0 0.0
    %3369 = vmatprep.subr.mxu0 0.0
    %3370 = vmatpush1.msra.mxu0 0.0
    %3371 = vmatprep.subr.mxu0 0.0
    %3372 = vmatpush1.msra.mxu0 0.0
    %3373 = vmatprep.subr.mxu0 0.0
    %3374 = vmatpush1.msra.mxu0 0.0
    %3375 = vmatprep.subr.mxu0 0.0
    %3376 = vmatpush1.msra.mxu0 0.0
    %3377 = vmatprep.subr.mxu0 0.0
    %3378 = vmatpush1.msra.mxu0 0.0
    %3379 = vmatprep.subr.mxu0 0.0
    %3380 = vmatpush1.msra.mxu0 0.0
    %3381 = vmatprep.subr.mxu0 0.0
    %3382 = vmatpush1.msra.mxu0 0.0
    %3383 = vmatprep.subr.mxu0 0.0
    %3384 = vmatpush1.msra.mxu0 0.0
    %3385 = vmatprep.subr.mxu0 0.0
    %3386 = vmatpush1.msra.mxu0 0.0
    %3387 = vmatprep.subr.mxu0 0.0
    %3388 = vmatpush1.msra.mxu0 0.0
    %3389 = vmatprep.subr.mxu0 0.0
    %3390 = vmatpush1.msra.mxu0 0.0
    %3391 = vmatprep.subr.mxu0 0.0
    %3392 = vmatpush1.msra.mxu0 0.0
    %3393 = vmatprep.subr.mxu0 0.0
    %3394 = vmatpush1.msra.mxu0 0.0
    %3395 = vmatprep.subr.mxu0 0.0
    %3396 = vmatpush1.msra.mxu0 0.0
    %3397 = vmatprep.subr.mxu0 0.0
    %3398 = vmatpush1.msra.mxu0 0.0
    %3399 = vmatprep.subr.mxu0 0.0
    %3400 = vmatpush1.msra.mxu0 0.0
    %3401 = vmatprep.subr.mxu0 0.0
    %3402 = vmatpush1.msra.mxu0 0.0
    %3403 = vmatprep.subr.mxu0 0.0
    %3404 = vmatpush1.msra.mxu0 0.0
    %3405 = vmatprep.subr.mxu0 0.0
    %3406 = vmatpush1.msra.mxu0 0.0
    %3407 = vmatprep.subr.mxu0 0.0
    %3408 = vmatpush1.msra.mxu0 0.0
    %3409 = vmatprep.subr.mxu0 0.0
    %3410 = vmatpush1.msra.mxu0 0.0
    %3411 = vmatprep.subr.mxu0 0.0
    %3412 = vmatpush1.msra.mxu0 0.0
    %3413 = vmatprep.subr.mxu0 0.0
    %3414 = vmatpush1.msra.mxu0 0.0
    %3415 = vmatprep.subr.mxu0 0.0
    %3416 = vmatpush1.msra.mxu0 0.0
    %3417 = vmatprep.subr.mxu0 0.0
    %3418 = vmatpush1.msra.mxu0 0.0
    %3419 = vmatprep.subr.mxu0 0.0
    %3420 = vmatpush1.msra.mxu0 0.0
    %3421 = vmatprep.subr.mxu0 0.0
    %3422 = vmatpush1.msra.mxu0 0.0
    %3423 = vmatprep.subr.mxu0 0.0
    %3424 = vmatpush1.msra.mxu0 0.0
    %3425 = vmatprep.mubr.f32.mxu0 0.0
    %3426 = vmatmul.mubr.f32.gmra.mrb[0].mxu0 %v2701
    %v3427 = vpop.f32.mrb[0].mxu0
    %v3428 = vadd.f32 0.0, %v3427
    %v3429 = vpop.f32.mrb[0].mxu0
    %3430 = vdwg.mxu0
    %3432 = vrot.lane.b32.xlu0 %v3428, 24
    %v3433 = vpop.permute.xlu0 %3432
    %3435 = vst.msk [vmem:[#allocation2] sm:$0xff] %vm776, %v3433
    %v3436 = vld [vmem:[#allocation2] sm:$0xff]
    %v3437 = vadd.f32 %v3436, %v3031
    %v3438 = vsel %vm21, %v3437, 0.0
    %3439 = vadd.xlane.f32.xlu0 %v3438
    %v3440 = vpop.xlane.xlu0 %3439
    %v3441 = vmul.f32 %v3440, %v783
    %v3442 = vmul.f32 %v3437, %v3437
    %v3443 = vsel %vm21, %v3442, 0.0
    %3444 = vadd.xlane.f32.xlu0 %v3443
    %v3445 = vpop.xlane.xlu0 %3444
    %v3446 = vmul.f32 %v3445, %v783
    %v3447 = vmul.f32 %v3441, %v3441
    %v3448 = vsub.f32 %v3446, %v3447
    %v3449 = vsub.f32 %v3437, %v3441
    %v3450 = vadd.f32 %v3448, 1e-05
    %v3451 = vrsqrt.pop %v3450
    %v3452 = vmul.f32 %v3449, %v3451
    %v3453 = vld [vmem:[%s1 + $0x10] sm:$0xff]
    %v3454 = vld [vmem:[%s1 + $0x28] sm:$0xff]
    %v3455 = vld [vmem:[%s1 + $0x40] sm:$0xff]
    %v3456 = vld [vmem:[%s1 + $0x58] sm:$0xff]
    %v3457 = vld [vmem:[%s1 + $0x70] ss:$0 sm:$0xff]
    %3462 = vrot.lane.b32.xlu0 %v3453, 64
    %v3463 = vpop.permute.xlu0 %3462
    %3464 = vrot.lane.b32.xlu0 %v3454, 64
    %v3465 = vpop.permute.xlu0 %3464
    %3466 = vrot.lane.b32.xlu0 %v3455, 64
    %v3467 = vpop.permute.xlu0 %3466
    %3468 = vrot.lane.b32.xlu0 %v3456, 64
    %v3469 = vpop.permute.xlu0 %3468
    %3475 = vrot.lane.b32.xlu0 %v3457, 64
    %v3476 = vpop.permute.xlu0 %3475
    %v3479 = vsel %vm21, %v3452, 0
    %3481 = vmatprep.subr.mxu0 0.0
    %3482 = vmatpush1.msra.mxu0 %v3463
    %3483 = vmatprep.subr.mxu0 0.0
    %3484 = vmatpush1.msra.mxu0 %v3465
    %3485 = vmatprep.subr.mxu0 0.0
    %3486 = vmatpush1.msra.mxu0 %v3467
    %3487 = vmatprep.subr.mxu0 0.0
    %3488 = vmatpush1.msra.mxu0 %v3469
    %3489 = vmatprep.subr.mxu0 0.0
    %3490 = vmatpush1.msra.mxu0 0.0
    %3491 = vmatprep.subr.mxu0 0.0
    %3492 = vmatpush1.msra.mxu0 0.0
    %3493 = vmatprep.subr.mxu0 0.0
    %3494 = vmatpush1.msra.mxu0 0.0
    %3495 = vmatprep.subr.mxu0 0.0
    %3496 = vmatpush1.msra.mxu0 0.0
    %3497 = vmatprep.subr.mxu0 0.0
    %3498 = vmatpush1.msra.mxu0 0.0
    %3499 = vmatprep.subr.mxu0 0.0
    %3500 = vmatpush1.msra.mxu0 0.0
    %3501 = vmatprep.subr.mxu0 0.0
    %3502 = vmatpush1.msra.mxu0 0.0
    %3503 = vmatprep.subr.mxu0 0.0
    %3504 = vmatpush1.msra.mxu0 0.0
    %3505 = vmatprep.subr.mxu0 0.0
    %3506 = vmatpush1.msra.mxu0 0.0
    %3507 = vmatprep.subr.mxu0 0.0
    %3508 = vmatpush1.msra.mxu0 0.0
    %3509 = vmatprep.subr.mxu0 0.0
    %3510 = vmatpush1.msra.mxu0 0.0
    %3511 = vmatprep.subr.mxu0 0.0
    %3512 = vmatpush1.msra.mxu0 0.0
    %3513 = vmatprep.subr.mxu0 0.0
    %3514 = vmatpush1.msra.mxu0 0.0
    %3515 = vmatprep.subr.mxu0 0.0
    %3516 = vmatpush1.msra.mxu0 0.0
    %3517 = vmatprep.subr.mxu0 0.0
    %3518 = vmatpush1.msra.mxu0 0.0
    %3519 = vmatprep.subr.mxu0 0.0
    %3520 = vmatpush1.msra.mxu0 0.0
    %3521 = vmatprep.subr.mxu0 0.0
    %3522 = vmatpush1.msra.mxu0 0.0
    %3523 = vmatprep.subr.mxu0 0.0
    %3524 = vmatpush1.msra.mxu0 0.0
    %3525 = vmatprep.subr.mxu0 0.0
    %3526 = vmatpush1.msra.mxu0 0.0
    %3527 = vmatprep.subr.mxu0 0.0
    %3528 = vmatpush1.msra.mxu0 0.0
    %3529 = vmatprep.subr.mxu0 0.0
    %3530 = vmatpush1.msra.mxu0 0.0
    %3531 = vmatprep.subr.mxu0 0.0
    %3532 = vmatpush1.msra.mxu0 0.0
    %3533 = vmatprep.subr.mxu0 0.0
    %3534 = vmatpush1.msra.mxu0 0.0
    %3535 = vmatprep.subr.mxu0 0.0
    %3536 = vmatpush1.msra.mxu0 0.0
    %3537 = vmatprep.subr.mxu0 0.0
    %3538 = vmatpush1.msra.mxu0 0.0
    %3539 = vmatprep.subr.mxu0 0.0
    %3540 = vmatpush1.msra.mxu0 0.0
    %3541 = vmatprep.subr.mxu0 0.0
    %3542 = vmatpush1.msra.mxu0 0.0
    %3543 = vmatprep.subr.mxu0 0.0
    %3544 = vmatpush1.msra.mxu0 0.0
    %3545 = vmatprep.mubr.f32.mxu0 0.0
    %3546 = vmatmul.mubr.f32.gmra.mrb[0].mxu0 %v3479
    %v3547 = vpop.f32.mrb[0].mxu0
    %v3548 = vadd.f32 %v3476, %v3547
    %v3549 = vpop.f32.mrb[0].mxu0
    %3550 = vdwg.mxu0
    %v3551 = vmax.f32 %v3548, 0.0
    %v3552 = vld [vmem:[%s2] sm:$0xff]
    %v3553 = vld [vmem:[%s2 + $0x8] sm:$0xff]
    %v3554 = vld [vmem:[%s2 + $0x10] sm:$0xff]
    %v3555 = vld [vmem:[%s2 + $0x18] sm:$0xff]
    %v3556 = vld [vmem:[%s2 + $0x20] sm:$0xff]
    %v3557 = vld [vmem:[%s2 + $0x28] sm:$0xff]
    %v3558 = vld [vmem:[%s2 + $0x30] sm:$0xff]
    %v3559 = vld [vmem:[%s2 + $0x38] sm:$0xff]
    %v3560 = vld [vmem:[%s2 + $0x40] sm:$0x1]
    %v3561 = vlaneseq
    %v3562 = vshrl.u32 %v3561, 7
    %v3563 = vsub.s32 0, %v3562
    %v3564 = vrot.slane %v3560, %v3563
    %3573 = vrot.lane.b32.xlu0 %v3552, 96
    %v3574 = vpop.permute.xlu0 %3573
    %3575 = vrot.lane.b32.xlu0 %v3553, 96
    %v3576 = vpop.permute.xlu0 %3575
    %3577 = vrot.lane.b32.xlu0 %v3554, 96
    %v3578 = vpop.permute.xlu0 %3577
    %3579 = vrot.lane.b32.xlu0 %v3555, 96
    %v3580 = vpop.permute.xlu0 %3579
    %3581 = vrot.lane.b32.xlu0 %v3556, 96
    %v3582 = vpop.permute.xlu0 %3581
    %3583 = vrot.lane.b32.xlu0 %v3557, 96
    %v3584 = vpop.permute.xlu0 %3583
    %3585 = vrot.lane.b32.xlu0 %v3558, 96
    %v3586 = vpop.permute.xlu0 %3585
    %3587 = vrot.lane.b32.xlu0 %v3559, 96
    %v3588 = vpop.permute.xlu0 %3587
    %3598 = vrot.lane.b32.xlu0 %v3564, 96
    %v3599 = vpop.permute.xlu0 %3598
    %v3602 = vsel %vm888, %v3551, 0
    %3604 = vmatprep.subr.mxu0 0.0
    %3605 = vmatpush1.msra.mxu0 %v3574
    %3606 = vmatprep.subr.mxu0 0.0
    %3607 = vmatpush1.msra.mxu0 %v3576
    %3608 = vmatprep.subr.mxu0 0.0
    %3609 = vmatpush1.msra.mxu0 %v3578
    %3610 = vmatprep.subr.mxu0 0.0
    %3611 = vmatpush1.msra.mxu0 %v3580
    %3612 = vmatprep.subr.mxu0 0.0
    %3613 = vmatpush1.msra.mxu0 %v3582
    %3614 = vmatprep.subr.mxu0 0.0
    %3615 = vmatpush1.msra.mxu0 %v3584
    %3616 = vmatprep.subr.mxu0 0.0
    %3617 = vmatpush1.msra.mxu0 %v3586
    %3618 = vmatprep.subr.mxu0 0.0
    %3619 = vmatpush1.msra.mxu0 %v3588
    %3620 = vmatprep.subr.mxu0 0.0
    %3621 = vmatpush1.msra.mxu0 0.0
    %3622 = vmatprep.subr.mxu0 0.0
    %3623 = vmatpush1.msra.mxu0 0.0
    %3624 = vmatprep.subr.mxu0 0.0
    %3625 = vmatpush1.msra.mxu0 0.0
    %3626 = vmatprep.subr.mxu0 0.0
    %3627 = vmatpush1.msra.mxu0 0.0
    %3628 = vmatprep.subr.mxu0 0.0
    %3629 = vmatpush1.msra.mxu0 0.0
    %3630 = vmatprep.subr.mxu0 0.0
    %3631 = vmatpush1.msra.mxu0 0.0
    %3632 = vmatprep.subr.mxu0 0.0
    %3633 = vmatpush1.msra.mxu0 0.0
    %3634 = vmatprep.subr.mxu0 0.0
    %3635 = vmatpush1.msra.mxu0 0.0
    %3636 = vmatprep.subr.mxu0 0.0
    %3637 = vmatpush1.msra.mxu0 0.0
    %3638 = vmatprep.subr.mxu0 0.0
    %3639 = vmatpush1.msra.mxu0 0.0
    %3640 = vmatprep.subr.mxu0 0.0
    %3641 = vmatpush1.msra.mxu0 0.0
    %3642 = vmatprep.subr.mxu0 0.0
    %3643 = vmatpush1.msra.mxu0 0.0
    %3644 = vmatprep.subr.mxu0 0.0
    %3645 = vmatpush1.msra.mxu0 0.0
    %3646 = vmatprep.subr.mxu0 0.0
    %3647 = vmatpush1.msra.mxu0 0.0
    %3648 = vmatprep.subr.mxu0 0.0
    %3649 = vmatpush1.msra.mxu0 0.0
    %3650 = vmatprep.subr.mxu0 0.0
    %3651 = vmatpush1.msra.mxu0 0.0
    %3652 = vmatprep.subr.mxu0 0.0
    %3653 = vmatpush1.msra.mxu0 0.0
    %3654 = vmatprep.subr.mxu0 0.0
    %3655 = vmatpush1.msra.mxu0 0.0
    %3656 = vmatprep.subr.mxu0 0.0
    %3657 = vmatpush1.msra.mxu0 0.0
    %3658 = vmatprep.subr.mxu0 0.0
    %3659 = vmatpush1.msra.mxu0 0.0
    %3660 = vmatprep.subr.mxu0 0.0
    %3661 = vmatpush1.msra.mxu0 0.0
    %3662 = vmatprep.subr.mxu0 0.0
    %3663 = vmatpush1.msra.mxu0 0.0
    %3664 = vmatprep.subr.mxu0 0.0
    %3665 = vmatpush1.msra.mxu0 0.0
    %3666 = vmatprep.subr.mxu0 0.0
    %3667 = vmatpush1.msra.mxu0 0.0
    %3668 = vmatprep.mubr.f32.mxu0 0.0
    %3669 = vmatmul.mubr.f32.gmra.mrb[0].mxu0 %v3602
    %v3670 = vpop.f32.mrb[0].mxu0
    %v3671 = vadd.f32 %v3599, %v3670
    %v3672 = vpop.f32.mrb[0].mxu0
    %3673 = vdwg.mxu0
    %v3674 = vadd.f32 %v3671, %v3452
    %v3675 = vsel %vm21, %v3674, 0.0
    %3676 = vadd.xlane.f32.xlu0 %v3675
    %v3677 = vpop.xlane.xlu0 %3676
    %v3678 = vmul.f32 %v3677, %v783
    %v3679 = vmul.f32 %v3674, %v3674
    %v3680 = vsel %vm21, %v3679, 0.0
    %3681 = vadd.xlane.f32.xlu0 %v3680
    %v3682 = vpop.xlane.xlu0 %3681
    %v3683 = vmul.f32 %v3682, %v783
    %v3684 = vmul.f32 %v3678, %v3678
    %v3685 = vsub.f32 %v3683, %v3684
    %v3686 = vsub.f32 %v3674, %v3678
    %v3687 = vadd.f32 %v3685, 1e-05
    %v3688 = vrsqrt.pop %v3687
    %v3689 = vmul.f32 %v3686, %v3688
    %3690 = vst.msk [vmem:[#allocation3] sm:$0xff] %vm21, %v3689
    // Predicated region
    $region14: #{transformer_forward.1} parent=1 // pred_check
      _
    $region15: #{transformer_forward.1} parent=1 // pred_check_branch
      %3692 = sbr.rel (0) target = $region17
    $region16: #{transformer_forward.1} parent=1 // pred_region
      %s3694 = ssub.s32 128, 128
      %3695 = vsyncadd [#allocation4], %s3694
      %s3697 = sshll.u32 [#allocation3], 4
      %s3698 = int_to_ptr.vmem [resolvable:$true] %s3697
      %3700 = dma.vmem_to_hbm [thread:$0]  %s3698, 128, %s3, [#allocation4]
    $region17: #{transformer_forward.1} parent=1 // pred_fallthru
      _
    // Predicated region
    $region18: #{transformer_forward.1} parent=1 // pred_check
      _
    $region19: #{transformer_forward.1} parent=1 // pred_check_branch
      %3702 = sbr.rel (0) target = $region21
    $region20: #{transformer_forward.1} parent=1 // pred_region
      %3703 = dma.done [#allocation4], 128
    $region21: #{transformer_forward.1} parent=1 // pred_fallthru
      _
    %3704 = vsyncpa [#allocation4], 1

</llo_original>
